<compile_context>
chip_gen: v7x
topology: tpu7x:2x2x1
jax: 0.10.0
libtpu: 0.0.40
codegen_flags: <defaults>
</compile_context>

<pallas_src>
import functools
import math

import jax
import jax.numpy as jnp
from jax.experimental import pallas as pl
from jax.experimental.pallas import tpu as pltpu


def _round_up(x, m):
    return (x + m - 1) // m * m


def _fold_bn(gamma, beta, mean, var, eps=1e-5):
    scale = gamma * jax.lax.rsqrt(var + eps)
    bias = beta - mean * scale
    return scale, bias


# ----------------------- fused SEBottleneck kernel -----------------------
def _se_bottleneck_kernel(xp_ref, mask_in_ref, mask_out_ref,
                          w1_ref, b1_ref, w2_ref, b2_ref, w3_ref, b3_ref,
                          sew1_ref, sew2_ref, out_ref,
                          o1_scr, patch_scr, *, Wp, P_out, inv_count):
    Cmid = w1_ref.shape[1]
    xp = xp_ref[0]                                               # (P_pad, C4)

    # conv1 (1x1) + bn1 + relu; mask keeps the spatial zero-padding exactly zero
    o1 = jnp.dot(xp, w1_ref[...], preferred_element_type=jnp.float32)
    o1_scr[...] = jnp.maximum(o1 + b1_ref[...], 0.0) * mask_in_ref[...]

    # im2col: 9 sublane-shifted windows of o1 -> (P_out, 9*Cmid) patch in VMEM
    # (dy*Wp is a multiple of 8, so 3 of the 9 windows are sublane-aligned).
    for t, (dy, dx) in enumerate((dy, dx) for dy in range(3) for dx in range(3)):
        patch_scr[:, pl.ds(t * Cmid, Cmid)] = o1_scr[pl.ds(dy * Wp + dx, P_out), :]

    # conv2 (3x3) + bn2 + relu as a single K = 9*Cmid MXU matmul
    o2 = jnp.dot(patch_scr[...], w2_ref[...], preferred_element_type=jnp.float32)
    o2 = jnp.maximum(o2 + b2_ref[...], 0.0)                      # (P_out, Cmid)

    # conv3 (1x1) + bn3
    o3 = jnp.dot(o2, w3_ref[...], preferred_element_type=jnp.float32) + b3_ref[...]

    # SE gate: masked global-average pool (row-padding junk columns excluded),
    # pushed through the linear conv3/bn3 fold, then FC1 / ReLU / FC2 / sigmoid.
    pooled_mid = jnp.sum(o2 * mask_out_ref[...], axis=0, keepdims=True) * inv_count
    pooled = jnp.dot(pooled_mid, w3_ref[...],
                     preferred_element_type=jnp.float32) + b3_ref[...]   # (1, C4)
    h = jnp.maximum(jnp.dot(pooled, sew1_ref[...],
                            preferred_element_type=jnp.float32), 0.0)
    z = jnp.dot(h, sew2_ref[...], preferred_element_type=jnp.float32)
    gate = 1.0 / (1.0 + jnp.exp(-z))                             # (1, C4)

    # SE scale + residual (original x re-sliced from the resident block) + relu
    res = xp_ref[0, pl.ds(Wp + 1, P_out), :]
    out_ref[0] = jnp.maximum(o3 * gate + res, 0.0).astype(out_ref.dtype)


def se_bottleneck(x_nchw, params):
    """SEBottleneck forward (stride=1, downsample=None, ibn=False); NCHW in/out."""
    B, Cin, H, W = x_nchw.shape
    Cmid = params["w1"].shape[1]          # planes
    C4 = params["w3"].shape[1]            # planes * 4
    Ch = params["se_w1"].shape[1]         # planes * 4 / reduction
    assert Cin == C4, "downsample=None requires inplanes == planes*4"

    Wp = _round_up(W + 2, 8)              # sublane-aligned row stride
    P_pad = (H + 3) * Wp                  # 1 top pad row + H rows + 2 bottom pad rows
    P_out = H * Wp                        # row-padded output layout

    # Fold inference-mode BN into the conv weights; kernels only add a bias.
    s1, b1 = _fold_bn(*params["bn1"])
    s2, b2 = _fold_bn(*params["bn2"])
    s3, b3 = _fold_bn(*params["bn3"])
    w1f = params["w1"] * s1[None, :]                         # (C4, Cmid)
    w2f = params["w2"].reshape(9 * Cmid, Cmid) * s2[None, :]  # (9*Cmid, Cmid)
    w3f = params["w3"] * s3[None, :]                          # (Cmid, C4)
    b1 = b1.reshape(1, Cmid)
    b2 = b2.reshape(1, Cmid)
    b3 = b3.reshape(1, C4)

    # channels-last, one spatial pad, flatten rows with stride Wp
    xh = jnp.transpose(x_nchw, (0, 2, 3, 1))                  # NHWC
    xp = jnp.pad(xh, ((0, 0), (1, 2), (1, Wp - W - 1), (0, 0)))
    xflat = xp.reshape(B, P_pad, Cin)

    # validity masks for the row-padded layouts (tiny, computed once)
    r = jnp.arange(H + 3)
    c = jnp.arange(Wp)
    mask_in = (((r >= 1) & (r <= H))[:, None] & ((c >= 1) & (c <= W))[None, :])
    mask_in = mask_in.reshape(P_pad, 1).astype(jnp.float32)
    mask_out = jnp.broadcast_to((c < W)[None, :], (H, Wp))
    mask_out = mask_out.reshape(P_out, 1).astype(jnp.float32)

    kernel = functools.partial(_se_bottleneck_kernel,
                               Wp=Wp, P_out=P_out, inv_count=1.0 / (H * W))

    flops = 2 * B * (P_pad * C4 * Cmid + P_out * 9 * Cmid * Cmid
                     + P_out * Cmid * C4 + 2 * C4 * Ch)
    bytes_accessed = 4 * (B * (P_pad * C4 + P_out * C4)
                          + C4 * Cmid + 9 * Cmid * Cmid + Cmid * C4 + 2 * C4 * Ch)

    out_padded = pl.pallas_call(
        kernel,
        out_shape=jax.ShapeDtypeStruct((B, P_out, C4), jnp.float32),
        grid=(B,),
        in_specs=[
            pl.BlockSpec((1, P_pad, C4), lambda b: (b, 0, 0)),   # padded x
            pl.BlockSpec((P_pad, 1), lambda b: (0, 0)),          # input mask
            pl.BlockSpec((P_out, 1), lambda b: (0, 0)),          # pooling mask
            pl.BlockSpec((C4, Cmid), lambda b: (0, 0)),          # w1 (BN folded)
            pl.BlockSpec((1, Cmid), lambda b: (0, 0)),           # b1
            pl.BlockSpec((9 * Cmid, Cmid), lambda b: (0, 0)),    # w2 (BN folded)
            pl.BlockSpec((1, Cmid), lambda b: (0, 0)),           # b2
            pl.BlockSpec((Cmid, C4), lambda b: (0, 0)),          # w3 (BN folded)
            pl.BlockSpec((1, C4), lambda b: (0, 0)),             # b3
            pl.BlockSpec((C4, Ch), lambda b: (0, 0)),            # SE fc1
            pl.BlockSpec((Ch, C4), lambda b: (0, 0)),            # SE fc2
        ],
        out_specs=pl.BlockSpec((1, P_out, C4), lambda b: (b, 0, 0)),
        scratch_shapes=[
            pltpu.VMEM((P_pad, Cmid), jnp.float32),              # o1 (padded layout)
            pltpu.VMEM((P_out, 9 * Cmid), jnp.float32),          # im2col patch
        ],
        compiler_params=pltpu.CompilerParams(
            dimension_semantics=("parallel",),
            # Safe on every generation (v7x physical VMEM is 64 MiB); actual use
            # at these shapes is far below it.
            vmem_limit_bytes=48 * 1024 * 1024,
        ),
        cost_estimate=pl.CostEstimate(
            flops=flops, transcendentals=B * C4, bytes_accessed=bytes_accessed),
    )(xflat, mask_in, mask_out, w1f, b1, w2f, b2, w3f, b3,
      params["se_w1"], params["se_w2"])

    out = out_padded.reshape(B, H, Wp, C4)[:, :, :W, :]          # drop junk columns
    return jnp.transpose(out, (0, 3, 1, 2))                      # back to NCHW


# ----------------------------- pure-JAX reference -----------------------------
def se_bottleneck_ref(x_nchw, params):
    hp = jax.lax.Precision.HIGHEST
    xh = jnp.transpose(x_nchw, (0, 2, 3, 1)).astype(jnp.float32)

    def bn(y, bnp):
        s, b = _fold_bn(*bnp)
        return y * s.reshape(1, 1, 1, -1) + b.reshape(1, 1, 1, -1)

    o = jnp.einsum("bhwc,cd->bhwd", xh, params["w1"], precision=hp)
    o = jax.nn.relu(bn(o, params["bn1"]))

    planes = params["w1"].shape[1]
    w2 = params["w2"].reshape(3, 3, planes, planes)              # HWIO
    o = jax.lax.conv_general_dilated(
        o, w2, window_strides=(1, 1), padding="SAME",
        dimension_numbers=("NHWC", "HWIO", "NHWC"), precision=hp)
    o = jax.nn.relu(bn(o, params["bn2"]))

    o = jnp.einsum("bhwc,cd->bhwd", o, params["w3"], precision=hp)
    o = bn(o, params["bn3"])

    pooled = o.mean(axis=(1, 2))
    h = jax.nn.relu(jnp.dot(pooled, params["se_w1"], precision=hp))
    gate = jax.nn.sigmoid(jnp.dot(h, params["se_w2"], precision=hp))
    o = o * gate[:, None, None, :]
    o = jax.nn.relu(o + xh)
    return jnp.transpose(o, (0, 3, 1, 2))


if __name__ == "__main__":
    key = jax.random.PRNGKey(0)
    ks = jax.random.split(key, 18)

    B, H, W = 2, 16, 16
    planes = 16
    C4 = planes * 4                  # 64
    inplanes = C4                    # downsample=None requires inplanes == planes*4
    reduction = 16
    Ch = C4 // reduction             # 4

    def conv_init(k, fan_in, shape):
        return jax.random.normal(k, shape, jnp.float32) * math.sqrt(2.0 / fan_in)

    def bn_init(kg, kb, km, kv, c):
        gamma = 1.0 + 0.1 * jax.random.normal(kg, (c,), jnp.float32)
        beta = 0.1 * jax.random.normal(kb, (c,), jnp.float32)
        mean = 0.1 * jax.random.normal(km, (c,), jnp.float32)
        var = jax.random.uniform(kv, (c,), jnp.float32, minval=0.5, maxval=1.5)
        return (gamma, beta, mean, var)

    params = {
        "w1": conv_init(ks[0], inplanes, (inplanes, planes)),            # 1x1
        "bn1": bn_init(ks[1], ks[2], ks[3], ks[4], planes),
        "w2": conv_init(ks[5], 9 * planes, (9, planes, planes)),         # 3x3 taps
        "bn2": bn_init(ks[6], ks[7], ks[8], ks[9], planes),
        "w3": conv_init(ks[10], planes, (planes, C4)),                   # 1x1
        "bn3": bn_init(ks[11], ks[12], ks[13], ks[14], C4),
        "se_w1": conv_init(ks[15], C4, (C4, Ch)),
        "se_w2": conv_init(ks[16], Ch, (Ch, C4)),
    }
    x = jax.random.normal(ks[17], (B, inplanes, H, W), dtype=jnp.float32)

    fwd = jax.jit(se_bottleneck)
    out = jax.block_until_ready(fwd(x, params))

    ref = se_bottleneck_ref(x, params)
    assert out.shape == (B, C4, H, W)
    max_err = jnp.max(jnp.abs(out - ref))
    assert jnp.allclose(out, ref, atol=2e-3, rtol=2e-3), f"mismatch, max abs err={max_err}"

    print("KERNEL_OK")
</pallas_src>

<mosaic_0001>
module attributes {stable_mosaic.version = 11 : i64} {
  func.func @_se_bottleneck_kernel(%arg0: i32, %arg1: memref<1x456x64xf32, #tpu.memory_space<vmem>>, %arg2: memref<456x1xf32, #tpu.memory_space<vmem>>, %arg3: memref<384x1xf32, #tpu.memory_space<vmem>>, %arg4: memref<64x16xf32, #tpu.memory_space<vmem>>, %arg5: memref<1x16xf32, #tpu.memory_space<vmem>>, %arg6: memref<144x16xf32, #tpu.memory_space<vmem>>, %arg7: memref<1x16xf32, #tpu.memory_space<vmem>>, %arg8: memref<16x64xf32, #tpu.memory_space<vmem>>, %arg9: memref<1x64xf32, #tpu.memory_space<vmem>>, %arg10: memref<64x4xf32, #tpu.memory_space<vmem>>, %arg11: memref<4x64xf32, #tpu.memory_space<vmem>>, %arg12: memref<1x384x64xf32, #tpu.memory_space<vmem>>, %arg13: memref<456x16xf32, #tpu.memory_space<vmem>>, %arg14: memref<384x144xf32, #tpu.memory_space<vmem>>) attributes {dimension_semantics = [#tpu.dimension_semantics<parallel>], iteration_bounds = array<i64: 2>, scalar_prefetch = 0 : i64, scratch_operands = 2 : i64, tpu.core_type = #tpu.core_type<tc>, window_params = [{transform_indices = @transform_0, window_bounds = array<i64: 1, 456, 64>}, {pipeline_mode = #tpu.pipeline_mode<synchronous>, transform_indices = @transform_1, window_bounds = array<i64: 456, 1>}, {pipeline_mode = #tpu.pipeline_mode<synchronous>, transform_indices = @transform_2, window_bounds = array<i64: 384, 1>}, {pipeline_mode = #tpu.pipeline_mode<synchronous>, transform_indices = @transform_3, window_bounds = array<i64: 64, 16>}, {pipeline_mode = #tpu.pipeline_mode<synchronous>, transform_indices = @transform_4, window_bounds = array<i64: 1, 16>}, {pipeline_mode = #tpu.pipeline_mode<synchronous>, transform_indices = @transform_5, window_bounds = array<i64: 144, 16>}, {pipeline_mode = #tpu.pipeline_mode<synchronous>, transform_indices = @transform_6, window_bounds = array<i64: 1, 16>}, {pipeline_mode = #tpu.pipeline_mode<synchronous>, transform_indices = @transform_7, window_bounds = array<i64: 16, 64>}, {pipeline_mode = #tpu.pipeline_mode<synchronous>, transform_indices = @transform_8, window_bounds = array<i64: 1, 64>}, {pipeline_mode = #tpu.pipeline_mode<synchronous>, transform_indices = @transform_9, window_bounds = array<i64: 64, 4>}, {pipeline_mode = #tpu.pipeline_mode<synchronous>, transform_indices = @transform_10, window_bounds = array<i64: 4, 64>}, {transform_indices = @transform_11, window_bounds = array<i64: 1, 384, 64>}]} {
    %c0 = arith.constant 0 : index
    %c0_0 = arith.constant 0 : index
    %c0_1 = arith.constant 0 : index
    %0 = vector.load %arg1[%c0, %c0_0, %c0_1] : memref<1x456x64xf32, #tpu.memory_space<vmem>>, vector<1x456x64xf32>
    %1 = vector.shape_cast %0 : vector<1x456x64xf32> to vector<456x64xf32>
    %c0_2 = arith.constant 0 : index
    %c0_3 = arith.constant 0 : index
    %2 = vector.load %arg4[%c0_2, %c0_3] : memref<64x16xf32, #tpu.memory_space<vmem>>, vector<64x16xf32>
    %cst = arith.constant dense<0.000000e+00> : vector<456x16xf32>
    %3 = tpu.matmul %1, %2, %cst {dimension_numbers = #tpu.dot_dimension_numbers<[1], [0], [0], [1], [0, 0, 1, 1], [], []>} : vector<456x64xf32>, vector<64x16xf32>, vector<456x16xf32> -> vector<456x16xf32>
    %c0_4 = arith.constant 0 : index
    %c0_5 = arith.constant 0 : index
    %4 = vector.load %arg5[%c0_4, %c0_5] : memref<1x16xf32, #tpu.memory_space<vmem>>, vector<1x16xf32>
    %5 = vector.broadcast %4 : vector<1x16xf32> to vector<456x16xf32>
    %6 = arith.addf %3, %5 : vector<456x16xf32>
    %cst_6 = arith.constant 0.000000e+00 : f32
    %7 = vector.broadcast %cst_6 : f32 to vector<456x16xf32>
    %8 = arith.maximumf %6, %7 : vector<456x16xf32>
    %c0_7 = arith.constant 0 : index
    %c0_8 = arith.constant 0 : index
    %9 = vector.load %arg2[%c0_7, %c0_8] : memref<456x1xf32, #tpu.memory_space<vmem>>, vector<456x1xf32>
    %10 = vector.broadcast %9 : vector<456x1xf32> to vector<456x16xf32>
    %11 = arith.mulf %8, %10 : vector<456x16xf32>
    %c0_9 = arith.constant 0 : index
    %c0_10 = arith.constant 0 : index
    %12 = vector.load %arg13[%c0_9, %c0_10] : memref<456x16xf32, #tpu.memory_space<vmem>>, vector<456x16xf32>
    tpu.vector_store %arg13[%c0_9, %c0_10], %11 {strides = array<i32>} : memref<456x16xf32, #tpu.memory_space<vmem>>, vector<456x16xf32>,
    %c0_11 = arith.constant 0 : index
    %c0_12 = arith.constant 0 : index
    %13 = vector.load %arg13[%c0_11, %c0_12] : memref<456x16xf32, #tpu.memory_space<vmem>>, vector<384x16xf32>
    %c0_13 = arith.constant 0 : index
    %c0_14 = arith.constant 0 : index
    %14 = vector.load %arg14[%c0_13, %c0_14] : memref<384x144xf32, #tpu.memory_space<vmem>>, vector<384x16xf32>
    tpu.vector_store %arg14[%c0_13, %c0_14], %13 {strides = array<i32>} : memref<384x144xf32, #tpu.memory_space<vmem>>, vector<384x16xf32>,
    %c1 = arith.constant 1 : index
    %c0_15 = arith.constant 0 : index
    %15 = vector.load %arg13[%c1, %c0_15] : memref<456x16xf32, #tpu.memory_space<vmem>>, vector<384x16xf32>
    %c0_16 = arith.constant 0 : index
    %c16 = arith.constant 16 : index
    %16 = vector.load %arg14[%c0_16, %c16] : memref<384x144xf32, #tpu.memory_space<vmem>>, vector<384x16xf32>
    tpu.vector_store %arg14[%c0_16, %c16], %15 {strides = array<i32>} : memref<384x144xf32, #tpu.memory_space<vmem>>, vector<384x16xf32>,
    %c2 = arith.constant 2 : index
    %c0_17 = arith.constant 0 : index
    %17 = vector.load %arg13[%c2, %c0_17] : memref<456x16xf32, #tpu.memory_space<vmem>>, vector<384x16xf32>
    %c0_18 = arith.constant 0 : index
    %c32 = arith.constant 32 : index
    %18 = vector.load %arg14[%c0_18, %c32] : memref<384x144xf32, #tpu.memory_space<vmem>>, vector<384x16xf32>
    tpu.vector_store %arg14[%c0_18, %c32], %17 {strides = array<i32>} : memref<384x144xf32, #tpu.memory_space<vmem>>, vector<384x16xf32>,
    %c24 = arith.constant 24 : index
    %c0_19 = arith.constant 0 : index
    %19 = vector.load %arg13[%c24, %c0_19] : memref<456x16xf32, #tpu.memory_space<vmem>>, vector<384x16xf32>
    %c0_20 = arith.constant 0 : index
    %c48 = arith.constant 48 : index
    %20 = vector.load %arg14[%c0_20, %c48] : memref<384x144xf32, #tpu.memory_space<vmem>>, vector<384x16xf32>
    tpu.vector_store %arg14[%c0_20, %c48], %19 {strides = array<i32>} : memref<384x144xf32, #tpu.memory_space<vmem>>, vector<384x16xf32>,
    %c25 = arith.constant 25 : index
    %c0_21 = arith.constant 0 : index
    %21 = vector.load %arg13[%c25, %c0_21] : memref<456x16xf32, #tpu.memory_space<vmem>>, vector<384x16xf32>
    %c0_22 = arith.constant 0 : index
    %c64 = arith.constant 64 : index
    %22 = vector.load %arg14[%c0_22, %c64] : memref<384x144xf32, #tpu.memory_space<vmem>>, vector<384x16xf32>
    tpu.vector_store %arg14[%c0_22, %c64], %21 {strides = array<i32>} : memref<384x144xf32, #tpu.memory_space<vmem>>, vector<384x16xf32>,
    %c26 = arith.constant 26 : index
    %c0_23 = arith.constant 0 : index
    %23 = vector.load %arg13[%c26, %c0_23] : memref<456x16xf32, #tpu.memory_space<vmem>>, vector<384x16xf32>
    %c0_24 = arith.constant 0 : index
    %c80 = arith.constant 80 : index
    %24 = vector.load %arg14[%c0_24, %c80] : memref<384x144xf32, #tpu.memory_space<vmem>>, vector<384x16xf32>
    tpu.vector_store %arg14[%c0_24, %c80], %23 {strides = array<i32>} : memref<384x144xf32, #tpu.memory_space<vmem>>, vector<384x16xf32>,
    %c48_25 = arith.constant 48 : index
    %c0_26 = arith.constant 0 : index
    %25 = vector.load %arg13[%c48_25, %c0_26] : memref<456x16xf32, #tpu.memory_space<vmem>>, vector<384x16xf32>
    %c0_27 = arith.constant 0 : index
    %c96 = arith.constant 96 : index
    %26 = vector.load %arg14[%c0_27, %c96] : memref<384x144xf32, #tpu.memory_space<vmem>>, vector<384x16xf32>
    tpu.vector_store %arg14[%c0_27, %c96], %25 {strides = array<i32>} : memref<384x144xf32, #tpu.memory_space<vmem>>, vector<384x16xf32>,
    %c49 = arith.constant 49 : index
    %c0_28 = arith.constant 0 : index
    %27 = vector.load %arg13[%c49, %c0_28] : memref<456x16xf32, #tpu.memory_space<vmem>>, vector<384x16xf32>
    %c0_29 = arith.constant 0 : index
    %c112 = arith.constant 112 : index
    %28 = vector.load %arg14[%c0_29, %c112] : memref<384x144xf32, #tpu.memory_space<vmem>>, vector<384x16xf32>
    tpu.vector_store %arg14[%c0_29, %c112], %27 {strides = array<i32>} : memref<384x144xf32, #tpu.memory_space<vmem>>, vector<384x16xf32>,
    %c50 = arith.constant 50 : index
    %c0_30 = arith.constant 0 : index
    %29 = vector.load %arg13[%c50, %c0_30] : memref<456x16xf32, #tpu.memory_space<vmem>>, vector<384x16xf32>
    %c0_31 = arith.constant 0 : index
    %c128 = arith.constant 128 : index
    %30 = vector.load %arg14[%c0_31, %c128] : memref<384x144xf32, #tpu.memory_space<vmem>>, vector<384x16xf32>
    tpu.vector_store %arg14[%c0_31, %c128], %29 {strides = array<i32>} : memref<384x144xf32, #tpu.memory_space<vmem>>, vector<384x16xf32>,
    %c0_32 = arith.constant 0 : index
    %c0_33 = arith.constant 0 : index
    %31 = vector.load %arg14[%c0_32, %c0_33] : memref<384x144xf32, #tpu.memory_space<vmem>>, vector<384x144xf32>
    %c0_34 = arith.constant 0 : index
    %c0_35 = arith.constant 0 : index
    %32 = vector.load %arg6[%c0_34, %c0_35] : memref<144x16xf32, #tpu.memory_space<vmem>>, vector<144x16xf32>
    %cst_36 = arith.constant dense<0.000000e+00> : vector<384x16xf32>
    %33 = tpu.matmul %31, %32, %cst_36 {dimension_numbers = #tpu.dot_dimension_numbers<[1], [0], [0], [1], [0, 0, 1, 1], [], []>} : vector<384x144xf32>, vector<144x16xf32>, vector<384x16xf32> -> vector<384x16xf32>
    %c0_37 = arith.constant 0 : index
    %c0_38 = arith.constant 0 : index
    %34 = vector.load %arg7[%c0_37, %c0_38] : memref<1x16xf32, #tpu.memory_space<vmem>>, vector<1x16xf32>
    %35 = vector.broadcast %34 : vector<1x16xf32> to vector<384x16xf32>
    %36 = arith.addf %33, %35 : vector<384x16xf32>
    %cst_39 = arith.constant 0.000000e+00 : f32
    %37 = vector.broadcast %cst_39 : f32 to vector<384x16xf32>
    %38 = arith.maximumf %36, %37 : vector<384x16xf32>
    %c0_40 = arith.constant 0 : index
    %c0_41 = arith.constant 0 : index
    %39 = vector.load %arg8[%c0_40, %c0_41] : memref<16x64xf32, #tpu.memory_space<vmem>>, vector<16x64xf32>
    %cst_42 = arith.constant dense<0.000000e+00> : vector<384x64xf32>
    %40 = tpu.matmul %38, %39, %cst_42 {dimension_numbers = #tpu.dot_dimension_numbers<[1], [0], [0], [1], [0, 0, 1, 1], [], []>} : vector<384x16xf32>, vector<16x64xf32>, vector<384x64xf32> -> vector<384x64xf32>
    %c0_43 = arith.constant 0 : index
    %c0_44 = arith.constant 0 : index
    %41 = vector.load %arg9[%c0_43, %c0_44] : memref<1x64xf32, #tpu.memory_space<vmem>>, vector<1x64xf32>
    %42 = vector.broadcast %41 : vector<1x64xf32> to vector<384x64xf32>
    %43 = arith.addf %40, %42 : vector<384x64xf32>
    %c0_45 = arith.constant 0 : index
    %c0_46 = arith.constant 0 : index
    %44 = vector.load %arg3[%c0_45, %c0_46] : memref<384x1xf32, #tpu.memory_space<vmem>>, vector<384x1xf32>
    %45 = vector.broadcast %44 : vector<384x1xf32> to vector<384x16xf32>
    %46 = arith.mulf %38, %45 : vector<384x16xf32>
    %cst_47 = arith.constant dense<0.000000e+00> : vector<16xf32>
    %47 = vector.multi_reduction <add>, %46, %cst_47 [0] : vector<384x16xf32> to vector<16xf32>
    %48 = vector.shape_cast %47 : vector<16xf32> to vector<1x16xf32>
    %cst_48 = arith.constant 3.906250e-03 : f32
    %49 = vector.broadcast %cst_48 : f32 to vector<1x16xf32>
    %50 = arith.mulf %48, %49 : vector<1x16xf32>
    %c0_49 = arith.constant 0 : index
    %c0_50 = arith.constant 0 : index
    %51 = vector.load %arg8[%c0_49, %c0_50] : memref<16x64xf32, #tpu.memory_space<vmem>>, vector<16x64xf32>
    %cst_51 = arith.constant dense<0.000000e+00> : vector<1x64xf32>
    %52 = tpu.matmul %50, %51, %cst_51 {dimension_numbers = #tpu.dot_dimension_numbers<[1], [0], [0], [1], [0, 0, 1, 1], [], []>} : vector<1x16xf32>, vector<16x64xf32>, vector<1x64xf32> -> vector<1x64xf32>
    %c0_52 = arith.constant 0 : index
    %c0_53 = arith.constant 0 : index
    %53 = vector.load %arg9[%c0_52, %c0_53] : memref<1x64xf32, #tpu.memory_space<vmem>>, vector<1x64xf32>
    %54 = arith.addf %52, %53 : vector<1x64xf32>
    %c0_54 = arith.constant 0 : index
    %c0_55 = arith.constant 0 : index
    %55 = vector.load %arg10[%c0_54, %c0_55] : memref<64x4xf32, #tpu.memory_space<vmem>>, vector<64x4xf32>
    %cst_56 = arith.constant dense<0.000000e+00> : vector<1x4xf32>
    %56 = tpu.matmul %54, %55, %cst_56 {dimension_numbers = #tpu.dot_dimension_numbers<[1], [0], [0], [1], [0, 0, 1, 1], [], []>} : vector<1x64xf32>, vector<64x4xf32>, vector<1x4xf32> -> vector<1x4xf32>
    %cst_57 = arith.constant 0.000000e+00 : f32
    %57 = vector.broadcast %cst_57 : f32 to vector<1x4xf32>
    %58 = arith.maximumf %56, %57 : vector<1x4xf32>
    %c0_58 = arith.constant 0 : index
    %c0_59 = arith.constant 0 : index
    %59 = vector.load %arg11[%c0_58, %c0_59] : memref<4x64xf32, #tpu.memory_space<vmem>>, vector<4x64xf32>
    %cst_60 = arith.constant dense<0.000000e+00> : vector<1x64xf32>
    %60 = tpu.matmul %58, %59, %cst_60 {dimension_numbers = #tpu.dot_dimension_numbers<[1], [0], [0], [1], [0, 0, 1, 1], [], []>} : vector<1x4xf32>, vector<4x64xf32>, vector<1x64xf32> -> vector<1x64xf32>
    %cst_61 = arith.constant 0.000000e+00 : f32
    %61 = vector.broadcast %cst_61 : f32 to vector<1x64xf32>
    %62 = arith.subf %61, %60 : vector<1x64xf32>
    %63 = math.exp %62 : vector<1x64xf32>
    %cst_62 = arith.constant 1.000000e+00 : f32
    %64 = vector.broadcast %cst_62 : f32 to vector<1x64xf32>
    %65 = arith.addf %64, %63 : vector<1x64xf32>
    %cst_63 = arith.constant 1.000000e+00 : f32
    %66 = vector.broadcast %cst_63 : f32 to vector<1x64xf32>
    %67 = arith.divf %66, %65 : vector<1x64xf32>
    %c0_64 = arith.constant 0 : index
    %c25_65 = arith.constant 25 : index
    %c0_66 = arith.constant 0 : index
    %68 = vector.load %arg1[%c0_64, %c25_65, %c0_66] : memref<1x456x64xf32, #tpu.memory_space<vmem>>, vector<1x384x64xf32>
    %69 = vector.shape_cast %68 : vector<1x384x64xf32> to vector<384x64xf32>
    %70 = vector.broadcast %67 : vector<1x64xf32> to vector<384x64xf32>
    %71 = arith.mulf %43, %70 : vector<384x64xf32>
    %72 = arith.addf %71, %69 : vector<384x64xf32>
    %cst_67 = arith.constant 0.000000e+00 : f32
    %73 = vector.broadcast %cst_67 : f32 to vector<384x64xf32>
    %74 = arith.maximumf %72, %73 : vector<384x64xf32>
    %c0_68 = arith.constant 0 : index
    %c0_69 = arith.constant 0 : index
    %c0_70 = arith.constant 0 : index
    %75 = vector.load %arg12[%c0_68, %c0_69, %c0_70] : memref<1x384x64xf32, #tpu.memory_space<vmem>>, vector<1x384x64xf32>
    %76 = vector.shape_cast %75 : vector<1x384x64xf32> to vector<384x64xf32>
    %77 = vector.shape_cast %74 : vector<384x64xf32> to vector<1x384x64xf32>
    tpu.vector_store %arg12[%c0_68, %c0_69, %c0_70], %77 {strides = array<i32>} : memref<1x384x64xf32, #tpu.memory_space<vmem>>, vector<1x384x64xf32>,
    return
  }
  func.func @transform_0(%arg0: i32) -> (i32, i32, i32) {
    %c0_i32 = arith.constant 0 : i32
    %c0_i32_0 = arith.constant 0 : i32
    %c0_i32_1 = arith.constant 0 : i32
    return %arg0, %c0_i32, %c0_i32_0 : i32, i32, i32
  }
  func.func @transform_1(%arg0: i32) -> (i32, i32) {
    %c0_i32 = arith.constant 0 : i32
    %c0_i32_0 = arith.constant 0 : i32
    %c0_i32_1 = arith.constant 0 : i32
    return %c0_i32, %c0_i32_0 : i32, i32
  }
  func.func @transform_2(%arg0: i32) -> (i32, i32) {
    %c0_i32 = arith.constant 0 : i32
    %c0_i32_0 = arith.constant 0 : i32
    %c0_i32_1 = arith.constant 0 : i32
    return %c0_i32, %c0_i32_0 : i32, i32
  }
  func.func @transform_3(%arg0: i32) -> (i32, i32) {
    %c0_i32 = arith.constant 0 : i32
    %c0_i32_0 = arith.constant 0 : i32
    %c0_i32_1 = arith.constant 0 : i32
    return %c0_i32, %c0_i32_0 : i32, i32
  }
  func.func @transform_4(%arg0: i32) -> (i32, i32) {
    %c0_i32 = arith.constant 0 : i32
    %c0_i32_0 = arith.constant 0 : i32
    %c0_i32_1 = arith.constant 0 : i32
    return %c0_i32, %c0_i32_0 : i32, i32
  }
  func.func @transform_5(%arg0: i32) -> (i32, i32) {
    %c0_i32 = arith.constant 0 : i32
    %c0_i32_0 = arith.constant 0 : i32
    %c0_i32_1 = arith.constant 0 : i32
    return %c0_i32, %c0_i32_0 : i32, i32
  }
  func.func @transform_6(%arg0: i32) -> (i32, i32) {
    %c0_i32 = arith.constant 0 : i32
    %c0_i32_0 = arith.constant 0 : i32
    %c0_i32_1 = arith.constant 0 : i32
    return %c0_i32, %c0_i32_0 : i32, i32
  }
  func.func @transform_7(%arg0: i32) -> (i32, i32) {
    %c0_i32 = arith.constant 0 : i32
    %c0_i32_0 = arith.constant 0 : i32
    %c0_i32_1 = arith.constant 0 : i32
    return %c0_i32, %c0_i32_0 : i32, i32
  }
  func.func @transform_8(%arg0: i32) -> (i32, i32) {
    %c0_i32 = arith.constant 0 : i32
    %c0_i32_0 = arith.constant 0 : i32
    %c0_i32_1 = arith.constant 0 : i32
    return %c0_i32, %c0_i32_0 : i32, i32
  }
  func.func @transform_9(%arg0: i32) -> (i32, i32) {
    %c0_i32 = arith.constant 0 : i32
    %c0_i32_0 = arith.constant 0 : i32
    %c0_i32_1 = arith.constant 0 : i32
    return %c0_i32, %c0_i32_0 : i32, i32
  }
  func.func @transform_10(%arg0: i32) -> (i32, i32) {
    %c0_i32 = arith.constant 0 : i32
    %c0_i32_0 = arith.constant 0 : i32
    %c0_i32_1 = arith.constant 0 : i32
    return %c0_i32, %c0_i32_0 : i32, i32
  }
  func.func @transform_11(%arg0: i32) -> (i32, i32, i32) {
    %c0_i32 = arith.constant 0 : i32
    %c0_i32_0 = arith.constant 0 : i32
    %c0_i32_1 = arith.constant 0 : i32
    return %arg0, %c0_i32, %c0_i32_0 : i32, i32, i32
  }
}

</mosaic_0001>

<llo_original>
// kernel: se_bottleneck.1
$region0: #{se_bottleneck.1}
  #allocation0 [shape = 'u32[]', space=smem, size = 0x4, offset = 0x4, fixed_abs, tag = 'smem constant byte address 0x4 - core index']
  #allocation1 [shape = 'u32[144,128]{1,0:T(1,128)}', space=vmem, size = 0x12000, scoped, tag = 'internal scratch']
  #allocation2 [shape = 'f32[456,16]{1,0:T(8,128)}', space=vmem, size = 0x39000, scoped, tag = 'scratch operand']
  #allocation3 [shape = 'f32[384,144]{1,0:T(8,128)}', space=vmem, size = 0x60000, scoped, tag = 'scratch operand']
  %s0 = inlined_call_operand.vmem [shape: f32[2,456,64], index: 0, kind: input, shape index: {}]
  %s1 = inlined_call_operand.vmem [shape: f32[456,1], index: 1, kind: input, shape index: {}]
  %s2 = inlined_call_operand.vmem [shape: f32[384,1], index: 2, kind: input, shape index: {}]
  %s3 = inlined_call_operand.vmem [shape: f32[64,16], index: 3, kind: input, shape index: {}]
  %s4 = inlined_call_operand.vmem [shape: f32[1,16], index: 4, kind: input, shape index: {}]
  %s5 = inlined_call_operand.vmem [shape: f32[144,16], index: 5, kind: input, shape index: {}]
  %s6 = inlined_call_operand.vmem [shape: f32[1,16], index: 6, kind: input, shape index: {}]
  %s7 = inlined_call_operand.vmem [shape: f32[16,64], index: 7, kind: input, shape index: {}]
  %s8 = inlined_call_operand.vmem [shape: f32[1,64], index: 8, kind: input, shape index: {}]
  %s9 = inlined_call_operand.vmem [shape: f32[64,4], index: 9, kind: input, shape index: {}]
  %s10 = inlined_call_operand.vmem [shape: f32[4,64], index: 10, kind: input, shape index: {}]
  %s11 = inlined_call_operand.vmem [shape: f32[2,384,64], index: 11, kind: output, shape index: {}]
  %s12 = sld [smem:[#allocation0]]
  $region77: #{se_bottleneck.1} parent=0
    _
  %s14 = ssub.s32 1, %s12
  %s15 = scalar_select 0, %s14, %s12
  loop: start=0, step=1, limit=4
  $region2: #{se_bottleneck.1} parent=0 // loop_pre_header
    _
  $region3: #{se_bottleneck.1} parent=0 // loop_header
    %s17 = sphi 0, %s21
    %p18 = scmp.ge.s32.totalorder %s17, 4
    %s27 = sphi 0, %s29
    %s30 = sphi 0, %s27
    %s31 = sphi 0, %s30
    %s47 = sphi 0, %s31
    %s51 = sphi 0, %s51
    %s53 = sphi 0, %s51
    %s54 = sphi 0, %s53
    %s68 = sphi 0, %s54
    %s72 = sphi 0, %s72
    %s74 = sphi 0, %s72
    %s75 = sphi 0, %s74
    %s89 = sphi 0, %s75
    %s93 = sphi 0, %s93
    %s95 = sphi 0, %s93
    %s96 = sphi 0, %s95
    %s110 = sphi 0, %s96
    %s114 = sphi 0, %s114
    %s116 = sphi 0, %s114
    %s117 = sphi 0, %s116
    %s131 = sphi 0, %s117
    %s135 = sphi 0, %s135
    %s137 = sphi 0, %s135
    %s138 = sphi 0, %s137
    %s152 = sphi 0, %s138
    %s156 = sphi 0, %s156
    %s158 = sphi 0, %s156
    %s159 = sphi 0, %s158
    %s173 = sphi 0, %s159
    %s177 = sphi 0, %s177
    %s179 = sphi 0, %s177
    %s180 = sphi 0, %s179
    %s194 = sphi 0, %s180
    %s198 = sphi 0, %s198
    %s200 = sphi 0, %s198
    %s201 = sphi 0, %s200
    %s215 = sphi 0, %s201
    %s219 = sphi 0, %s219
    %s221 = sphi 0, %s219
    %s222 = sphi 0, %s221
    %s236 = sphi 0, %s222
    %s240 = sphi 0, %s240
    %s242 = sphi 0, %s240
    %s243 = sphi 0, %s242
    %s257 = sphi 0, %s243
    %s263 = sphi 0, %s265
    %s266 = sphi 0, %s263
    %s267 = sphi 0, %s266
    %s283 = sphi 0, %s267
  $region4: #{se_bottleneck.1} parent=0 // loop_header_branch
    %20 = sbr.rel (%p18) target = $region8
  $region5: #{se_bottleneck.1} parent=0 // loop_body
    %s22 = ssub.s32 %s17, 1
    %s23 = ssub.s32 %s17, 2
    %s24 = sadd.s32 %s17, 1
    %s25 = ssub.s32 %s17, %s24
    %p26 = scmp.eq.s32.totalorder %s25, 0
    %s28 = sadd.s32 %s27, 1
    %s29 = scalar_select %p26, %s27, %s28
    %p32 = pneg %p26
    %p33 = scmp.eq.s32.totalorder %s17, 1
    %p34 = por %p32, %p33
    %p35 = scmp.ne.s32.totalorder %s27, %s30
    %p36 = scmp.eq.s32.totalorder %s17, 0
    %p37 = por %p35, %p36
    %p38 = scmp.ne.s32.totalorder %s27, %s30
    %p39 = scmp.eq.s32.totalorder %s22, 1
    %p40 = por %p38, %p39
    %p41 = scmp.ne.s32.totalorder %s30, %s31
    %p42 = scmp.eq.s32.totalorder %s22, 0
    %p43 = por %p41, %p42
    %p44 = scmp.ne.s32.totalorder %s30, %s31
    %p45 = scmp.eq.s32.totalorder %s23, 1
    %p46 = por %p44, %p45
    %p48 = scmp.ne.s32.totalorder %s31, %s47
    %p49 = scmp.eq.s32.totalorder %s23, 0
    %p50 = por %p48, %p49
    %s52 = sadd.s32 %s51, 1
    %p55 = scmp.eq.s32.totalorder %s17, 1
    %p56 = scmp.ne.s32.totalorder %s51, %s53
    %p57 = scmp.eq.s32.totalorder %s17, 0
    %p58 = por %p56, %p57
    %p59 = scmp.ne.s32.totalorder %s51, %s53
    %p60 = scmp.eq.s32.totalorder %s22, 1
    %p61 = por %p59, %p60
    %p62 = scmp.ne.s32.totalorder %s53, %s54
    %p63 = scmp.eq.s32.totalorder %s22, 0
    %p64 = por %p62, %p63
    %p65 = scmp.ne.s32.totalorder %s53, %s54
    %p66 = scmp.eq.s32.totalorder %s23, 1
    %p67 = por %p65, %p66
    %p69 = scmp.ne.s32.totalorder %s54, %s68
    %p70 = scmp.eq.s32.totalorder %s23, 0
    %p71 = por %p69, %p70
    %s73 = sadd.s32 %s72, 1
    %p76 = scmp.eq.s32.totalorder %s17, 1
    %p77 = scmp.ne.s32.totalorder %s72, %s74
    %p78 = scmp.eq.s32.totalorder %s17, 0
    %p79 = por %p77, %p78
    %p80 = scmp.ne.s32.totalorder %s72, %s74
    %p81 = scmp.eq.s32.totalorder %s22, 1
    %p82 = por %p80, %p81
    %p83 = scmp.ne.s32.totalorder %s74, %s75
    %p84 = scmp.eq.s32.totalorder %s22, 0
    %p85 = por %p83, %p84
    %p86 = scmp.ne.s32.totalorder %s74, %s75
    %p87 = scmp.eq.s32.totalorder %s23, 1
    %p88 = por %p86, %p87
    %p90 = scmp.ne.s32.totalorder %s75, %s89
    %p91 = scmp.eq.s32.totalorder %s23, 0
    %p92 = por %p90, %p91
    %s94 = sadd.s32 %s93, 1
    %p97 = scmp.eq.s32.totalorder %s17, 1
    %p98 = scmp.ne.s32.totalorder %s93, %s95
    %p99 = scmp.eq.s32.totalorder %s17, 0
    %p100 = por %p98, %p99
    %p101 = scmp.ne.s32.totalorder %s93, %s95
    %p102 = scmp.eq.s32.totalorder %s22, 1
    %p103 = por %p101, %p102
    %p104 = scmp.ne.s32.totalorder %s95, %s96
    %p105 = scmp.eq.s32.totalorder %s22, 0
    %p106 = por %p104, %p105
    %p107 = scmp.ne.s32.totalorder %s95, %s96
    %p108 = scmp.eq.s32.totalorder %s23, 1
    %p109 = por %p107, %p108
    %p111 = scmp.ne.s32.totalorder %s96, %s110
    %p112 = scmp.eq.s32.totalorder %s23, 0
    %p113 = por %p111, %p112
    %s115 = sadd.s32 %s114, 1
    %p118 = scmp.eq.s32.totalorder %s17, 1
    %p119 = scmp.ne.s32.totalorder %s114, %s116
    %p120 = scmp.eq.s32.totalorder %s17, 0
    %p121 = por %p119, %p120
    %p122 = scmp.ne.s32.totalorder %s114, %s116
    %p123 = scmp.eq.s32.totalorder %s22, 1
    %p124 = por %p122, %p123
    %p125 = scmp.ne.s32.totalorder %s116, %s117
    %p126 = scmp.eq.s32.totalorder %s22, 0
    %p127 = por %p125, %p126
    %p128 = scmp.ne.s32.totalorder %s116, %s117
    %p129 = scmp.eq.s32.totalorder %s23, 1
    %p130 = por %p128, %p129
    %p132 = scmp.ne.s32.totalorder %s117, %s131
    %p133 = scmp.eq.s32.totalorder %s23, 0
    %p134 = por %p132, %p133
    %s136 = sadd.s32 %s135, 1
    %p139 = scmp.eq.s32.totalorder %s17, 1
    %p140 = scmp.ne.s32.totalorder %s135, %s137
    %p141 = scmp.eq.s32.totalorder %s17, 0
    %p142 = por %p140, %p141
    %p143 = scmp.ne.s32.totalorder %s135, %s137
    %p144 = scmp.eq.s32.totalorder %s22, 1
    %p145 = por %p143, %p144
    %p146 = scmp.ne.s32.totalorder %s137, %s138
    %p147 = scmp.eq.s32.totalorder %s22, 0
    %p148 = por %p146, %p147
    %p149 = scmp.ne.s32.totalorder %s137, %s138
    %p150 = scmp.eq.s32.totalorder %s23, 1
    %p151 = por %p149, %p150
    %p153 = scmp.ne.s32.totalorder %s138, %s152
    %p154 = scmp.eq.s32.totalorder %s23, 0
    %p155 = por %p153, %p154
    %s157 = sadd.s32 %s156, 1
    %p160 = scmp.eq.s32.totalorder %s17, 1
    %p161 = scmp.ne.s32.totalorder %s156, %s158
    %p162 = scmp.eq.s32.totalorder %s17, 0
    %p163 = por %p161, %p162
    %p164 = scmp.ne.s32.totalorder %s156, %s158
    %p165 = scmp.eq.s32.totalorder %s22, 1
    %p166 = por %p164, %p165
    %p167 = scmp.ne.s32.totalorder %s158, %s159
    %p168 = scmp.eq.s32.totalorder %s22, 0
    %p169 = por %p167, %p168
    %p170 = scmp.ne.s32.totalorder %s158, %s159
    %p171 = scmp.eq.s32.totalorder %s23, 1
    %p172 = por %p170, %p171
    %p174 = scmp.ne.s32.totalorder %s159, %s173
    %p175 = scmp.eq.s32.totalorder %s23, 0
    %p176 = por %p174, %p175
    %s178 = sadd.s32 %s177, 1
    %p181 = scmp.eq.s32.totalorder %s17, 1
    %p182 = scmp.ne.s32.totalorder %s177, %s179
    %p183 = scmp.eq.s32.totalorder %s17, 0
    %p184 = por %p182, %p183
    %p185 = scmp.ne.s32.totalorder %s177, %s179
    %p186 = scmp.eq.s32.totalorder %s22, 1
    %p187 = por %p185, %p186
    %p188 = scmp.ne.s32.totalorder %s179, %s180
    %p189 = scmp.eq.s32.totalorder %s22, 0
    %p190 = por %p188, %p189
    %p191 = scmp.ne.s32.totalorder %s179, %s180
    %p192 = scmp.eq.s32.totalorder %s23, 1
    %p193 = por %p191, %p192
    %p195 = scmp.ne.s32.totalorder %s180, %s194
    %p196 = scmp.eq.s32.totalorder %s23, 0
    %p197 = por %p195, %p196
    %s199 = sadd.s32 %s198, 1
    %p202 = scmp.eq.s32.totalorder %s17, 1
    %p203 = scmp.ne.s32.totalorder %s198, %s200
    %p204 = scmp.eq.s32.totalorder %s17, 0
    %p205 = por %p203, %p204
    %p206 = scmp.ne.s32.totalorder %s198, %s200
    %p207 = scmp.eq.s32.totalorder %s22, 1
    %p208 = por %p206, %p207
    %p209 = scmp.ne.s32.totalorder %s200, %s201
    %p210 = scmp.eq.s32.totalorder %s22, 0
    %p211 = por %p209, %p210
    %p212 = scmp.ne.s32.totalorder %s200, %s201
    %p213 = scmp.eq.s32.totalorder %s23, 1
    %p214 = por %p212, %p213
    %p216 = scmp.ne.s32.totalorder %s201, %s215
    %p217 = scmp.eq.s32.totalorder %s23, 0
    %p218 = por %p216, %p217
    %s220 = sadd.s32 %s219, 1
    %p223 = scmp.eq.s32.totalorder %s17, 1
    %p224 = scmp.ne.s32.totalorder %s219, %s221
    %p225 = scmp.eq.s32.totalorder %s17, 0
    %p226 = por %p224, %p225
    %p227 = scmp.ne.s32.totalorder %s219, %s221
    %p228 = scmp.eq.s32.totalorder %s22, 1
    %p229 = por %p227, %p228
    %p230 = scmp.ne.s32.totalorder %s221, %s222
    %p231 = scmp.eq.s32.totalorder %s22, 0
    %p232 = por %p230, %p231
    %p233 = scmp.ne.s32.totalorder %s221, %s222
    %p234 = scmp.eq.s32.totalorder %s23, 1
    %p235 = por %p233, %p234
    %p237 = scmp.ne.s32.totalorder %s222, %s236
    %p238 = scmp.eq.s32.totalorder %s23, 0
    %p239 = por %p237, %p238
    %s241 = sadd.s32 %s240, 1
    %p244 = scmp.eq.s32.totalorder %s17, 1
    %p245 = scmp.ne.s32.totalorder %s240, %s242
    %p246 = scmp.eq.s32.totalorder %s17, 0
    %p247 = por %p245, %p246
    %p248 = scmp.ne.s32.totalorder %s240, %s242
    %p249 = scmp.eq.s32.totalorder %s22, 1
    %p250 = por %p248, %p249
    %p251 = scmp.ne.s32.totalorder %s242, %s243
    %p252 = scmp.eq.s32.totalorder %s22, 0
    %p253 = por %p251, %p252
    %p254 = scmp.ne.s32.totalorder %s242, %s243
    %p255 = scmp.eq.s32.totalorder %s23, 1
    %p256 = por %p254, %p255
    %p258 = scmp.ne.s32.totalorder %s243, %s257
    %p259 = scmp.eq.s32.totalorder %s23, 0
    %p260 = por %p258, %p259
    %s261 = ssub.s32 %s17, %s24
    %p262 = scmp.eq.s32.totalorder %s261, 0
    %s264 = sadd.s32 %s263, 1
    %s265 = scalar_select %p262, %s263, %s264
    %p268 = pneg %p262
    %p269 = scmp.eq.s32.totalorder %s17, 1
    %p270 = por %p268, %p269
    %p271 = scmp.ne.s32.totalorder %s263, %s266
    %p272 = scmp.eq.s32.totalorder %s17, 0
    %p273 = por %p271, %p272
    %p274 = scmp.ne.s32.totalorder %s263, %s266
    %p275 = scmp.eq.s32.totalorder %s22, 1
    %p276 = por %p274, %p275
    %p277 = scmp.ne.s32.totalorder %s266, %s267
    %p278 = scmp.eq.s32.totalorder %s22, 0
    %p279 = por %p277, %p278
    %p280 = scmp.ne.s32.totalorder %s266, %s267
    %p281 = scmp.eq.s32.totalorder %s23, 1
    %p282 = por %p280, %p281
    %p284 = scmp.ne.s32.totalorder %s267, %s283
    %p285 = scmp.eq.s32.totalorder %s23, 0
    %p286 = por %p284, %p285
    %p287 = scmp.le.s32.totalorder 1, %s17
    %p288 = scmp.lt.s32.totalorder %s17, 3
    %p289 = pnand %p287, %p288
    %p290 = pneg %p289
    // Predicated region
    $region9: #{se_bottleneck.1} parent=5 // pred_check
      _
    $region10: #{se_bottleneck.1} parent=5 // pred_check_branch
      %292 = sbr.rel (%p289) target = $region12
    $region11: #{se_bottleneck.1} parent=5 // pred_region
      %s293 = ssub.s32 %s17, 1
      // Predicated region
      $region13: #{se_bottleneck.1} parent=11 // pred_check
        %p294 = pneg %p64
      $region14: #{se_bottleneck.1} parent=11 // pred_check_branch
        %296 = sbr.rel (%p294) target = $region16
      $region15: #{se_bottleneck.1} parent=11 // pred_region
        _
      $region16: #{se_bottleneck.1} parent=11 // pred_fallthru
        _
      // Predicated region
      $region17: #{se_bottleneck.1} parent=11 // pred_check
        %p297 = pneg %p85
      $region18: #{se_bottleneck.1} parent=11 // pred_check_branch
        %299 = sbr.rel (%p297) target = $region20
      $region19: #{se_bottleneck.1} parent=11 // pred_region
        _
      $region20: #{se_bottleneck.1} parent=11 // pred_fallthru
        _
      // Predicated region
      $region21: #{se_bottleneck.1} parent=11 // pred_check
        %p300 = pneg %p106
      $region22: #{se_bottleneck.1} parent=11 // pred_check_branch
        %302 = sbr.rel (%p300) target = $region24
      $region23: #{se_bottleneck.1} parent=11 // pred_region
        _
      $region24: #{se_bottleneck.1} parent=11 // pred_fallthru
        _
      // Predicated region
      $region25: #{se_bottleneck.1} parent=11 // pred_check
        %p303 = pneg %p127
      $region26: #{se_bottleneck.1} parent=11 // pred_check_branch
        %305 = sbr.rel (%p303) target = $region28
      $region27: #{se_bottleneck.1} parent=11 // pred_region
        _
      $region28: #{se_bottleneck.1} parent=11 // pred_fallthru
        _
      // Predicated region
      $region29: #{se_bottleneck.1} parent=11 // pred_check
        %p306 = pneg %p148
      $region30: #{se_bottleneck.1} parent=11 // pred_check_branch
        %308 = sbr.rel (%p306) target = $region32
      $region31: #{se_bottleneck.1} parent=11 // pred_region
        _
      $region32: #{se_bottleneck.1} parent=11 // pred_fallthru
        _
      // Predicated region
      $region33: #{se_bottleneck.1} parent=11 // pred_check
        %p309 = pneg %p169
      $region34: #{se_bottleneck.1} parent=11 // pred_check_branch
        %311 = sbr.rel (%p309) target = $region36
      $region35: #{se_bottleneck.1} parent=11 // pred_region
        _
      $region36: #{se_bottleneck.1} parent=11 // pred_fallthru
        _
      // Predicated region
      $region37: #{se_bottleneck.1} parent=11 // pred_check
        %p312 = pneg %p190
      $region38: #{se_bottleneck.1} parent=11 // pred_check_branch
        %314 = sbr.rel (%p312) target = $region40
      $region39: #{se_bottleneck.1} parent=11 // pred_region
        _
      $region40: #{se_bottleneck.1} parent=11 // pred_fallthru
        _
      // Predicated region
      $region41: #{se_bottleneck.1} parent=11 // pred_check
        %p315 = pneg %p211
      $region42: #{se_bottleneck.1} parent=11 // pred_check_branch
        %317 = sbr.rel (%p315) target = $region44
      $region43: #{se_bottleneck.1} parent=11 // pred_region
        _
      $region44: #{se_bottleneck.1} parent=11 // pred_fallthru
        _
      // Predicated region
      $region45: #{se_bottleneck.1} parent=11 // pred_check
        %p318 = pneg %p232
      $region46: #{se_bottleneck.1} parent=11 // pred_check_branch
        %320 = sbr.rel (%p318) target = $region48
      $region47: #{se_bottleneck.1} parent=11 // pred_region
        _
      $region48: #{se_bottleneck.1} parent=11 // pred_fallthru
        _
      // Predicated region
      $region49: #{se_bottleneck.1} parent=11 // pred_check
        %p321 = pneg %p253
      $region50: #{se_bottleneck.1} parent=11 // pred_check_branch
        %323 = sbr.rel (%p321) target = $region52
      $region51: #{se_bottleneck.1} parent=11 // pred_region
        _
      $region52: #{se_bottleneck.1} parent=11 // pred_fallthru
        _
    $region12: #{se_bottleneck.1} parent=5 // pred_fallthru
      _
    %p324 = scmp.lt.s32.totalorder %s17, 2
    // Predicated region
    $region53: #{se_bottleneck.1} parent=5 // pred_check
      %p325 = pneg %p324
    $region54: #{se_bottleneck.1} parent=5 // pred_check_branch
      %327 = sbr.rel (%p325) target = $region56
    $region55: #{se_bottleneck.1} parent=5 // pred_region
      // Predicated region
      $region57: #{se_bottleneck.1} parent=55 // pred_check
        %p328 = pneg %p37
      $region58: #{se_bottleneck.1} parent=55 // pred_check_branch
        %330 = sbr.rel (%p328) target = $region60
      $region59: #{se_bottleneck.1} parent=55 // pred_region
        %p331 = scmp.lt.s32.totalorder %s17, 1
        %s332 = scalar_select %p331, %s17, 1
        %s333 = smul.addr %s332, 57
        %s334 = smul.addr %s333, 8
        %s335 = scalar_lea.vmem %s0, %s334
      $region60: #{se_bottleneck.1} parent=55 // pred_fallthru
        _
    $region56: #{se_bottleneck.1} parent=5 // pred_fallthru
      _
    %p336 = scmp.le.s32.totalorder 1, %s17
    %p337 = scmp.lt.s32.totalorder %s17, 3
    %p338 = pnand %p336, %p337
    %p339 = pneg %p338
    // Predicated region
    $region61: #{se_bottleneck.1} parent=5 // pred_check
      _
    $region62: #{se_bottleneck.1} parent=5 // pred_check_branch
      %341 = sbr.rel (%p338) target = $region64
    $region63: #{se_bottleneck.1} parent=5 // pred_region
      %s342 = ssub.s32 %s17, 1
      %p343 = scmp.lt.s32.totalorder %s22, 1
      %s344 = scalar_select %p343, %s22, 1
      %s345 = smul.addr %s344, 57
      %s346 = smul.addr %s345, 8
      %s347 = scalar_lea.vmem %s0, %s346
      %p348 = pneg %p43
      %p349 = pneg %p40
      %p350 = pneg %p64
      %p351 = pneg %p61
      %p352 = pneg %p85
      %p353 = pneg %p82
      %p354 = pneg %p106
      %p355 = pneg %p103
      %p356 = pneg %p127
      %p357 = pneg %p124
      %p358 = pneg %p148
      %p359 = pneg %p145
      %p360 = pneg %p169
      %p361 = pneg %p166
      %p362 = pneg %p190
      %p363 = pneg %p187
      %p364 = pneg %p211
      %p365 = pneg %p208
      %p366 = pneg %p232
      %p367 = pneg %p229
      %p368 = pneg %p253
      %p369 = pneg %p250
      %p370 = pneg %p279
      %p371 = pneg %p276
      %p372 = scmp.lt.s32.totalorder %s22, 1
      %s373 = scalar_select %p372, %s22, 1
      %s374 = smul.addr %s373, 48
      %s375 = smul.addr %s374, 8
      %s376 = scalar_lea.vmem %s11, %s375
      %p377 = scmp.lt.s32.totalorder %s22, 1
      %s378 = scalar_select %p377, %s22, 1
      %s379 = smul.addr %s378, 57
      %s380 = smul.addr %s379, 8
      %s381 = scalar_lea.vmem %s0, %s380
      %p382 = scmp.lt.s32.totalorder %s22, 1
      %s383 = scalar_select %p382, %s22, 1
      %s384 = smul.addr %s383, 48
      %s385 = smul.addr %s384, 8
      %s386 = scalar_lea.vmem %s11, %s385
      %v387 = vld [vmem:[%s381] sm:$0xff]
      %v388 = vld [vmem:[%s381 + $0x8] sm:$0xff]
      %v389 = vld [vmem:[%s381 + $0x10] sm:$0xff]
      %v390 = vld [vmem:[%s381 + $0x18] sm:$0xff]
      %v391 = vld [vmem:[%s381 + $0x20] sm:$0xff]
      %v392 = vld [vmem:[%s381 + $0x28] sm:$0xff]
      %v393 = vld [vmem:[%s381 + $0x30] sm:$0xff]
      %v394 = vld [vmem:[%s381 + $0x38] sm:$0xff]
      %v395 = vld [vmem:[%s381 + $0x40] sm:$0xff]
      %v396 = vld [vmem:[%s381 + $0x48] sm:$0xff]
      %v397 = vld [vmem:[%s381 + $0x50] sm:$0xff]
      %v398 = vld [vmem:[%s381 + $0x58] sm:$0xff]
      %v399 = vld [vmem:[%s381 + $0x60] sm:$0xff]
      %v400 = vld [vmem:[%s381 + $0x68] sm:$0xff]
      %v401 = vld [vmem:[%s381 + $0x70] sm:$0xff]
      %v402 = vld [vmem:[%s381 + $0x78] sm:$0xff]
      %v403 = vld [vmem:[%s381 + $0x80] sm:$0xff]
      %v404 = vld [vmem:[%s381 + $0x88] sm:$0xff]
      %v405 = vld [vmem:[%s381 + $0x90] sm:$0xff]
      %v406 = vld [vmem:[%s381 + $0x98] sm:$0xff]
      %v407 = vld [vmem:[%s381 + $0xa0] sm:$0xff]
      %v408 = vld [vmem:[%s381 + $0xa8] sm:$0xff]
      %v409 = vld [vmem:[%s381 + $0xb0] sm:$0xff]
      %v410 = vld [vmem:[%s381 + $0xb8] sm:$0xff]
      %v411 = vld [vmem:[%s381 + $0xc0] sm:$0xff]
      %v412 = vld [vmem:[%s381 + $0xc8] sm:$0xff]
      %v413 = vld [vmem:[%s381 + $0xd0] sm:$0xff]
      %v414 = vld [vmem:[%s381 + $0xd8] sm:$0xff]
      %v415 = vld [vmem:[%s381 + $0xe0] sm:$0xff]
      %v416 = vld [vmem:[%s381 + $0xe8] sm:$0xff]
      %v417 = vld [vmem:[%s381 + $0xf0] sm:$0xff]
      %v418 = vld [vmem:[%s381 + $0xf8] sm:$0xff]
      %v419 = vld [vmem:[%s381 + $0x100] sm:$0xff]
      %v420 = vld [vmem:[%s381 + $0x108] sm:$0xff]
      %v421 = vld [vmem:[%s381 + $0x110] sm:$0xff]
      %v422 = vld [vmem:[%s381 + $0x118] sm:$0xff]
      %v423 = vld [vmem:[%s381 + $0x120] sm:$0xff]
      %v424 = vld [vmem:[%s381 + $0x128] sm:$0xff]
      %v425 = vld [vmem:[%s381 + $0x130] sm:$0xff]
      %v426 = vld [vmem:[%s381 + $0x138] sm:$0xff]
      %v427 = vld [vmem:[%s381 + $0x140] sm:$0xff]
      %v428 = vld [vmem:[%s381 + $0x148] sm:$0xff]
      %v429 = vld [vmem:[%s381 + $0x150] sm:$0xff]
      %v430 = vld [vmem:[%s381 + $0x158] sm:$0xff]
      %v431 = vld [vmem:[%s381 + $0x160] sm:$0xff]
      %v432 = vld [vmem:[%s381 + $0x168] sm:$0xff]
      %v433 = vld [vmem:[%s381 + $0x170] sm:$0xff]
      %v434 = vld [vmem:[%s381 + $0x178] sm:$0xff]
      %v435 = vld [vmem:[%s381 + $0x180] sm:$0xff]
      %v436 = vld [vmem:[%s381 + $0x188] sm:$0xff]
      %v437 = vld [vmem:[%s381 + $0x190] sm:$0xff]
      %v438 = vld [vmem:[%s381 + $0x198] sm:$0xff]
      %v439 = vld [vmem:[%s381 + $0x1a0] sm:$0xff]
      %v440 = vld [vmem:[%s381 + $0x1a8] sm:$0xff]
      %v441 = vld [vmem:[%s381 + $0x1b0] sm:$0xff]
      %v442 = vld [vmem:[%s381 + $0x1b8] sm:$0xff]
      %v443 = vld [vmem:[%s381 + $0x1c0] sm:$0xff]
      %v444 = vld [vmem:[%s3] sm:$0xff]
      %v445 = vld [vmem:[%s3 + $0x8] sm:$0xff]
      %v446 = vld [vmem:[%s3 + $0x10] sm:$0xff]
      %v447 = vld [vmem:[%s3 + $0x18] sm:$0xff]
      %v448 = vld [vmem:[%s3 + $0x20] sm:$0xff]
      %v449 = vld [vmem:[%s3 + $0x28] sm:$0xff]
      %v450 = vld [vmem:[%s3 + $0x30] sm:$0xff]
      %v451 = vld [vmem:[%s3 + $0x38] sm:$0xff]
      %v452 = vld [vmem:[%s4] sm:$0x1]
      %v454 = vlaneseq
      %v455 = vshrl.u32 %v454, 7
      %v456 = vsub.s32 0, %v455
      %v457 = vrot.slane %v452, %v456
      %vm459 = vcmask 523264
      %v461 = vsel %vm459, %v387, 0
      %v464 = vsel %vm459, %v388, 0
      %v467 = vsel %vm459, %v389, 0
      %v470 = vsel %vm459, %v390, 0
      %v473 = vsel %vm459, %v391, 0
      %v476 = vsel %vm459, %v392, 0
      %v479 = vsel %vm459, %v393, 0
      %v482 = vsel %vm459, %v394, 0
      %v485 = vsel %vm459, %v395, 0
      %v488 = vsel %vm459, %v396, 0
      %v491 = vsel %vm459, %v397, 0
      %v494 = vsel %vm459, %v398, 0
      %v497 = vsel %vm459, %v399, 0
      %v500 = vsel %vm459, %v400, 0
      %v503 = vsel %vm459, %v401, 0
      %v506 = vsel %vm459, %v402, 0
      %v509 = vsel %vm459, %v403, 0
      %v512 = vsel %vm459, %v404, 0
      %v515 = vsel %vm459, %v405, 0
      %v518 = vsel %vm459, %v406, 0
      %v521 = vsel %vm459, %v407, 0
      %v524 = vsel %vm459, %v408, 0
      %v527 = vsel %vm459, %v409, 0
      %v530 = vsel %vm459, %v410, 0
      %v533 = vsel %vm459, %v411, 0
      %v536 = vsel %vm459, %v412, 0
      %v539 = vsel %vm459, %v413, 0
      %v542 = vsel %vm459, %v414, 0
      %v545 = vsel %vm459, %v415, 0
      %v548 = vsel %vm459, %v416, 0
      %v551 = vsel %vm459, %v417, 0
      %v554 = vsel %vm459, %v418, 0
      %v557 = vsel %vm459, %v419, 0
      %v560 = vsel %vm459, %v420, 0
      %v563 = vsel %vm459, %v421, 0
      %v566 = vsel %vm459, %v422, 0
      %v569 = vsel %vm459, %v423, 0
      %v572 = vsel %vm459, %v424, 0
      %v575 = vsel %vm459, %v425, 0
      %v578 = vsel %vm459, %v426, 0
      %v581 = vsel %vm459, %v427, 0
      %v584 = vsel %vm459, %v428, 0
      %v587 = vsel %vm459, %v429, 0
      %v590 = vsel %vm459, %v430, 0
      %v593 = vsel %vm459, %v431, 0
      %v596 = vsel %vm459, %v432, 0
      %v599 = vsel %vm459, %v433, 0
      %v602 = vsel %vm459, %v434, 0
      %v605 = vsel %vm459, %v435, 0
      %v608 = vsel %vm459, %v436, 0
      %v611 = vsel %vm459, %v437, 0
      %v614 = vsel %vm459, %v438, 0
      %v617 = vsel %vm459, %v439, 0
      %v620 = vsel %vm459, %v440, 0
      %v623 = vsel %vm459, %v441, 0
      %v626 = vsel %vm459, %v442, 0
      %v629 = vsel %vm459, %v443, 0
      %631 = vmatprep.subr.mxu0 0.0
      %632 = vmatpush1.msra.mxu0 %v444
      %633 = vmatprep.subr.mxu0 0.0
      %634 = vmatpush1.msra.mxu0 %v445
      %635 = vmatprep.subr.mxu0 0.0
      %636 = vmatpush1.msra.mxu0 %v446
      %637 = vmatprep.subr.mxu0 0.0
      %638 = vmatpush1.msra.mxu0 %v447
      %639 = vmatprep.subr.mxu0 0.0
      %640 = vmatpush1.msra.mxu0 %v448
      %641 = vmatprep.subr.mxu0 0.0
      %642 = vmatpush1.msra.mxu0 %v449
      %643 = vmatprep.subr.mxu0 0.0
      %644 = vmatpush1.msra.mxu0 %v450
      %645 = vmatprep.subr.mxu0 0.0
      %646 = vmatpush1.msra.mxu0 %v451
      %647 = vmatprep.subr.mxu0 0.0
      %648 = vmatpush1.msra.mxu0 0.0
      %649 = vmatprep.subr.mxu0 0.0
      %650 = vmatpush1.msra.mxu0 0.0
      %651 = vmatprep.subr.mxu0 0.0
      %652 = vmatpush1.msra.mxu0 0.0
      %653 = vmatprep.subr.mxu0 0.0
      %654 = vmatpush1.msra.mxu0 0.0
      %655 = vmatprep.subr.mxu0 0.0
      %656 = vmatpush1.msra.mxu0 0.0
      %657 = vmatprep.subr.mxu0 0.0
      %658 = vmatpush1.msra.mxu0 0.0
      %659 = vmatprep.subr.mxu0 0.0
      %660 = vmatpush1.msra.mxu0 0.0
      %661 = vmatprep.subr.mxu0 0.0
      %662 = vmatpush1.msra.mxu0 0.0
      %663 = vmatprep.subr.mxu0 0.0
      %664 = vmatpush1.msra.mxu0 0.0
      %665 = vmatprep.subr.mxu0 0.0
      %666 = vmatpush1.msra.mxu0 0.0
      %667 = vmatprep.subr.mxu0 0.0
      %668 = vmatpush1.msra.mxu0 0.0
      %669 = vmatprep.subr.mxu0 0.0
      %670 = vmatpush1.msra.mxu0 0.0
      %671 = vmatprep.subr.mxu0 0.0
      %672 = vmatpush1.msra.mxu0 0.0
      %673 = vmatprep.subr.mxu0 0.0
      %674 = vmatpush1.msra.mxu0 0.0
      %675 = vmatprep.subr.mxu0 0.0
      %676 = vmatpush1.msra.mxu0 0.0
      %677 = vmatprep.subr.mxu0 0.0
      %678 = vmatpush1.msra.mxu0 0.0
      %679 = vmatprep.subr.mxu0 0.0
      %680 = vmatpush1.msra.mxu0 0.0
      %681 = vmatprep.subr.mxu0 0.0
      %682 = vmatpush1.msra.mxu0 0.0
      %683 = vmatprep.subr.mxu0 0.0
      %684 = vmatpush1.msra.mxu0 0.0
      %685 = vmatprep.subr.mxu0 0.0
      %686 = vmatpush1.msra.mxu0 0.0
      %687 = vmatprep.subr.mxu0 0.0
      %688 = vmatpush1.msra.mxu0 0.0
      %689 = vmatprep.subr.mxu0 0.0
      %690 = vmatpush1.msra.mxu0 0.0
      %691 = vmatprep.subr.mxu0 0.0
      %692 = vmatpush1.msra.mxu0 0.0
      %693 = vmatprep.subr.mxu0 0.0
      %694 = vmatpush1.msra.mxu0 0.0
      %695 = vmatprep.mubr.f32.mxu0 0.0
      %696 = vmatmul.mubr.f32.gmra.mrb[0].mxu0 %v461
      %v697 = vpop.f32.mrb[0].mxu0
      %v698 = vadd.f32 %v457, %v697
      %v699 = vpop.f32.mrb[0].mxu0
      %700 = vmatprep.mubr.f32.mxu0 0.0
      %701 = vmatmul.mubr.f32.gmra.mrb[0].mxu0 %v464
      %v702 = vpop.f32.mrb[0].mxu0
      %v703 = vadd.f32 %v457, %v702
      %v704 = vpop.f32.mrb[0].mxu0
      %705 = vmatprep.mubr.f32.mxu0 0.0
      %706 = vmatmul.mubr.f32.gmra.mrb[0].mxu0 %v467
      %v707 = vpop.f32.mrb[0].mxu0
      %v708 = vadd.f32 %v457, %v707
      %v709 = vpop.f32.mrb[0].mxu0
      %710 = vmatprep.mubr.f32.mxu0 0.0
      %711 = vmatmul.mubr.f32.gmra.mrb[0].mxu0 %v470
      %v712 = vpop.f32.mrb[0].mxu0
      %v713 = vadd.f32 %v457, %v712
      %v714 = vpop.f32.mrb[0].mxu0
      %715 = vmatprep.mubr.f32.mxu0 0.0
      %716 = vmatmul.mubr.f32.gmra.mrb[0].mxu0 %v473
      %v717 = vpop.f32.mrb[0].mxu0
      %v718 = vadd.f32 %v457, %v717
      %v719 = vpop.f32.mrb[0].mxu0
      %720 = vmatprep.mubr.f32.mxu0 0.0
      %721 = vmatmul.mubr.f32.gmra.mrb[0].mxu0 %v476
      %v722 = vpop.f32.mrb[0].mxu0
      %v723 = vadd.f32 %v457, %v722
      %v724 = vpop.f32.mrb[0].mxu0
      %725 = vmatprep.mubr.f32.mxu0 0.0
      %726 = vmatmul.mubr.f32.gmra.mrb[0].mxu0 %v479
      %v727 = vpop.f32.mrb[0].mxu0
      %v728 = vadd.f32 %v457, %v727
      %v729 = vpop.f32.mrb[0].mxu0
      %730 = vmatprep.mubr.f32.mxu0 0.0
      %731 = vmatmul.mubr.f32.gmra.mrb[0].mxu0 %v482
      %v732 = vpop.f32.mrb[0].mxu0
      %v733 = vadd.f32 %v457, %v732
      %v734 = vpop.f32.mrb[0].mxu0
      %735 = vmatprep.mubr.f32.mxu0 0.0
      %736 = vmatmul.mubr.f32.gmra.mrb[0].mxu0 %v485
      %v737 = vpop.f32.mrb[0].mxu0
      %v738 = vadd.f32 %v457, %v737
      %v739 = vpop.f32.mrb[0].mxu0
      %740 = vmatprep.mubr.f32.mxu0 0.0
      %741 = vmatmul.mubr.f32.gmra.mrb[0].mxu0 %v488
      %v742 = vpop.f32.mrb[0].mxu0
      %v743 = vadd.f32 %v457, %v742
      %v744 = vpop.f32.mrb[0].mxu0
      %745 = vmatprep.mubr.f32.mxu0 0.0
      %746 = vmatmul.mubr.f32.gmra.mrb[0].mxu0 %v491
      %v747 = vpop.f32.mrb[0].mxu0
      %v748 = vadd.f32 %v457, %v747
      %v749 = vpop.f32.mrb[0].mxu0
      %750 = vmatprep.mubr.f32.mxu0 0.0
      %751 = vmatmul.mubr.f32.gmra.mrb[0].mxu0 %v494
      %v752 = vpop.f32.mrb[0].mxu0
      %v753 = vadd.f32 %v457, %v752
      %v754 = vpop.f32.mrb[0].mxu0
      %755 = vmatprep.mubr.f32.mxu0 0.0
      %756 = vmatmul.mubr.f32.gmra.mrb[0].mxu0 %v497
      %v757 = vpop.f32.mrb[0].mxu0
      %v758 = vadd.f32 %v457, %v757
      %v759 = vpop.f32.mrb[0].mxu0
      %760 = vmatprep.mubr.f32.mxu0 0.0
      %761 = vmatmul.mubr.f32.gmra.mrb[0].mxu0 %v500
      %v762 = vpop.f32.mrb[0].mxu0
      %v763 = vadd.f32 %v457, %v762
      %v764 = vpop.f32.mrb[0].mxu0
      %765 = vmatprep.mubr.f32.mxu0 0.0
      %766 = vmatmul.mubr.f32.gmra.mrb[0].mxu0 %v503
      %v767 = vpop.f32.mrb[0].mxu0
      %v768 = vadd.f32 %v457, %v767
      %v769 = vpop.f32.mrb[0].mxu0
      %770 = vmatprep.mubr.f32.mxu0 0.0
      %771 = vmatmul.mubr.f32.gmra.mrb[0].mxu0 %v506
      %v772 = vpop.f32.mrb[0].mxu0
      %v773 = vadd.f32 %v457, %v772
      %v774 = vpop.f32.mrb[0].mxu0
      %775 = vmatprep.mubr.f32.mxu0 0.0
      %776 = vmatmul.mubr.f32.gmra.mrb[0].mxu0 %v509
      %v777 = vpop.f32.mrb[0].mxu0
      %v778 = vadd.f32 %v457, %v777
      %v779 = vpop.f32.mrb[0].mxu0
      %780 = vmatprep.mubr.f32.mxu0 0.0
      %781 = vmatmul.mubr.f32.gmra.mrb[0].mxu0 %v512
      %v782 = vpop.f32.mrb[0].mxu0
      %v783 = vadd.f32 %v457, %v782
      %v784 = vpop.f32.mrb[0].mxu0
      %785 = vmatprep.mubr.f32.mxu0 0.0
      %786 = vmatmul.mubr.f32.gmra.mrb[0].mxu0 %v515
      %v787 = vpop.f32.mrb[0].mxu0
      %v788 = vadd.f32 %v457, %v787
      %v789 = vpop.f32.mrb[0].mxu0
      %790 = vmatprep.mubr.f32.mxu0 0.0
      %791 = vmatmul.mubr.f32.gmra.mrb[0].mxu0 %v518
      %v792 = vpop.f32.mrb[0].mxu0
      %v793 = vadd.f32 %v457, %v792
      %v794 = vpop.f32.mrb[0].mxu0
      %795 = vmatprep.mubr.f32.mxu0 0.0
      %796 = vmatmul.mubr.f32.gmra.mrb[0].mxu0 %v521
      %v797 = vpop.f32.mrb[0].mxu0
      %v798 = vadd.f32 %v457, %v797
      %v799 = vpop.f32.mrb[0].mxu0
      %800 = vmatprep.mubr.f32.mxu0 0.0
      %801 = vmatmul.mubr.f32.gmra.mrb[0].mxu0 %v524
      %v802 = vpop.f32.mrb[0].mxu0
      %v803 = vadd.f32 %v457, %v802
      %v804 = vpop.f32.mrb[0].mxu0
      %805 = vmatprep.mubr.f32.mxu0 0.0
      %806 = vmatmul.mubr.f32.gmra.mrb[0].mxu0 %v527
      %v807 = vpop.f32.mrb[0].mxu0
      %v808 = vadd.f32 %v457, %v807
      %v809 = vpop.f32.mrb[0].mxu0
      %810 = vmatprep.mubr.f32.mxu0 0.0
      %811 = vmatmul.mubr.f32.gmra.mrb[0].mxu0 %v530
      %v812 = vpop.f32.mrb[0].mxu0
      %v813 = vadd.f32 %v457, %v812
      %v814 = vpop.f32.mrb[0].mxu0
      %815 = vmatprep.mubr.f32.mxu0 0.0
      %816 = vmatmul.mubr.f32.gmra.mrb[0].mxu0 %v533
      %v817 = vpop.f32.mrb[0].mxu0
      %v818 = vadd.f32 %v457, %v817
      %v819 = vpop.f32.mrb[0].mxu0
      %820 = vmatprep.mubr.f32.mxu0 0.0
      %821 = vmatmul.mubr.f32.gmra.mrb[0].mxu0 %v536
      %v822 = vpop.f32.mrb[0].mxu0
      %v823 = vadd.f32 %v457, %v822
      %v824 = vpop.f32.mrb[0].mxu0
      %825 = vmatprep.mubr.f32.mxu0 0.0
      %826 = vmatmul.mubr.f32.gmra.mrb[0].mxu0 %v539
      %v827 = vpop.f32.mrb[0].mxu0
      %v828 = vadd.f32 %v457, %v827
      %v829 = vpop.f32.mrb[0].mxu0
      %830 = vmatprep.mubr.f32.mxu0 0.0
      %831 = vmatmul.mubr.f32.gmra.mrb[0].mxu0 %v542
      %v832 = vpop.f32.mrb[0].mxu0
      %v833 = vadd.f32 %v457, %v832
      %v834 = vpop.f32.mrb[0].mxu0
      %835 = vmatprep.mubr.f32.mxu0 0.0
      %836 = vmatmul.mubr.f32.gmra.mrb[0].mxu0 %v545
      %v837 = vpop.f32.mrb[0].mxu0
      %v838 = vadd.f32 %v457, %v837
      %v839 = vpop.f32.mrb[0].mxu0
      %840 = vmatprep.mubr.f32.mxu0 0.0
      %841 = vmatmul.mubr.f32.gmra.mrb[0].mxu0 %v548
      %v842 = vpop.f32.mrb[0].mxu0
      %v843 = vadd.f32 %v457, %v842
      %v844 = vpop.f32.mrb[0].mxu0
      %845 = vmatprep.mubr.f32.mxu0 0.0
      %846 = vmatmul.mubr.f32.gmra.mrb[0].mxu0 %v551
      %v847 = vpop.f32.mrb[0].mxu0
      %v848 = vadd.f32 %v457, %v847
      %v849 = vpop.f32.mrb[0].mxu0
      %850 = vmatprep.mubr.f32.mxu0 0.0
      %851 = vmatmul.mubr.f32.gmra.mrb[0].mxu0 %v554
      %v852 = vpop.f32.mrb[0].mxu0
      %v853 = vadd.f32 %v457, %v852
      %v854 = vpop.f32.mrb[0].mxu0
      %855 = vmatprep.mubr.f32.mxu0 0.0
      %856 = vmatmul.mubr.f32.gmra.mrb[0].mxu0 %v557
      %v857 = vpop.f32.mrb[0].mxu0
      %v858 = vadd.f32 %v457, %v857
      %v859 = vpop.f32.mrb[0].mxu0
      %860 = vmatprep.mubr.f32.mxu0 0.0
      %861 = vmatmul.mubr.f32.gmra.mrb[0].mxu0 %v560
      %v862 = vpop.f32.mrb[0].mxu0
      %v863 = vadd.f32 %v457, %v862
      %v864 = vpop.f32.mrb[0].mxu0
      %865 = vmatprep.mubr.f32.mxu0 0.0
      %866 = vmatmul.mubr.f32.gmra.mrb[0].mxu0 %v563
      %v867 = vpop.f32.mrb[0].mxu0
      %v868 = vadd.f32 %v457, %v867
      %v869 = vpop.f32.mrb[0].mxu0
      %870 = vmatprep.mubr.f32.mxu0 0.0
      %871 = vmatmul.mubr.f32.gmra.mrb[0].mxu0 %v566
      %v872 = vpop.f32.mrb[0].mxu0
      %v873 = vadd.f32 %v457, %v872
      %v874 = vpop.f32.mrb[0].mxu0
      %875 = vmatprep.mubr.f32.mxu0 0.0
      %876 = vmatmul.mubr.f32.gmra.mrb[0].mxu0 %v569
      %v877 = vpop.f32.mrb[0].mxu0
      %v878 = vadd.f32 %v457, %v877
      %v879 = vpop.f32.mrb[0].mxu0
      %880 = vmatprep.mubr.f32.mxu0 0.0
      %881 = vmatmul.mubr.f32.gmra.mrb[0].mxu0 %v572
      %v882 = vpop.f32.mrb[0].mxu0
      %v883 = vadd.f32 %v457, %v882
      %v884 = vpop.f32.mrb[0].mxu0
      %885 = vmatprep.mubr.f32.mxu0 0.0
      %886 = vmatmul.mubr.f32.gmra.mrb[0].mxu0 %v575
      %v887 = vpop.f32.mrb[0].mxu0
      %v888 = vadd.f32 %v457, %v887
      %v889 = vpop.f32.mrb[0].mxu0
      %890 = vmatprep.mubr.f32.mxu0 0.0
      %891 = vmatmul.mubr.f32.gmra.mrb[0].mxu0 %v578
      %v892 = vpop.f32.mrb[0].mxu0
      %v893 = vadd.f32 %v457, %v892
      %v894 = vpop.f32.mrb[0].mxu0
      %895 = vmatprep.mubr.f32.mxu0 0.0
      %896 = vmatmul.mubr.f32.gmra.mrb[0].mxu0 %v581
      %v897 = vpop.f32.mrb[0].mxu0
      %v898 = vadd.f32 %v457, %v897
      %v899 = vpop.f32.mrb[0].mxu0
      %900 = vmatprep.mubr.f32.mxu0 0.0
      %901 = vmatmul.mubr.f32.gmra.mrb[0].mxu0 %v584
      %v902 = vpop.f32.mrb[0].mxu0
      %v903 = vadd.f32 %v457, %v902
      %v904 = vpop.f32.mrb[0].mxu0
      %905 = vmatprep.mubr.f32.mxu0 0.0
      %906 = vmatmul.mubr.f32.gmra.mrb[0].mxu0 %v587
      %v907 = vpop.f32.mrb[0].mxu0
      %v908 = vadd.f32 %v457, %v907
      %v909 = vpop.f32.mrb[0].mxu0
      %910 = vmatprep.mubr.f32.mxu0 0.0
      %911 = vmatmul.mubr.f32.gmra.mrb[0].mxu0 %v590
      %v912 = vpop.f32.mrb[0].mxu0
      %v913 = vadd.f32 %v457, %v912
      %v914 = vpop.f32.mrb[0].mxu0
      %915 = vmatprep.mubr.f32.mxu0 0.0
      %916 = vmatmul.mubr.f32.gmra.mrb[0].mxu0 %v593
      %v917 = vpop.f32.mrb[0].mxu0
      %v918 = vadd.f32 %v457, %v917
      %v919 = vpop.f32.mrb[0].mxu0
      %920 = vmatprep.mubr.f32.mxu0 0.0
      %921 = vmatmul.mubr.f32.gmra.mrb[0].mxu0 %v596
      %v922 = vpop.f32.mrb[0].mxu0
      %v923 = vadd.f32 %v457, %v922
      %v924 = vpop.f32.mrb[0].mxu0
      %925 = vmatprep.mubr.f32.mxu0 0.0
      %926 = vmatmul.mubr.f32.gmra.mrb[0].mxu0 %v599
      %v927 = vpop.f32.mrb[0].mxu0
      %v928 = vadd.f32 %v457, %v927
      %v929 = vpop.f32.mrb[0].mxu0
      %930 = vmatprep.mubr.f32.mxu0 0.0
      %931 = vmatmul.mubr.f32.gmra.mrb[0].mxu0 %v602
      %v932 = vpop.f32.mrb[0].mxu0
      %v933 = vadd.f32 %v457, %v932
      %v934 = vpop.f32.mrb[0].mxu0
      %935 = vmatprep.mubr.f32.mxu0 0.0
      %936 = vmatmul.mubr.f32.gmra.mrb[0].mxu0 %v605
      %v937 = vpop.f32.mrb[0].mxu0
      %v938 = vadd.f32 %v457, %v937
      %v939 = vpop.f32.mrb[0].mxu0
      %940 = vmatprep.mubr.f32.mxu0 0.0
      %941 = vmatmul.mubr.f32.gmra.mrb[0].mxu0 %v608
      %v942 = vpop.f32.mrb[0].mxu0
      %v943 = vadd.f32 %v457, %v942
      %v944 = vpop.f32.mrb[0].mxu0
      %945 = vmatprep.mubr.f32.mxu0 0.0
      %946 = vmatmul.mubr.f32.gmra.mrb[0].mxu0 %v611
      %v947 = vpop.f32.mrb[0].mxu0
      %v948 = vadd.f32 %v457, %v947
      %v949 = vpop.f32.mrb[0].mxu0
      %950 = vmatprep.mubr.f32.mxu0 0.0
      %951 = vmatmul.mubr.f32.gmra.mrb[0].mxu0 %v614
      %v952 = vpop.f32.mrb[0].mxu0
      %v953 = vadd.f32 %v457, %v952
      %v954 = vpop.f32.mrb[0].mxu0
      %955 = vmatprep.mubr.f32.mxu0 0.0
      %956 = vmatmul.mubr.f32.gmra.mrb[0].mxu0 %v617
      %v957 = vpop.f32.mrb[0].mxu0
      %v958 = vadd.f32 %v457, %v957
      %v959 = vpop.f32.mrb[0].mxu0
      %960 = vmatprep.mubr.f32.mxu0 0.0
      %961 = vmatmul.mubr.f32.gmra.mrb[0].mxu0 %v620
      %v962 = vpop.f32.mrb[0].mxu0
      %v963 = vadd.f32 %v457, %v962
      %v964 = vpop.f32.mrb[0].mxu0
      %965 = vmatprep.mubr.f32.mxu0 0.0
      %966 = vmatmul.mubr.f32.gmra.mrb[0].mxu0 %v623
      %v967 = vpop.f32.mrb[0].mxu0
      %v968 = vadd.f32 %v457, %v967
      %v969 = vpop.f32.mrb[0].mxu0
      %970 = vmatprep.mubr.f32.mxu0 0.0
      %971 = vmatmul.mubr.f32.gmra.mrb[0].mxu0 %v626
      %v972 = vpop.f32.mrb[0].mxu0
      %v973 = vadd.f32 %v457, %v972
      %v974 = vpop.f32.mrb[0].mxu0
      %975 = vmatprep.mubr.f32.mxu0 0.0
      %976 = vmatmul.mubr.f32.gmra.mrb[0].mxu0 %v629
      %v977 = vpop.f32.mrb[0].mxu0
      %v978 = vadd.f32 %v457, %v977
      %v979 = vpop.f32.mrb[0].mxu0
      %980 = vdwg.mxu0
      %v981 = vmax.f32 %v698, 0.0
      %v982 = vmax.f32 %v703, 0.0
      %v983 = vmax.f32 %v708, 0.0
      %v984 = vmax.f32 %v713, 0.0
      %v985 = vmax.f32 %v718, 0.0
      %v986 = vmax.f32 %v723, 0.0
      %v987 = vmax.f32 %v728, 0.0
      %v988 = vmax.f32 %v733, 0.0
      %v989 = vmax.f32 %v738, 0.0
      %v990 = vmax.f32 %v743, 0.0
      %v991 = vmax.f32 %v748, 0.0
      %v992 = vmax.f32 %v753, 0.0
      %v993 = vmax.f32 %v758, 0.0
      %v994 = vmax.f32 %v763, 0.0
      %v995 = vmax.f32 %v768, 0.0
      %v996 = vmax.f32 %v773, 0.0
      %v997 = vmax.f32 %v778, 0.0
      %v998 = vmax.f32 %v783, 0.0
      %v999 = vmax.f32 %v788, 0.0
      %v1000 = vmax.f32 %v793, 0.0
      %v1001 = vmax.f32 %v798, 0.0
      %v1002 = vmax.f32 %v803, 0.0
      %v1003 = vmax.f32 %v808, 0.0
      %v1004 = vmax.f32 %v813, 0.0
      %v1005 = vmax.f32 %v818, 0.0
      %v1006 = vmax.f32 %v823, 0.0
      %v1007 = vmax.f32 %v828, 0.0
      %v1008 = vmax.f32 %v833, 0.0
      %v1009 = vmax.f32 %v838, 0.0
      %v1010 = vmax.f32 %v843, 0.0
      %v1011 = vmax.f32 %v848, 0.0
      %v1012 = vmax.f32 %v853, 0.0
      %v1013 = vmax.f32 %v858, 0.0
      %v1014 = vmax.f32 %v863, 0.0
      %v1015 = vmax.f32 %v868, 0.0
      %v1016 = vmax.f32 %v873, 0.0
      %v1017 = vmax.f32 %v878, 0.0
      %v1018 = vmax.f32 %v883, 0.0
      %v1019 = vmax.f32 %v888, 0.0
      %v1020 = vmax.f32 %v893, 0.0
      %v1021 = vmax.f32 %v898, 0.0
      %v1022 = vmax.f32 %v903, 0.0
      %v1023 = vmax.f32 %v908, 0.0
      %v1024 = vmax.f32 %v913, 0.0
      %v1025 = vmax.f32 %v918, 0.0
      %v1026 = vmax.f32 %v923, 0.0
      %v1027 = vmax.f32 %v928, 0.0
      %v1028 = vmax.f32 %v933, 0.0
      %v1029 = vmax.f32 %v938, 0.0
      %v1030 = vmax.f32 %v943, 0.0
      %v1031 = vmax.f32 %v948, 0.0
      %v1032 = vmax.f32 %v953, 0.0
      %v1033 = vmax.f32 %v958, 0.0
      %v1034 = vmax.f32 %v963, 0.0
      %v1035 = vmax.f32 %v968, 0.0
      %v1036 = vmax.f32 %v973, 0.0
      %v1037 = vmax.f32 %v978, 0.0
      %v1038 = vld [vmem:[%s1] sm:$0xff]
      %v1039 = vld [vmem:[%s1 + $0x8] sm:$0xff]
      %v1040 = vld [vmem:[%s1 + $0x10] sm:$0xff]
      %v1041 = vld [vmem:[%s1 + $0x18] sm:$0xff]
      %v1042 = vld [vmem:[%s1 + $0x20] sm:$0xff]
      %v1043 = vld [vmem:[%s1 + $0x28] sm:$0xff]
      %v1044 = vld [vmem:[%s1 + $0x30] sm:$0xff]
      %v1045 = vld [vmem:[%s1 + $0x38] sm:$0xff]
      %v1046 = vld [vmem:[%s1 + $0x40] sm:$0xff]
      %v1047 = vld [vmem:[%s1 + $0x48] sm:$0xff]
      %v1048 = vld [vmem:[%s1 + $0x50] sm:$0xff]
      %v1049 = vld [vmem:[%s1 + $0x58] sm:$0xff]
      %v1050 = vld [vmem:[%s1 + $0x60] sm:$0xff]
      %v1051 = vld [vmem:[%s1 + $0x68] sm:$0xff]
      %v1052 = vld [vmem:[%s1 + $0x70] sm:$0xff]
      %v1053 = vld [vmem:[%s1 + $0x78] sm:$0xff]
      %v1054 = vld [vmem:[%s1 + $0x80] sm:$0xff]
      %v1055 = vld [vmem:[%s1 + $0x88] sm:$0xff]
      %v1056 = vld [vmem:[%s1 + $0x90] sm:$0xff]
      %v1057 = vld [vmem:[%s1 + $0x98] sm:$0xff]
      %v1058 = vld [vmem:[%s1 + $0xa0] sm:$0xff]
      %v1059 = vld [vmem:[%s1 + $0xa8] sm:$0xff]
      %v1060 = vld [vmem:[%s1 + $0xb0] sm:$0xff]
      %v1061 = vld [vmem:[%s1 + $0xb8] sm:$0xff]
      %v1062 = vld [vmem:[%s1 + $0xc0] sm:$0xff]
      %v1063 = vld [vmem:[%s1 + $0xc8] sm:$0xff]
      %v1064 = vld [vmem:[%s1 + $0xd0] sm:$0xff]
      %v1065 = vld [vmem:[%s1 + $0xd8] sm:$0xff]
      %v1066 = vld [vmem:[%s1 + $0xe0] sm:$0xff]
      %v1067 = vld [vmem:[%s1 + $0xe8] sm:$0xff]
      %v1068 = vld [vmem:[%s1 + $0xf0] sm:$0xff]
      %v1069 = vld [vmem:[%s1 + $0xf8] sm:$0xff]
      %v1070 = vld [vmem:[%s1 + $0x100] sm:$0xff]
      %v1071 = vld [vmem:[%s1 + $0x108] sm:$0xff]
      %v1072 = vld [vmem:[%s1 + $0x110] sm:$0xff]
      %v1073 = vld [vmem:[%s1 + $0x118] sm:$0xff]
      %v1074 = vld [vmem:[%s1 + $0x120] sm:$0xff]
      %v1075 = vld [vmem:[%s1 + $0x128] sm:$0xff]
      %v1076 = vld [vmem:[%s1 + $0x130] sm:$0xff]
      %v1077 = vld [vmem:[%s1 + $0x138] sm:$0xff]
      %v1078 = vld [vmem:[%s1 + $0x140] sm:$0xff]
      %v1079 = vld [vmem:[%s1 + $0x148] sm:$0xff]
      %v1080 = vld [vmem:[%s1 + $0x150] sm:$0xff]
      %v1081 = vld [vmem:[%s1 + $0x158] sm:$0xff]
      %v1082 = vld [vmem:[%s1 + $0x160] sm:$0xff]
      %v1083 = vld [vmem:[%s1 + $0x168] sm:$0xff]
      %v1084 = vld [vmem:[%s1 + $0x170] sm:$0xff]
      %v1085 = vld [vmem:[%s1 + $0x178] sm:$0xff]
      %v1086 = vld [vmem:[%s1 + $0x180] sm:$0xff]
      %v1087 = vld [vmem:[%s1 + $0x188] sm:$0xff]
      %v1088 = vld [vmem:[%s1 + $0x190] sm:$0xff]
      %v1089 = vld [vmem:[%s1 + $0x198] sm:$0xff]
      %v1090 = vld [vmem:[%s1 + $0x1a0] sm:$0xff]
      %v1091 = vld [vmem:[%s1 + $0x1a8] sm:$0xff]
      %v1092 = vld [vmem:[%s1 + $0x1b0] sm:$0xff]
      %v1093 = vld [vmem:[%s1 + $0x1b8] sm:$0xff]
      %v1094 = vld [vmem:[%s1 + $0x1c0] sm:$0xff]
      %1096 = vset.pattern.permute.xlu0 0
      %1097 = vperm.xlu0 %1096, %v1038
      %v1098 = vpop.permute.xlu0 %1097
      %1101 = vset.pattern.permute.xlu0 0
      %1102 = vperm.xlu0 %1101, %v1039
      %v1103 = vpop.permute.xlu0 %1102
      %1106 = vset.pattern.permute.xlu0 0
      %1107 = vperm.xlu0 %1106, %v1040
      %v1108 = vpop.permute.xlu0 %1107
      %1111 = vset.pattern.permute.xlu0 0
      %1112 = vperm.xlu0 %1111, %v1041
      %v1113 = vpop.permute.xlu0 %1112
      %1116 = vset.pattern.permute.xlu0 0
      %1117 = vperm.xlu0 %1116, %v1042
      %v1118 = vpop.permute.xlu0 %1117
      %1121 = vset.pattern.permute.xlu0 0
      %1122 = vperm.xlu0 %1121, %v1043
      %v1123 = vpop.permute.xlu0 %1122
      %1126 = vset.pattern.permute.xlu0 0
      %1127 = vperm.xlu0 %1126, %v1044
      %v1128 = vpop.permute.xlu0 %1127
      %1131 = vset.pattern.permute.xlu0 0
      %1132 = vperm.xlu0 %1131, %v1045
      %v1133 = vpop.permute.xlu0 %1132
      %1136 = vset.pattern.permute.xlu0 0
      %1137 = vperm.xlu0 %1136, %v1046
      %v1138 = vpop.permute.xlu0 %1137
      %1141 = vset.pattern.permute.xlu0 0
      %1142 = vperm.xlu0 %1141, %v1047
      %v1143 = vpop.permute.xlu0 %1142
      %1146 = vset.pattern.permute.xlu0 0
      %1147 = vperm.xlu0 %1146, %v1048
      %v1148 = vpop.permute.xlu0 %1147
      %1151 = vset.pattern.permute.xlu0 0
      %1152 = vperm.xlu0 %1151, %v1049
      %v1153 = vpop.permute.xlu0 %1152
      %1156 = vset.pattern.permute.xlu0 0
      %1157 = vperm.xlu0 %1156, %v1050
      %v1158 = vpop.permute.xlu0 %1157
      %1161 = vset.pattern.permute.xlu0 0
      %1162 = vperm.xlu0 %1161, %v1051
      %v1163 = vpop.permute.xlu0 %1162
      %1166 = vset.pattern.permute.xlu0 0
      %1167 = vperm.xlu0 %1166, %v1052
      %v1168 = vpop.permute.xlu0 %1167
      %1171 = vset.pattern.permute.xlu0 0
      %1172 = vperm.xlu0 %1171, %v1053
      %v1173 = vpop.permute.xlu0 %1172
      %1176 = vset.pattern.permute.xlu0 0
      %1177 = vperm.xlu0 %1176, %v1054
      %v1178 = vpop.permute.xlu0 %1177
      %1181 = vset.pattern.permute.xlu0 0
      %1182 = vperm.xlu0 %1181, %v1055
      %v1183 = vpop.permute.xlu0 %1182
      %1186 = vset.pattern.permute.xlu0 0
      %1187 = vperm.xlu0 %1186, %v1056
      %v1188 = vpop.permute.xlu0 %1187
      %1191 = vset.pattern.permute.xlu0 0
      %1192 = vperm.xlu0 %1191, %v1057
      %v1193 = vpop.permute.xlu0 %1192
      %1196 = vset.pattern.permute.xlu0 0
      %1197 = vperm.xlu0 %1196, %v1058
      %v1198 = vpop.permute.xlu0 %1197
      %1201 = vset.pattern.permute.xlu0 0
      %1202 = vperm.xlu0 %1201, %v1059
      %v1203 = vpop.permute.xlu0 %1202
      %1206 = vset.pattern.permute.xlu0 0
      %1207 = vperm.xlu0 %1206, %v1060
      %v1208 = vpop.permute.xlu0 %1207
      %1211 = vset.pattern.permute.xlu0 0
      %1212 = vperm.xlu0 %1211, %v1061
      %v1213 = vpop.permute.xlu0 %1212
      %1216 = vset.pattern.permute.xlu0 0
      %1217 = vperm.xlu0 %1216, %v1062
      %v1218 = vpop.permute.xlu0 %1217
      %1221 = vset.pattern.permute.xlu0 0
      %1222 = vperm.xlu0 %1221, %v1063
      %v1223 = vpop.permute.xlu0 %1222
      %1226 = vset.pattern.permute.xlu0 0
      %1227 = vperm.xlu0 %1226, %v1064
      %v1228 = vpop.permute.xlu0 %1227
      %1231 = vset.pattern.permute.xlu0 0
      %1232 = vperm.xlu0 %1231, %v1065
      %v1233 = vpop.permute.xlu0 %1232
      %1236 = vset.pattern.permute.xlu0 0
      %1237 = vperm.xlu0 %1236, %v1066
      %v1238 = vpop.permute.xlu0 %1237
      %1241 = vset.pattern.permute.xlu0 0
      %1242 = vperm.xlu0 %1241, %v1067
      %v1243 = vpop.permute.xlu0 %1242
      %1246 = vset.pattern.permute.xlu0 0
      %1247 = vperm.xlu0 %1246, %v1068
      %v1248 = vpop.permute.xlu0 %1247
      %1251 = vset.pattern.permute.xlu0 0
      %1252 = vperm.xlu0 %1251, %v1069
      %v1253 = vpop.permute.xlu0 %1252
      %1256 = vset.pattern.permute.xlu0 0
      %1257 = vperm.xlu0 %1256, %v1070
      %v1258 = vpop.permute.xlu0 %1257
      %1261 = vset.pattern.permute.xlu0 0
      %1262 = vperm.xlu0 %1261, %v1071
      %v1263 = vpop.permute.xlu0 %1262
      %1266 = vset.pattern.permute.xlu0 0
      %1267 = vperm.xlu0 %1266, %v1072
      %v1268 = vpop.permute.xlu0 %1267
      %1271 = vset.pattern.permute.xlu0 0
      %1272 = vperm.xlu0 %1271, %v1073
      %v1273 = vpop.permute.xlu0 %1272
      %1276 = vset.pattern.permute.xlu0 0
      %1277 = vperm.xlu0 %1276, %v1074
      %v1278 = vpop.permute.xlu0 %1277
      %1281 = vset.pattern.permute.xlu0 0
      %1282 = vperm.xlu0 %1281, %v1075
      %v1283 = vpop.permute.xlu0 %1282
      %1286 = vset.pattern.permute.xlu0 0
      %1287 = vperm.xlu0 %1286, %v1076
      %v1288 = vpop.permute.xlu0 %1287
      %1291 = vset.pattern.permute.xlu0 0
      %1292 = vperm.xlu0 %1291, %v1077
      %v1293 = vpop.permute.xlu0 %1292
      %1296 = vset.pattern.permute.xlu0 0
      %1297 = vperm.xlu0 %1296, %v1078
      %v1298 = vpop.permute.xlu0 %1297
      %1301 = vset.pattern.permute.xlu0 0
      %1302 = vperm.xlu0 %1301, %v1079
      %v1303 = vpop.permute.xlu0 %1302
      %1306 = vset.pattern.permute.xlu0 0
      %1307 = vperm.xlu0 %1306, %v1080
      %v1308 = vpop.permute.xlu0 %1307
      %1311 = vset.pattern.permute.xlu0 0
      %1312 = vperm.xlu0 %1311, %v1081
      %v1313 = vpop.permute.xlu0 %1312
      %1316 = vset.pattern.permute.xlu0 0
      %1317 = vperm.xlu0 %1316, %v1082
      %v1318 = vpop.permute.xlu0 %1317
      %1321 = vset.pattern.permute.xlu0 0
      %1322 = vperm.xlu0 %1321, %v1083
      %v1323 = vpop.permute.xlu0 %1322
      %1326 = vset.pattern.permute.xlu0 0
      %1327 = vperm.xlu0 %1326, %v1084
      %v1328 = vpop.permute.xlu0 %1327
      %1331 = vset.pattern.permute.xlu0 0
      %1332 = vperm.xlu0 %1331, %v1085
      %v1333 = vpop.permute.xlu0 %1332
      %1336 = vset.pattern.permute.xlu0 0
      %1337 = vperm.xlu0 %1336, %v1086
      %v1338 = vpop.permute.xlu0 %1337
      %1341 = vset.pattern.permute.xlu0 0
      %1342 = vperm.xlu0 %1341, %v1087
      %v1343 = vpop.permute.xlu0 %1342
      %1346 = vset.pattern.permute.xlu0 0
      %1347 = vperm.xlu0 %1346, %v1088
      %v1348 = vpop.permute.xlu0 %1347
      %1351 = vset.pattern.permute.xlu0 0
      %1352 = vperm.xlu0 %1351, %v1089
      %v1353 = vpop.permute.xlu0 %1352
      %1356 = vset.pattern.permute.xlu0 0
      %1357 = vperm.xlu0 %1356, %v1090
      %v1358 = vpop.permute.xlu0 %1357
      %1361 = vset.pattern.permute.xlu0 0
      %1362 = vperm.xlu0 %1361, %v1091
      %v1363 = vpop.permute.xlu0 %1362
      %1366 = vset.pattern.permute.xlu0 0
      %1367 = vperm.xlu0 %1366, %v1092
      %v1368 = vpop.permute.xlu0 %1367
      %1371 = vset.pattern.permute.xlu0 0
      %1372 = vperm.xlu0 %1371, %v1093
      %v1373 = vpop.permute.xlu0 %1372
      %1376 = vset.pattern.permute.xlu0 0
      %1377 = vperm.xlu0 %1376, %v1094
      %v1378 = vpop.permute.xlu0 %1377
      %v1380 = vmul.f32 %v981, %v1098
      %v1381 = vmul.f32 %v982, %v1103
      %v1382 = vmul.f32 %v983, %v1108
      %v1383 = vmul.f32 %v984, %v1113
      %v1384 = vmul.f32 %v985, %v1118
      %v1385 = vmul.f32 %v986, %v1123
      %v1386 = vmul.f32 %v987, %v1128
      %v1387 = vmul.f32 %v988, %v1133
      %v1388 = vmul.f32 %v989, %v1138
      %v1389 = vmul.f32 %v990, %v1143
      %v1390 = vmul.f32 %v991, %v1148
      %v1391 = vmul.f32 %v992, %v1153
      %v1392 = vmul.f32 %v993, %v1158
      %v1393 = vmul.f32 %v994, %v1163
      %v1394 = vmul.f32 %v995, %v1168
      %v1395 = vmul.f32 %v996, %v1173
      %v1396 = vmul.f32 %v997, %v1178
      %v1397 = vmul.f32 %v998, %v1183
      %v1398 = vmul.f32 %v999, %v1188
      %v1399 = vmul.f32 %v1000, %v1193
      %v1400 = vmul.f32 %v1001, %v1198
      %v1401 = vmul.f32 %v1002, %v1203
      %v1402 = vmul.f32 %v1003, %v1208
      %v1403 = vmul.f32 %v1004, %v1213
      %v1404 = vmul.f32 %v1005, %v1218
      %v1405 = vmul.f32 %v1006, %v1223
      %v1406 = vmul.f32 %v1007, %v1228
      %v1407 = vmul.f32 %v1008, %v1233
      %v1408 = vmul.f32 %v1009, %v1238
      %v1409 = vmul.f32 %v1010, %v1243
      %v1410 = vmul.f32 %v1011, %v1248
      %v1411 = vmul.f32 %v1012, %v1253
      %v1412 = vmul.f32 %v1013, %v1258
      %v1413 = vmul.f32 %v1014, %v1263
      %v1414 = vmul.f32 %v1015, %v1268
      %v1415 = vmul.f32 %v1016, %v1273
      %v1416 = vmul.f32 %v1017, %v1278
      %v1417 = vmul.f32 %v1018, %v1283
      %v1418 = vmul.f32 %v1019, %v1288
      %v1419 = vmul.f32 %v1020, %v1293
      %v1420 = vmul.f32 %v1021, %v1298
      %v1421 = vmul.f32 %v1022, %v1303
      %v1422 = vmul.f32 %v1023, %v1308
      %v1423 = vmul.f32 %v1024, %v1313
      %v1424 = vmul.f32 %v1025, %v1318
      %v1425 = vmul.f32 %v1026, %v1323
      %v1426 = vmul.f32 %v1027, %v1328
      %v1427 = vmul.f32 %v1028, %v1333
      %v1428 = vmul.f32 %v1029, %v1338
      %v1429 = vmul.f32 %v1030, %v1343
      %v1430 = vmul.f32 %v1031, %v1348
      %v1431 = vmul.f32 %v1032, %v1353
      %v1432 = vmul.f32 %v1033, %v1358
      %v1433 = vmul.f32 %v1034, %v1363
      %v1434 = vmul.f32 %v1035, %v1368
      %v1435 = vmul.f32 %v1036, %v1373
      %v1436 = vmul.f32 %v1037, %v1378
      %vm1437 = vcmask 130048
      %1438 = vst.msk [vmem:[#allocation2] sm:$0xff] %vm1437, %v1380
      %1439 = vst.msk [vmem:[#allocation2 + $0x8] sm:$0xff] %vm1437, %v1381
      %1440 = vst.msk [vmem:[#allocation2 + $0x10] sm:$0xff] %vm1437, %v1382
      %1441 = vst.msk [vmem:[#allocation2 + $0x18] sm:$0xff] %vm1437, %v1383
      %1442 = vst.msk [vmem:[#allocation2 + $0x20] sm:$0xff] %vm1437, %v1384
      %1443 = vst.msk [vmem:[#allocation2 + $0x28] sm:$0xff] %vm1437, %v1385
      %1444 = vst.msk [vmem:[#allocation2 + $0x30] sm:$0xff] %vm1437, %v1386
      %1445 = vst.msk [vmem:[#allocation2 + $0x38] sm:$0xff] %vm1437, %v1387
      %1446 = vst.msk [vmem:[#allocation2 + $0x40] sm:$0xff] %vm1437, %v1388
      %1447 = vst.msk [vmem:[#allocation2 + $0x48] sm:$0xff] %vm1437, %v1389
      %1448 = vst.msk [vmem:[#allocation2 + $0x50] sm:$0xff] %vm1437, %v1390
      %1449 = vst.msk [vmem:[#allocation2 + $0x58] sm:$0xff] %vm1437, %v1391
      %1450 = vst.msk [vmem:[#allocation2 + $0x60] sm:$0xff] %vm1437, %v1392
      %1451 = vst.msk [vmem:[#allocation2 + $0x68] sm:$0xff] %vm1437, %v1393
      %1452 = vst.msk [vmem:[#allocation2 + $0x70] sm:$0xff] %vm1437, %v1394
      %1453 = vst.msk [vmem:[#allocation2 + $0x78] sm:$0xff] %vm1437, %v1395
      %1454 = vst.msk [vmem:[#allocation2 + $0x80] sm:$0xff] %vm1437, %v1396
      %1455 = vst.msk [vmem:[#allocation2 + $0x88] sm:$0xff] %vm1437, %v1397
      %1456 = vst.msk [vmem:[#allocation2 + $0x90] sm:$0xff] %vm1437, %v1398
      %1457 = vst.msk [vmem:[#allocation2 + $0x98] sm:$0xff] %vm1437, %v1399
      %1458 = vst.msk [vmem:[#allocation2 + $0xa0] sm:$0xff] %vm1437, %v1400
      %1459 = vst.msk [vmem:[#allocation2 + $0xa8] sm:$0xff] %vm1437, %v1401
      %1460 = vst.msk [vmem:[#allocation2 + $0xb0] sm:$0xff] %vm1437, %v1402
      %1461 = vst.msk [vmem:[#allocation2 + $0xb8] sm:$0xff] %vm1437, %v1403
      %1462 = vst.msk [vmem:[#allocation2 + $0xc0] sm:$0xff] %vm1437, %v1404
      %1463 = vst.msk [vmem:[#allocation2 + $0xc8] sm:$0xff] %vm1437, %v1405
      %1464 = vst.msk [vmem:[#allocation2 + $0xd0] sm:$0xff] %vm1437, %v1406
      %1465 = vst.msk [vmem:[#allocation2 + $0xd8] sm:$0xff] %vm1437, %v1407
      %1466 = vst.msk [vmem:[#allocation2 + $0xe0] sm:$0xff] %vm1437, %v1408
      %1467 = vst.msk [vmem:[#allocation2 + $0xe8] sm:$0xff] %vm1437, %v1409
      %1468 = vst.msk [vmem:[#allocation2 + $0xf0] sm:$0xff] %vm1437, %v1410
      %1469 = vst.msk [vmem:[#allocation2 + $0xf8] sm:$0xff] %vm1437, %v1411
      %1470 = vst.msk [vmem:[#allocation2 + $0x100] sm:$0xff] %vm1437, %v1412
      %1471 = vst.msk [vmem:[#allocation2 + $0x108] sm:$0xff] %vm1437, %v1413
      %1472 = vst.msk [vmem:[#allocation2 + $0x110] sm:$0xff] %vm1437, %v1414
      %1473 = vst.msk [vmem:[#allocation2 + $0x118] sm:$0xff] %vm1437, %v1415
      %1474 = vst.msk [vmem:[#allocation2 + $0x120] sm:$0xff] %vm1437, %v1416
      %1475 = vst.msk [vmem:[#allocation2 + $0x128] sm:$0xff] %vm1437, %v1417
      %1476 = vst.msk [vmem:[#allocation2 + $0x130] sm:$0xff] %vm1437, %v1418
      %1477 = vst.msk [vmem:[#allocation2 + $0x138] sm:$0xff] %vm1437, %v1419
      %1478 = vst.msk [vmem:[#allocation2 + $0x140] sm:$0xff] %vm1437, %v1420
      %1479 = vst.msk [vmem:[#allocation2 + $0x148] sm:$0xff] %vm1437, %v1421
      %1480 = vst.msk [vmem:[#allocation2 + $0x150] sm:$0xff] %vm1437, %v1422
      %1481 = vst.msk [vmem:[#allocation2 + $0x158] sm:$0xff] %vm1437, %v1423
      %1482 = vst.msk [vmem:[#allocation2 + $0x160] sm:$0xff] %vm1437, %v1424
      %1483 = vst.msk [vmem:[#allocation2 + $0x168] sm:$0xff] %vm1437, %v1425
      %1484 = vst.msk [vmem:[#allocation2 + $0x170] sm:$0xff] %vm1437, %v1426
      %1485 = vst.msk [vmem:[#allocation2 + $0x178] sm:$0xff] %vm1437, %v1427
      %1486 = vst.msk [vmem:[#allocation2 + $0x180] sm:$0xff] %vm1437, %v1428
      %1487 = vst.msk [vmem:[#allocation2 + $0x188] sm:$0xff] %vm1437, %v1429
      %1488 = vst.msk [vmem:[#allocation2 + $0x190] sm:$0xff] %vm1437, %v1430
      %1489 = vst.msk [vmem:[#allocation2 + $0x198] sm:$0xff] %vm1437, %v1431
      %1490 = vst.msk [vmem:[#allocation2 + $0x1a0] sm:$0xff] %vm1437, %v1432
      %1491 = vst.msk [vmem:[#allocation2 + $0x1a8] sm:$0xff] %vm1437, %v1433
      %1492 = vst.msk [vmem:[#allocation2 + $0x1b0] sm:$0xff] %vm1437, %v1434
      %1493 = vst.msk [vmem:[#allocation2 + $0x1b8] sm:$0xff] %vm1437, %v1435
      %1494 = vst.msk [vmem:[#allocation2 + $0x1c0] sm:$0xff] %vm1437, %v1436
      %v1495 = vld [vmem:[#allocation2] sm:$0xff]
      %v1496 = vld [vmem:[#allocation2 + $0x8] sm:$0xff]
      %v1497 = vld [vmem:[#allocation2 + $0x10] sm:$0xff]
      %v1498 = vld [vmem:[#allocation2 + $0x18] sm:$0xff]
      %v1499 = vld [vmem:[#allocation2 + $0x20] sm:$0xff]
      %v1500 = vld [vmem:[#allocation2 + $0x28] sm:$0xff]
      %v1501 = vld [vmem:[#allocation2 + $0x30] sm:$0xff]
      %v1502 = vld [vmem:[#allocation2 + $0x38] sm:$0xff]
      %v1503 = vld [vmem:[#allocation2 + $0x40] sm:$0xff]
      %v1504 = vld [vmem:[#allocation2 + $0x48] sm:$0xff]
      %v1505 = vld [vmem:[#allocation2 + $0x50] sm:$0xff]
      %v1506 = vld [vmem:[#allocation2 + $0x58] sm:$0xff]
      %v1507 = vld [vmem:[#allocation2 + $0x60] sm:$0xff]
      %v1508 = vld [vmem:[#allocation2 + $0x68] sm:$0xff]
      %v1509 = vld [vmem:[#allocation2 + $0x70] sm:$0xff]
      %v1510 = vld [vmem:[#allocation2 + $0x78] sm:$0xff]
      %v1511 = vld [vmem:[#allocation2 + $0x80] sm:$0xff]
      %v1512 = vld [vmem:[#allocation2 + $0x88] sm:$0xff]
      %v1513 = vld [vmem:[#allocation2 + $0x90] sm:$0xff]
      %v1514 = vld [vmem:[#allocation2 + $0x98] sm:$0xff]
      %v1515 = vld [vmem:[#allocation2 + $0xa0] sm:$0xff]
      %v1516 = vld [vmem:[#allocation2 + $0xa8] sm:$0xff]
      %v1517 = vld [vmem:[#allocation2 + $0xb0] sm:$0xff]
      %v1518 = vld [vmem:[#allocation2 + $0xb8] sm:$0xff]
      %v1519 = vld [vmem:[#allocation2 + $0xc0] sm:$0xff]
      %v1520 = vld [vmem:[#allocation2 + $0xc8] sm:$0xff]
      %v1521 = vld [vmem:[#allocation2 + $0xd0] sm:$0xff]
      %v1522 = vld [vmem:[#allocation2 + $0xd8] sm:$0xff]
      %v1523 = vld [vmem:[#allocation2 + $0xe0] sm:$0xff]
      %v1524 = vld [vmem:[#allocation2 + $0xe8] sm:$0xff]
      %v1525 = vld [vmem:[#allocation2 + $0xf0] sm:$0xff]
      %v1526 = vld [vmem:[#allocation2 + $0xf8] sm:$0xff]
      %v1527 = vld [vmem:[#allocation2 + $0x100] sm:$0xff]
      %v1528 = vld [vmem:[#allocation2 + $0x108] sm:$0xff]
      %v1529 = vld [vmem:[#allocation2 + $0x110] sm:$0xff]
      %v1530 = vld [vmem:[#allocation2 + $0x118] sm:$0xff]
      %v1531 = vld [vmem:[#allocation2 + $0x120] sm:$0xff]
      %v1532 = vld [vmem:[#allocation2 + $0x128] sm:$0xff]
      %v1533 = vld [vmem:[#allocation2 + $0x130] sm:$0xff]
      %v1534 = vld [vmem:[#allocation2 + $0x138] sm:$0xff]
      %v1535 = vld [vmem:[#allocation2 + $0x140] sm:$0xff]
      %v1536 = vld [vmem:[#allocation2 + $0x148] sm:$0xff]
      %v1537 = vld [vmem:[#allocation2 + $0x150] sm:$0xff]
      %v1538 = vld [vmem:[#allocation2 + $0x158] sm:$0xff]
      %v1539 = vld [vmem:[#allocation2 + $0x160] sm:$0xff]
      %v1540 = vld [vmem:[#allocation2 + $0x168] sm:$0xff]
      %v1541 = vld [vmem:[#allocation2 + $0x170] sm:$0xff]
      %v1542 = vld [vmem:[#allocation2 + $0x178] sm:$0xff]
      %1543 = vst.msk [vmem:[#allocation3] sm:$0xff] %vm1437, %v1495
      %1544 = vst.msk [vmem:[#allocation3 + $0x10] sm:$0xff] %vm1437, %v1496
      %1545 = vst.msk [vmem:[#allocation3 + $0x20] sm:$0xff] %vm1437, %v1497
      %1546 = vst.msk [vmem:[#allocation3 + $0x30] sm:$0xff] %vm1437, %v1498
      %1547 = vst.msk [vmem:[#allocation3 + $0x40] sm:$0xff] %vm1437, %v1499
      %1548 = vst.msk [vmem:[#allocation3 + $0x50] sm:$0xff] %vm1437, %v1500
      %1549 = vst.msk [vmem:[#allocation3 + $0x60] sm:$0xff] %vm1437, %v1501
      %1550 = vst.msk [vmem:[#allocation3 + $0x70] sm:$0xff] %vm1437, %v1502
      %1551 = vst.msk [vmem:[#allocation3 + $0x80] sm:$0xff] %vm1437, %v1503
      %1552 = vst.msk [vmem:[#allocation3 + $0x90] sm:$0xff] %vm1437, %v1504
      %1553 = vst.msk [vmem:[#allocation3 + $0xa0] sm:$0xff] %vm1437, %v1505
      %1554 = vst.msk [vmem:[#allocation3 + $0xb0] sm:$0xff] %vm1437, %v1506
      %1555 = vst.msk [vmem:[#allocation3 + $0xc0] sm:$0xff] %vm1437, %v1507
      %1556 = vst.msk [vmem:[#allocation3 + $0xd0] sm:$0xff] %vm1437, %v1508
      %1557 = vst.msk [vmem:[#allocation3 + $0xe0] sm:$0xff] %vm1437, %v1509
      %1558 = vst.msk [vmem:[#allocation3 + $0xf0] sm:$0xff] %vm1437, %v1510
      %1559 = vst.msk [vmem:[#allocation3 + $0x100] sm:$0xff] %vm1437, %v1511
      %1560 = vst.msk [vmem:[#allocation3 + $0x110] sm:$0xff] %vm1437, %v1512
      %1561 = vst.msk [vmem:[#allocation3 + $0x120] sm:$0xff] %vm1437, %v1513
      %1562 = vst.msk [vmem:[#allocation3 + $0x130] sm:$0xff] %vm1437, %v1514
      %1563 = vst.msk [vmem:[#allocation3 + $0x140] sm:$0xff] %vm1437, %v1515
      %1564 = vst.msk [vmem:[#allocation3 + $0x150] sm:$0xff] %vm1437, %v1516
      %1565 = vst.msk [vmem:[#allocation3 + $0x160] sm:$0xff] %vm1437, %v1517
      %1566 = vst.msk [vmem:[#allocation3 + $0x170] sm:$0xff] %vm1437, %v1518
      %1567 = vst.msk [vmem:[#allocation3 + $0x180] sm:$0xff] %vm1437, %v1519
      %1568 = vst.msk [vmem:[#allocation3 + $0x190] sm:$0xff] %vm1437, %v1520
      %1569 = vst.msk [vmem:[#allocation3 + $0x1a0] sm:$0xff] %vm1437, %v1521
      %1570 = vst.msk [vmem:[#allocation3 + $0x1b0] sm:$0xff] %vm1437, %v1522
      %1571 = vst.msk [vmem:[#allocation3 + $0x1c0] sm:$0xff] %vm1437, %v1523
      %1572 = vst.msk [vmem:[#allocation3 + $0x1d0] sm:$0xff] %vm1437, %v1524
      %1573 = vst.msk [vmem:[#allocation3 + $0x1e0] sm:$0xff] %vm1437, %v1525
      %1574 = vst.msk [vmem:[#allocation3 + $0x1f0] sm:$0xff] %vm1437, %v1526
      %1575 = vst.msk [vmem:[#allocation3 + $0x200] sm:$0xff] %vm1437, %v1527
      %1576 = vst.msk [vmem:[#allocation3 + $0x210] sm:$0xff] %vm1437, %v1528
      %1577 = vst.msk [vmem:[#allocation3 + $0x220] sm:$0xff] %vm1437, %v1529
      %1578 = vst.msk [vmem:[#allocation3 + $0x230] sm:$0xff] %vm1437, %v1530
      %1579 = vst.msk [vmem:[#allocation3 + $0x240] sm:$0xff] %vm1437, %v1531
      %1580 = vst.msk [vmem:[#allocation3 + $0x250] sm:$0xff] %vm1437, %v1532
      %1581 = vst.msk [vmem:[#allocation3 + $0x260] sm:$0xff] %vm1437, %v1533
      %1582 = vst.msk [vmem:[#allocation3 + $0x270] sm:$0xff] %vm1437, %v1534
      %1583 = vst.msk [vmem:[#allocation3 + $0x280] sm:$0xff] %vm1437, %v1535
      %1584 = vst.msk [vmem:[#allocation3 + $0x290] sm:$0xff] %vm1437, %v1536
      %1585 = vst.msk [vmem:[#allocation3 + $0x2a0] sm:$0xff] %vm1437, %v1537
      %1586 = vst.msk [vmem:[#allocation3 + $0x2b0] sm:$0xff] %vm1437, %v1538
      %1587 = vst.msk [vmem:[#allocation3 + $0x2c0] sm:$0xff] %vm1437, %v1539
      %1588 = vst.msk [vmem:[#allocation3 + $0x2d0] sm:$0xff] %vm1437, %v1540
      %1589 = vst.msk [vmem:[#allocation3 + $0x2e0] sm:$0xff] %vm1437, %v1541
      %1590 = vst.msk [vmem:[#allocation3 + $0x2f0] sm:$0xff] %vm1437, %v1542
      %v1591 = vld [vmem:[#allocation2 + $0x1] sm:$0xff]
      %v1592 = vld [vmem:[#allocation2 + $0x9] sm:$0xff]
      %v1593 = vld [vmem:[#allocation2 + $0x11] sm:$0xff]
      %v1594 = vld [vmem:[#allocation2 + $0x19] sm:$0xff]
      %v1595 = vld [vmem:[#allocation2 + $0x21] sm:$0xff]
      %v1596 = vld [vmem:[#allocation2 + $0x29] sm:$0xff]
      %v1597 = vld [vmem:[#allocation2 + $0x31] sm:$0xff]
      %v1598 = vld [vmem:[#allocation2 + $0x39] sm:$0xff]
      %v1599 = vld [vmem:[#allocation2 + $0x41] sm:$0xff]
      %v1600 = vld [vmem:[#allocation2 + $0x49] sm:$0xff]
      %v1601 = vld [vmem:[#allocation2 + $0x51] sm:$0xff]
      %v1602 = vld [vmem:[#allocation2 + $0x59] sm:$0xff]
      %v1603 = vld [vmem:[#allocation2 + $0x61] sm:$0xff]
      %v1604 = vld [vmem:[#allocation2 + $0x69] sm:$0xff]
      %v1605 = vld [vmem:[#allocation2 + $0x71] sm:$0xff]
      %v1606 = vld [vmem:[#allocation2 + $0x79] sm:$0xff]
      %v1607 = vld [vmem:[#allocation2 + $0x81] sm:$0xff]
      %v1608 = vld [vmem:[#allocation2 + $0x89] sm:$0xff]
      %v1609 = vld [vmem:[#allocation2 + $0x91] sm:$0xff]
      %v1610 = vld [vmem:[#allocation2 + $0x99] sm:$0xff]
      %v1611 = vld [vmem:[#allocation2 + $0xa1] sm:$0xff]
      %v1612 = vld [vmem:[#allocation2 + $0xa9] sm:$0xff]
      %v1613 = vld [vmem:[#allocation2 + $0xb1] sm:$0xff]
      %v1614 = vld [vmem:[#allocation2 + $0xb9] sm:$0xff]
      %v1615 = vld [vmem:[#allocation2 + $0xc1] sm:$0xff]
      %v1616 = vld [vmem:[#allocation2 + $0xc9] sm:$0xff]
      %v1617 = vld [vmem:[#allocation2 + $0xd1] sm:$0xff]
      %v1618 = vld [vmem:[#allocation2 + $0xd9] sm:$0xff]
      %v1619 = vld [vmem:[#allocation2 + $0xe1] sm:$0xff]
      %v1620 = vld [vmem:[#allocation2 + $0xe9] sm:$0xff]
      %v1621 = vld [vmem:[#allocation2 + $0xf1] sm:$0xff]
      %v1622 = vld [vmem:[#allocation2 + $0xf9] sm:$0xff]
      %v1623 = vld [vmem:[#allocation2 + $0x101] sm:$0xff]
      %v1624 = vld [vmem:[#allocation2 + $0x109] sm:$0xff]
      %v1625 = vld [vmem:[#allocation2 + $0x111] sm:$0xff]
      %v1626 = vld [vmem:[#allocation2 + $0x119] sm:$0xff]
      %v1627 = vld [vmem:[#allocation2 + $0x121] sm:$0xff]
      %v1628 = vld [vmem:[#allocation2 + $0x129] sm:$0xff]
      %v1629 = vld [vmem:[#allocation2 + $0x131] sm:$0xff]
      %v1630 = vld [vmem:[#allocation2 + $0x139] sm:$0xff]
      %v1631 = vld [vmem:[#allocation2 + $0x141] sm:$0xff]
      %v1632 = vld [vmem:[#allocation2 + $0x149] sm:$0xff]
      %v1633 = vld [vmem:[#allocation2 + $0x151] sm:$0xff]
      %v1634 = vld [vmem:[#allocation2 + $0x159] sm:$0xff]
      %v1635 = vld [vmem:[#allocation2 + $0x161] sm:$0xff]
      %v1636 = vld [vmem:[#allocation2 + $0x169] sm:$0xff]
      %v1637 = vld [vmem:[#allocation2 + $0x171] sm:$0xff]
      %v1638 = vld [vmem:[#allocation2 + $0x179] sm:$0xff]
      %1687 = vrot.lane.b32.xlu0 %v1591, 16
      %v1688 = vpop.permute.xlu0 %1687
      %1689 = vrot.lane.b32.xlu0 %v1592, 16
      %v1690 = vpop.permute.xlu0 %1689
      %1691 = vrot.lane.b32.xlu0 %v1593, 16
      %v1692 = vpop.permute.xlu0 %1691
      %1693 = vrot.lane.b32.xlu0 %v1594, 16
      %v1694 = vpop.permute.xlu0 %1693
      %1695 = vrot.lane.b32.xlu0 %v1595, 16
      %v1696 = vpop.permute.xlu0 %1695
      %1697 = vrot.lane.b32.xlu0 %v1596, 16
      %v1698 = vpop.permute.xlu0 %1697
      %1699 = vrot.lane.b32.xlu0 %v1597, 16
      %v1700 = vpop.permute.xlu0 %1699
      %1701 = vrot.lane.b32.xlu0 %v1598, 16
      %v1702 = vpop.permute.xlu0 %1701
      %1703 = vrot.lane.b32.xlu0 %v1599, 16
      %v1704 = vpop.permute.xlu0 %1703
      %1705 = vrot.lane.b32.xlu0 %v1600, 16
      %v1706 = vpop.permute.xlu0 %1705
      %1707 = vrot.lane.b32.xlu0 %v1601, 16
      %v1708 = vpop.permute.xlu0 %1707
      %1709 = vrot.lane.b32.xlu0 %v1602, 16
      %v1710 = vpop.permute.xlu0 %1709
      %1711 = vrot.lane.b32.xlu0 %v1603, 16
      %v1712 = vpop.permute.xlu0 %1711
      %1713 = vrot.lane.b32.xlu0 %v1604, 16
      %v1714 = vpop.permute.xlu0 %1713
      %1715 = vrot.lane.b32.xlu0 %v1605, 16
      %v1716 = vpop.permute.xlu0 %1715
      %1717 = vrot.lane.b32.xlu0 %v1606, 16
      %v1718 = vpop.permute.xlu0 %1717
      %1719 = vrot.lane.b32.xlu0 %v1607, 16
      %v1720 = vpop.permute.xlu0 %1719
      %1721 = vrot.lane.b32.xlu0 %v1608, 16
      %v1722 = vpop.permute.xlu0 %1721
      %1723 = vrot.lane.b32.xlu0 %v1609, 16
      %v1724 = vpop.permute.xlu0 %1723
      %1725 = vrot.lane.b32.xlu0 %v1610, 16
      %v1726 = vpop.permute.xlu0 %1725
      %1727 = vrot.lane.b32.xlu0 %v1611, 16
      %v1728 = vpop.permute.xlu0 %1727
      %1729 = vrot.lane.b32.xlu0 %v1612, 16
      %v1730 = vpop.permute.xlu0 %1729
      %1731 = vrot.lane.b32.xlu0 %v1613, 16
      %v1732 = vpop.permute.xlu0 %1731
      %1733 = vrot.lane.b32.xlu0 %v1614, 16
      %v1734 = vpop.permute.xlu0 %1733
      %1735 = vrot.lane.b32.xlu0 %v1615, 16
      %v1736 = vpop.permute.xlu0 %1735
      %1737 = vrot.lane.b32.xlu0 %v1616, 16
      %v1738 = vpop.permute.xlu0 %1737
      %1739 = vrot.lane.b32.xlu0 %v1617, 16
      %v1740 = vpop.permute.xlu0 %1739
      %1741 = vrot.lane.b32.xlu0 %v1618, 16
      %v1742 = vpop.permute.xlu0 %1741
      %1743 = vrot.lane.b32.xlu0 %v1619, 16
      %v1744 = vpop.permute.xlu0 %1743
      %1745 = vrot.lane.b32.xlu0 %v1620, 16
      %v1746 = vpop.permute.xlu0 %1745
      %1747 = vrot.lane.b32.xlu0 %v1621, 16
      %v1748 = vpop.permute.xlu0 %1747
      %1749 = vrot.lane.b32.xlu0 %v1622, 16
      %v1750 = vpop.permute.xlu0 %1749
      %1751 = vrot.lane.b32.xlu0 %v1623, 16
      %v1752 = vpop.permute.xlu0 %1751
      %1753 = vrot.lane.b32.xlu0 %v1624, 16
      %v1754 = vpop.permute.xlu0 %1753
      %1755 = vrot.lane.b32.xlu0 %v1625, 16
      %v1756 = vpop.permute.xlu0 %1755
      %1757 = vrot.lane.b32.xlu0 %v1626, 16
      %v1758 = vpop.permute.xlu0 %1757
      %1759 = vrot.lane.b32.xlu0 %v1627, 16
      %v1760 = vpop.permute.xlu0 %1759
      %1761 = vrot.lane.b32.xlu0 %v1628, 16
      %v1762 = vpop.permute.xlu0 %1761
      %1763 = vrot.lane.b32.xlu0 %v1629, 16
      %v1764 = vpop.permute.xlu0 %1763
      %1765 = vrot.lane.b32.xlu0 %v1630, 16
      %v1766 = vpop.permute.xlu0 %1765
      %1767 = vrot.lane.b32.xlu0 %v1631, 16
      %v1768 = vpop.permute.xlu0 %1767
      %1769 = vrot.lane.b32.xlu0 %v1632, 16
      %v1770 = vpop.permute.xlu0 %1769
      %1771 = vrot.lane.b32.xlu0 %v1633, 16
      %v1772 = vpop.permute.xlu0 %1771
      %1773 = vrot.lane.b32.xlu0 %v1634, 16
      %v1774 = vpop.permute.xlu0 %1773
      %1775 = vrot.lane.b32.xlu0 %v1635, 16
      %v1776 = vpop.permute.xlu0 %1775
      %1777 = vrot.lane.b32.xlu0 %v1636, 16
      %v1778 = vpop.permute.xlu0 %1777
      %1779 = vrot.lane.b32.xlu0 %v1637, 16
      %v1780 = vpop.permute.xlu0 %1779
      %1781 = vrot.lane.b32.xlu0 %v1638, 16
      %v1782 = vpop.permute.xlu0 %1781
      %vm1831 = vcmask 261248
      %1832 = vst.msk [vmem:[#allocation3] sm:$0xff] %vm1831, %v1688
      %1833 = vst.msk [vmem:[#allocation3 + $0x10] sm:$0xff] %vm1831, %v1690
      %1834 = vst.msk [vmem:[#allocation3 + $0x20] sm:$0xff] %vm1831, %v1692
      %1835 = vst.msk [vmem:[#allocation3 + $0x30] sm:$0xff] %vm1831, %v1694
      %1836 = vst.msk [vmem:[#allocation3 + $0x40] sm:$0xff] %vm1831, %v1696
      %1837 = vst.msk [vmem:[#allocation3 + $0x50] sm:$0xff] %vm1831, %v1698
      %1838 = vst.msk [vmem:[#allocation3 + $0x60] sm:$0xff] %vm1831, %v1700
      %1839 = vst.msk [vmem:[#allocation3 + $0x70] sm:$0xff] %vm1831, %v1702
      %1840 = vst.msk [vmem:[#allocation3 + $0x80] sm:$0xff] %vm1831, %v1704
      %1841 = vst.msk [vmem:[#allocation3 + $0x90] sm:$0xff] %vm1831, %v1706
      %1842 = vst.msk [vmem:[#allocation3 + $0xa0] sm:$0xff] %vm1831, %v1708
      %1843 = vst.msk [vmem:[#allocation3 + $0xb0] sm:$0xff] %vm1831, %v1710
      %1844 = vst.msk [vmem:[#allocation3 + $0xc0] sm:$0xff] %vm1831, %v1712
      %1845 = vst.msk [vmem:[#allocation3 + $0xd0] sm:$0xff] %vm1831, %v1714
      %1846 = vst.msk [vmem:[#allocation3 + $0xe0] sm:$0xff] %vm1831, %v1716
      %1847 = vst.msk [vmem:[#allocation3 + $0xf0] sm:$0xff] %vm1831, %v1718
      %1848 = vst.msk [vmem:[#allocation3 + $0x100] sm:$0xff] %vm1831, %v1720
      %1849 = vst.msk [vmem:[#allocation3 + $0x110] sm:$0xff] %vm1831, %v1722
      %1850 = vst.msk [vmem:[#allocation3 + $0x120] sm:$0xff] %vm1831, %v1724
      %1851 = vst.msk [vmem:[#allocation3 + $0x130] sm:$0xff] %vm1831, %v1726
      %1852 = vst.msk [vmem:[#allocation3 + $0x140] sm:$0xff] %vm1831, %v1728
      %1853 = vst.msk [vmem:[#allocation3 + $0x150] sm:$0xff] %vm1831, %v1730
      %1854 = vst.msk [vmem:[#allocation3 + $0x160] sm:$0xff] %vm1831, %v1732
      %1855 = vst.msk [vmem:[#allocation3 + $0x170] sm:$0xff] %vm1831, %v1734
      %1856 = vst.msk [vmem:[#allocation3 + $0x180] sm:$0xff] %vm1831, %v1736
      %1857 = vst.msk [vmem:[#allocation3 + $0x190] sm:$0xff] %vm1831, %v1738
      %1858 = vst.msk [vmem:[#allocation3 + $0x1a0] sm:$0xff] %vm1831, %v1740
      %1859 = vst.msk [vmem:[#allocation3 + $0x1b0] sm:$0xff] %vm1831, %v1742
      %1860 = vst.msk [vmem:[#allocation3 + $0x1c0] sm:$0xff] %vm1831, %v1744
      %1861 = vst.msk [vmem:[#allocation3 + $0x1d0] sm:$0xff] %vm1831, %v1746
      %1862 = vst.msk [vmem:[#allocation3 + $0x1e0] sm:$0xff] %vm1831, %v1748
      %1863 = vst.msk [vmem:[#allocation3 + $0x1f0] sm:$0xff] %vm1831, %v1750
      %1864 = vst.msk [vmem:[#allocation3 + $0x200] sm:$0xff] %vm1831, %v1752
      %1865 = vst.msk [vmem:[#allocation3 + $0x210] sm:$0xff] %vm1831, %v1754
      %1866 = vst.msk [vmem:[#allocation3 + $0x220] sm:$0xff] %vm1831, %v1756
      %1867 = vst.msk [vmem:[#allocation3 + $0x230] sm:$0xff] %vm1831, %v1758
      %1868 = vst.msk [vmem:[#allocation3 + $0x240] sm:$0xff] %vm1831, %v1760
      %1869 = vst.msk [vmem:[#allocation3 + $0x250] sm:$0xff] %vm1831, %v1762
      %1870 = vst.msk [vmem:[#allocation3 + $0x260] sm:$0xff] %vm1831, %v1764
      %1871 = vst.msk [vmem:[#allocation3 + $0x270] sm:$0xff] %vm1831, %v1766
      %1872 = vst.msk [vmem:[#allocation3 + $0x280] sm:$0xff] %vm1831, %v1768
      %1873 = vst.msk [vmem:[#allocation3 + $0x290] sm:$0xff] %vm1831, %v1770
      %1874 = vst.msk [vmem:[#allocation3 + $0x2a0] sm:$0xff] %vm1831, %v1772
      %1875 = vst.msk [vmem:[#allocation3 + $0x2b0] sm:$0xff] %vm1831, %v1774
      %1876 = vst.msk [vmem:[#allocation3 + $0x2c0] sm:$0xff] %vm1831, %v1776
      %1877 = vst.msk [vmem:[#allocation3 + $0x2d0] sm:$0xff] %vm1831, %v1778
      %1878 = vst.msk [vmem:[#allocation3 + $0x2e0] sm:$0xff] %vm1831, %v1780
      %1879 = vst.msk [vmem:[#allocation3 + $0x2f0] sm:$0xff] %vm1831, %v1782
      %v1880 = vld [vmem:[#allocation2 + $0x2] sm:$0xff]
      %v1881 = vld [vmem:[#allocation2 + $0xa] sm:$0xff]
      %v1882 = vld [vmem:[#allocation2 + $0x12] sm:$0xff]
      %v1883 = vld [vmem:[#allocation2 + $0x1a] sm:$0xff]
      %v1884 = vld [vmem:[#allocation2 + $0x22] sm:$0xff]
      %v1885 = vld [vmem:[#allocation2 + $0x2a] sm:$0xff]
      %v1886 = vld [vmem:[#allocation2 + $0x32] sm:$0xff]
      %v1887 = vld [vmem:[#allocation2 + $0x3a] sm:$0xff]
      %v1888 = vld [vmem:[#allocation2 + $0x42] sm:$0xff]
      %v1889 = vld [vmem:[#allocation2 + $0x4a] sm:$0xff]
      %v1890 = vld [vmem:[#allocation2 + $0x52] sm:$0xff]
      %v1891 = vld [vmem:[#allocation2 + $0x5a] sm:$0xff]
      %v1892 = vld [vmem:[#allocation2 + $0x62] sm:$0xff]
      %v1893 = vld [vmem:[#allocation2 + $0x6a] sm:$0xff]
      %v1894 = vld [vmem:[#allocation2 + $0x72] sm:$0xff]
      %v1895 = vld [vmem:[#allocation2 + $0x7a] sm:$0xff]
      %v1896 = vld [vmem:[#allocation2 + $0x82] sm:$0xff]
      %v1897 = vld [vmem:[#allocation2 + $0x8a] sm:$0xff]
      %v1898 = vld [vmem:[#allocation2 + $0x92] sm:$0xff]
      %v1899 = vld [vmem:[#allocation2 + $0x9a] sm:$0xff]
      %v1900 = vld [vmem:[#allocation2 + $0xa2] sm:$0xff]
      %v1901 = vld [vmem:[#allocation2 + $0xaa] sm:$0xff]
      %v1902 = vld [vmem:[#allocation2 + $0xb2] sm:$0xff]
      %v1903 = vld [vmem:[#allocation2 + $0xba] sm:$0xff]
      %v1904 = vld [vmem:[#allocation2 + $0xc2] sm:$0xff]
      %v1905 = vld [vmem:[#allocation2 + $0xca] sm:$0xff]
      %v1906 = vld [vmem:[#allocation2 + $0xd2] sm:$0xff]
      %v1907 = vld [vmem:[#allocation2 + $0xda] sm:$0xff]
      %v1908 = vld [vmem:[#allocation2 + $0xe2] sm:$0xff]
      %v1909 = vld [vmem:[#allocation2 + $0xea] sm:$0xff]
      %v1910 = vld [vmem:[#allocation2 + $0xf2] sm:$0xff]
      %v1911 = vld [vmem:[#allocation2 + $0xfa] sm:$0xff]
      %v1912 = vld [vmem:[#allocation2 + $0x102] sm:$0xff]
      %v1913 = vld [vmem:[#allocation2 + $0x10a] sm:$0xff]
      %v1914 = vld [vmem:[#allocation2 + $0x112] sm:$0xff]
      %v1915 = vld [vmem:[#allocation2 + $0x11a] sm:$0xff]
      %v1916 = vld [vmem:[#allocation2 + $0x122] sm:$0xff]
      %v1917 = vld [vmem:[#allocation2 + $0x12a] sm:$0xff]
      %v1918 = vld [vmem:[#allocation2 + $0x132] sm:$0xff]
      %v1919 = vld [vmem:[#allocation2 + $0x13a] sm:$0xff]
      %v1920 = vld [vmem:[#allocation2 + $0x142] sm:$0xff]
      %v1921 = vld [vmem:[#allocation2 + $0x14a] sm:$0xff]
      %v1922 = vld [vmem:[#allocation2 + $0x152] sm:$0xff]
      %v1923 = vld [vmem:[#allocation2 + $0x15a] sm:$0xff]
      %v1924 = vld [vmem:[#allocation2 + $0x162] sm:$0xff]
      %v1925 = vld [vmem:[#allocation2 + $0x16a] sm:$0xff]
      %v1926 = vld [vmem:[#allocation2 + $0x172] sm:$0xff]
      %v1927 = vld [vmem:[#allocation2 + $0x17a] sm:$0xff]
      %1976 = vrot.lane.b32.xlu0 %v1880, 32
      %v1977 = vpop.permute.xlu0 %1976
      %1978 = vrot.lane.b32.xlu0 %v1881, 32
      %v1979 = vpop.permute.xlu0 %1978
      %1980 = vrot.lane.b32.xlu0 %v1882, 32
      %v1981 = vpop.permute.xlu0 %1980
      %1982 = vrot.lane.b32.xlu0 %v1883, 32
      %v1983 = vpop.permute.xlu0 %1982
      %1984 = vrot.lane.b32.xlu0 %v1884, 32
      %v1985 = vpop.permute.xlu0 %1984
      %1986 = vrot.lane.b32.xlu0 %v1885, 32
      %v1987 = vpop.permute.xlu0 %1986
      %1988 = vrot.lane.b32.xlu0 %v1886, 32
      %v1989 = vpop.permute.xlu0 %1988
      %1990 = vrot.lane.b32.xlu0 %v1887, 32
      %v1991 = vpop.permute.xlu0 %1990
      %1992 = vrot.lane.b32.xlu0 %v1888, 32
      %v1993 = vpop.permute.xlu0 %1992
      %1994 = vrot.lane.b32.xlu0 %v1889, 32
      %v1995 = vpop.permute.xlu0 %1994
      %1996 = vrot.lane.b32.xlu0 %v1890, 32
      %v1997 = vpop.permute.xlu0 %1996
      %1998 = vrot.lane.b32.xlu0 %v1891, 32
      %v1999 = vpop.permute.xlu0 %1998
      %2000 = vrot.lane.b32.xlu0 %v1892, 32
      %v2001 = vpop.permute.xlu0 %2000
      %2002 = vrot.lane.b32.xlu0 %v1893, 32
      %v2003 = vpop.permute.xlu0 %2002
      %2004 = vrot.lane.b32.xlu0 %v1894, 32
      %v2005 = vpop.permute.xlu0 %2004
      %2006 = vrot.lane.b32.xlu0 %v1895, 32
      %v2007 = vpop.permute.xlu0 %2006
      %2008 = vrot.lane.b32.xlu0 %v1896, 32
      %v2009 = vpop.permute.xlu0 %2008
      %2010 = vrot.lane.b32.xlu0 %v1897, 32
      %v2011 = vpop.permute.xlu0 %2010
      %2012 = vrot.lane.b32.xlu0 %v1898, 32
      %v2013 = vpop.permute.xlu0 %2012
      %2014 = vrot.lane.b32.xlu0 %v1899, 32
      %v2015 = vpop.permute.xlu0 %2014
      %2016 = vrot.lane.b32.xlu0 %v1900, 32
      %v2017 = vpop.permute.xlu0 %2016
      %2018 = vrot.lane.b32.xlu0 %v1901, 32
      %v2019 = vpop.permute.xlu0 %2018
      %2020 = vrot.lane.b32.xlu0 %v1902, 32
      %v2021 = vpop.permute.xlu0 %2020
      %2022 = vrot.lane.b32.xlu0 %v1903, 32
      %v2023 = vpop.permute.xlu0 %2022
      %2024 = vrot.lane.b32.xlu0 %v1904, 32
      %v2025 = vpop.permute.xlu0 %2024
      %2026 = vrot.lane.b32.xlu0 %v1905, 32
      %v2027 = vpop.permute.xlu0 %2026
      %2028 = vrot.lane.b32.xlu0 %v1906, 32
      %v2029 = vpop.permute.xlu0 %2028
      %2030 = vrot.lane.b32.xlu0 %v1907, 32
      %v2031 = vpop.permute.xlu0 %2030
      %2032 = vrot.lane.b32.xlu0 %v1908, 32
      %v2033 = vpop.permute.xlu0 %2032
      %2034 = vrot.lane.b32.xlu0 %v1909, 32
      %v2035 = vpop.permute.xlu0 %2034
      %2036 = vrot.lane.b32.xlu0 %v1910, 32
      %v2037 = vpop.permute.xlu0 %2036
      %2038 = vrot.lane.b32.xlu0 %v1911, 32
      %v2039 = vpop.permute.xlu0 %2038
      %2040 = vrot.lane.b32.xlu0 %v1912, 32
      %v2041 = vpop.permute.xlu0 %2040
      %2042 = vrot.lane.b32.xlu0 %v1913, 32
      %v2043 = vpop.permute.xlu0 %2042
      %2044 = vrot.lane.b32.xlu0 %v1914, 32
      %v2045 = vpop.permute.xlu0 %2044
      %2046 = vrot.lane.b32.xlu0 %v1915, 32
      %v2047 = vpop.permute.xlu0 %2046
      %2048 = vrot.lane.b32.xlu0 %v1916, 32
      %v2049 = vpop.permute.xlu0 %2048
      %2050 = vrot.lane.b32.xlu0 %v1917, 32
      %v2051 = vpop.permute.xlu0 %2050
      %2052 = vrot.lane.b32.xlu0 %v1918, 32
      %v2053 = vpop.permute.xlu0 %2052
      %2054 = vrot.lane.b32.xlu0 %v1919, 32
      %v2055 = vpop.permute.xlu0 %2054
      %2056 = vrot.lane.b32.xlu0 %v1920, 32
      %v2057 = vpop.permute.xlu0 %2056
      %2058 = vrot.lane.b32.xlu0 %v1921, 32
      %v2059 = vpop.permute.xlu0 %2058
      %2060 = vrot.lane.b32.xlu0 %v1922, 32
      %v2061 = vpop.permute.xlu0 %2060
      %2062 = vrot.lane.b32.xlu0 %v1923, 32
      %v2063 = vpop.permute.xlu0 %2062
      %2064 = vrot.lane.b32.xlu0 %v1924, 32
      %v2065 = vpop.permute.xlu0 %2064
      %2066 = vrot.lane.b32.xlu0 %v1925, 32
      %v2067 = vpop.permute.xlu0 %2066
      %2068 = vrot.lane.b32.xlu0 %v1926, 32
      %v2069 = vpop.permute.xlu0 %2068
      %2070 = vrot.lane.b32.xlu0 %v1927, 32
      %v2071 = vpop.permute.xlu0 %2070
      %vm2120 = vcmask 392448
      %2121 = vst.msk [vmem:[#allocation3] sm:$0xff] %vm2120, %v1977
      %2122 = vst.msk [vmem:[#allocation3 + $0x10] sm:$0xff] %vm2120, %v1979
      %2123 = vst.msk [vmem:[#allocation3 + $0x20] sm:$0xff] %vm2120, %v1981
      %2124 = vst.msk [vmem:[#allocation3 + $0x30] sm:$0xff] %vm2120, %v1983
      %2125 = vst.msk [vmem:[#allocation3 + $0x40] sm:$0xff] %vm2120, %v1985
      %2126 = vst.msk [vmem:[#allocation3 + $0x50] sm:$0xff] %vm2120, %v1987
      %2127 = vst.msk [vmem:[#allocation3 + $0x60] sm:$0xff] %vm2120, %v1989
      %2128 = vst.msk [vmem:[#allocation3 + $0x70] sm:$0xff] %vm2120, %v1991
      %2129 = vst.msk [vmem:[#allocation3 + $0x80] sm:$0xff] %vm2120, %v1993
      %2130 = vst.msk [vmem:[#allocation3 + $0x90] sm:$0xff] %vm2120, %v1995
      %2131 = vst.msk [vmem:[#allocation3 + $0xa0] sm:$0xff] %vm2120, %v1997
      %2132 = vst.msk [vmem:[#allocation3 + $0xb0] sm:$0xff] %vm2120, %v1999
      %2133 = vst.msk [vmem:[#allocation3 + $0xc0] sm:$0xff] %vm2120, %v2001
      %2134 = vst.msk [vmem:[#allocation3 + $0xd0] sm:$0xff] %vm2120, %v2003
      %2135 = vst.msk [vmem:[#allocation3 + $0xe0] sm:$0xff] %vm2120, %v2005
      %2136 = vst.msk [vmem:[#allocation3 + $0xf0] sm:$0xff] %vm2120, %v2007
      %2137 = vst.msk [vmem:[#allocation3 + $0x100] sm:$0xff] %vm2120, %v2009
      %2138 = vst.msk [vmem:[#allocation3 + $0x110] sm:$0xff] %vm2120, %v2011
      %2139 = vst.msk [vmem:[#allocation3 + $0x120] sm:$0xff] %vm2120, %v2013
      %2140 = vst.msk [vmem:[#allocation3 + $0x130] sm:$0xff] %vm2120, %v2015
      %2141 = vst.msk [vmem:[#allocation3 + $0x140] sm:$0xff] %vm2120, %v2017
      %2142 = vst.msk [vmem:[#allocation3 + $0x150] sm:$0xff] %vm2120, %v2019
      %2143 = vst.msk [vmem:[#allocation3 + $0x160] sm:$0xff] %vm2120, %v2021
      %2144 = vst.msk [vmem:[#allocation3 + $0x170] sm:$0xff] %vm2120, %v2023
      %2145 = vst.msk [vmem:[#allocation3 + $0x180] sm:$0xff] %vm2120, %v2025
      %2146 = vst.msk [vmem:[#allocation3 + $0x190] sm:$0xff] %vm2120, %v2027
      %2147 = vst.msk [vmem:[#allocation3 + $0x1a0] sm:$0xff] %vm2120, %v2029
      %2148 = vst.msk [vmem:[#allocation3 + $0x1b0] sm:$0xff] %vm2120, %v2031
      %2149 = vst.msk [vmem:[#allocation3 + $0x1c0] sm:$0xff] %vm2120, %v2033
      %2150 = vst.msk [vmem:[#allocation3 + $0x1d0] sm:$0xff] %vm2120, %v2035
      %2151 = vst.msk [vmem:[#allocation3 + $0x1e0] sm:$0xff] %vm2120, %v2037
      %2152 = vst.msk [vmem:[#allocation3 + $0x1f0] sm:$0xff] %vm2120, %v2039
      %2153 = vst.msk [vmem:[#allocation3 + $0x200] sm:$0xff] %vm2120, %v2041
      %2154 = vst.msk [vmem:[#allocation3 + $0x210] sm:$0xff] %vm2120, %v2043
      %2155 = vst.msk [vmem:[#allocation3 + $0x220] sm:$0xff] %vm2120, %v2045
      %2156 = vst.msk [vmem:[#allocation3 + $0x230] sm:$0xff] %vm2120, %v2047
      %2157 = vst.msk [vmem:[#allocation3 + $0x240] sm:$0xff] %vm2120, %v2049
      %2158 = vst.msk [vmem:[#allocation3 + $0x250] sm:$0xff] %vm2120, %v2051
      %2159 = vst.msk [vmem:[#allocation3 + $0x260] sm:$0xff] %vm2120, %v2053
      %2160 = vst.msk [vmem:[#allocation3 + $0x270] sm:$0xff] %vm2120, %v2055
      %2161 = vst.msk [vmem:[#allocation3 + $0x280] sm:$0xff] %vm2120, %v2057
      %2162 = vst.msk [vmem:[#allocation3 + $0x290] sm:$0xff] %vm2120, %v2059
      %2163 = vst.msk [vmem:[#allocation3 + $0x2a0] sm:$0xff] %vm2120, %v2061
      %2164 = vst.msk [vmem:[#allocation3 + $0x2b0] sm:$0xff] %vm2120, %v2063
      %2165 = vst.msk [vmem:[#allocation3 + $0x2c0] sm:$0xff] %vm2120, %v2065
      %2166 = vst.msk [vmem:[#allocation3 + $0x2d0] sm:$0xff] %vm2120, %v2067
      %2167 = vst.msk [vmem:[#allocation3 + $0x2e0] sm:$0xff] %vm2120, %v2069
      %2168 = vst.msk [vmem:[#allocation3 + $0x2f0] sm:$0xff] %vm2120, %v2071
      %v2169 = vld [vmem:[#allocation2 + $0x18] sm:$0xff]
      %v2170 = vld [vmem:[#allocation2 + $0x20] sm:$0xff]
      %v2171 = vld [vmem:[#allocation2 + $0x28] sm:$0xff]
      %v2172 = vld [vmem:[#allocation2 + $0x30] sm:$0xff]
      %v2173 = vld [vmem:[#allocation2 + $0x38] sm:$0xff]
      %v2174 = vld [vmem:[#allocation2 + $0x40] sm:$0xff]
      %v2175 = vld [vmem:[#allocation2 + $0x48] sm:$0xff]
      %v2176 = vld [vmem:[#allocation2 + $0x50] sm:$0xff]
      %v2177 = vld [vmem:[#allocation2 + $0x58] sm:$0xff]
      %v2178 = vld [vmem:[#allocation2 + $0x60] sm:$0xff]
      %v2179 = vld [vmem:[#allocation2 + $0x68] sm:$0xff]
      %v2180 = vld [vmem:[#allocation2 + $0x70] sm:$0xff]
      %v2181 = vld [vmem:[#allocation2 + $0x78] sm:$0xff]
      %v2182 = vld [vmem:[#allocation2 + $0x80] sm:$0xff]
      %v2183 = vld [vmem:[#allocation2 + $0x88] sm:$0xff]
      %v2184 = vld [vmem:[#allocation2 + $0x90] sm:$0xff]
      %v2185 = vld [vmem:[#allocation2 + $0x98] sm:$0xff]
      %v2186 = vld [vmem:[#allocation2 + $0xa0] sm:$0xff]
      %v2187 = vld [vmem:[#allocation2 + $0xa8] sm:$0xff]
      %v2188 = vld [vmem:[#allocation2 + $0xb0] sm:$0xff]
      %v2189 = vld [vmem:[#allocation2 + $0xb8] sm:$0xff]
      %v2190 = vld [vmem:[#allocation2 + $0xc0] sm:$0xff]
      %v2191 = vld [vmem:[#allocation2 + $0xc8] sm:$0xff]
      %v2192 = vld [vmem:[#allocation2 + $0xd0] sm:$0xff]
      %v2193 = vld [vmem:[#allocation2 + $0xd8] sm:$0xff]
      %v2194 = vld [vmem:[#allocation2 + $0xe0] sm:$0xff]
      %v2195 = vld [vmem:[#allocation2 + $0xe8] sm:$0xff]
      %v2196 = vld [vmem:[#allocation2 + $0xf0] sm:$0xff]
      %v2197 = vld [vmem:[#allocation2 + $0xf8] sm:$0xff]
      %v2198 = vld [vmem:[#allocation2 + $0x100] sm:$0xff]
      %v2199 = vld [vmem:[#allocation2 + $0x108] sm:$0xff]
      %v2200 = vld [vmem:[#allocation2 + $0x110] sm:$0xff]
      %v2201 = vld [vmem:[#allocation2 + $0x118] sm:$0xff]
      %v2202 = vld [vmem:[#allocation2 + $0x120] sm:$0xff]
      %v2203 = vld [vmem:[#allocation2 + $0x128] sm:$0xff]
      %v2204 = vld [vmem:[#allocation2 + $0x130] sm:$0xff]
      %v2205 = vld [vmem:[#allocation2 + $0x138] sm:$0xff]
      %v2206 = vld [vmem:[#allocation2 + $0x140] sm:$0xff]
      %v2207 = vld [vmem:[#allocation2 + $0x148] sm:$0xff]
      %v2208 = vld [vmem:[#allocation2 + $0x150] sm:$0xff]
      %v2209 = vld [vmem:[#allocation2 + $0x158] sm:$0xff]
      %v2210 = vld [vmem:[#allocation2 + $0x160] sm:$0xff]
      %v2211 = vld [vmem:[#allocation2 + $0x168] sm:$0xff]
      %v2212 = vld [vmem:[#allocation2 + $0x170] sm:$0xff]
      %v2213 = vld [vmem:[#allocation2 + $0x178] sm:$0xff]
      %v2214 = vld [vmem:[#allocation2 + $0x180] sm:$0xff]
      %v2215 = vld [vmem:[#allocation2 + $0x188] sm:$0xff]
      %v2216 = vld [vmem:[#allocation2 + $0x190] sm:$0xff]
      %2265 = vrot.lane.b32.xlu0 %v2169, 48
      %v2266 = vpop.permute.xlu0 %2265
      %2267 = vrot.lane.b32.xlu0 %v2170, 48
      %v2268 = vpop.permute.xlu0 %2267
      %2269 = vrot.lane.b32.xlu0 %v2171, 48
      %v2270 = vpop.permute.xlu0 %2269
      %2271 = vrot.lane.b32.xlu0 %v2172, 48
      %v2272 = vpop.permute.xlu0 %2271
      %2273 = vrot.lane.b32.xlu0 %v2173, 48
      %v2274 = vpop.permute.xlu0 %2273
      %2275 = vrot.lane.b32.xlu0 %v2174, 48
      %v2276 = vpop.permute.xlu0 %2275
      %2277 = vrot.lane.b32.xlu0 %v2175, 48
      %v2278 = vpop.permute.xlu0 %2277
      %2279 = vrot.lane.b32.xlu0 %v2176, 48
      %v2280 = vpop.permute.xlu0 %2279
      %2281 = vrot.lane.b32.xlu0 %v2177, 48
      %v2282 = vpop.permute.xlu0 %2281
      %2283 = vrot.lane.b32.xlu0 %v2178, 48
      %v2284 = vpop.permute.xlu0 %2283
      %2285 = vrot.lane.b32.xlu0 %v2179, 48
      %v2286 = vpop.permute.xlu0 %2285
      %2287 = vrot.lane.b32.xlu0 %v2180, 48
      %v2288 = vpop.permute.xlu0 %2287
      %2289 = vrot.lane.b32.xlu0 %v2181, 48
      %v2290 = vpop.permute.xlu0 %2289
      %2291 = vrot.lane.b32.xlu0 %v2182, 48
      %v2292 = vpop.permute.xlu0 %2291
      %2293 = vrot.lane.b32.xlu0 %v2183, 48
      %v2294 = vpop.permute.xlu0 %2293
      %2295 = vrot.lane.b32.xlu0 %v2184, 48
      %v2296 = vpop.permute.xlu0 %2295
      %2297 = vrot.lane.b32.xlu0 %v2185, 48
      %v2298 = vpop.permute.xlu0 %2297
      %2299 = vrot.lane.b32.xlu0 %v2186, 48
      %v2300 = vpop.permute.xlu0 %2299
      %2301 = vrot.lane.b32.xlu0 %v2187, 48
      %v2302 = vpop.permute.xlu0 %2301
      %2303 = vrot.lane.b32.xlu0 %v2188, 48
      %v2304 = vpop.permute.xlu0 %2303
      %2305 = vrot.lane.b32.xlu0 %v2189, 48
      %v2306 = vpop.permute.xlu0 %2305
      %2307 = vrot.lane.b32.xlu0 %v2190, 48
      %v2308 = vpop.permute.xlu0 %2307
      %2309 = vrot.lane.b32.xlu0 %v2191, 48
      %v2310 = vpop.permute.xlu0 %2309
      %2311 = vrot.lane.b32.xlu0 %v2192, 48
      %v2312 = vpop.permute.xlu0 %2311
      %2313 = vrot.lane.b32.xlu0 %v2193, 48
      %v2314 = vpop.permute.xlu0 %2313
      %2315 = vrot.lane.b32.xlu0 %v2194, 48
      %v2316 = vpop.permute.xlu0 %2315
      %2317 = vrot.lane.b32.xlu0 %v2195, 48
      %v2318 = vpop.permute.xlu0 %2317
      %2319 = vrot.lane.b32.xlu0 %v2196, 48
      %v2320 = vpop.permute.xlu0 %2319
      %2321 = vrot.lane.b32.xlu0 %v2197, 48
      %v2322 = vpop.permute.xlu0 %2321
      %2323 = vrot.lane.b32.xlu0 %v2198, 48
      %v2324 = vpop.permute.xlu0 %2323
      %2325 = vrot.lane.b32.xlu0 %v2199, 48
      %v2326 = vpop.permute.xlu0 %2325
      %2327 = vrot.lane.b32.xlu0 %v2200, 48
      %v2328 = vpop.permute.xlu0 %2327
      %2329 = vrot.lane.b32.xlu0 %v2201, 48
      %v2330 = vpop.permute.xlu0 %2329
      %2331 = vrot.lane.b32.xlu0 %v2202, 48
      %v2332 = vpop.permute.xlu0 %2331
      %2333 = vrot.lane.b32.xlu0 %v2203, 48
      %v2334 = vpop.permute.xlu0 %2333
      %2335 = vrot.lane.b32.xlu0 %v2204, 48
      %v2336 = vpop.permute.xlu0 %2335
      %2337 = vrot.lane.b32.xlu0 %v2205, 48
      %v2338 = vpop.permute.xlu0 %2337
      %2339 = vrot.lane.b32.xlu0 %v2206, 48
      %v2340 = vpop.permute.xlu0 %2339
      %2341 = vrot.lane.b32.xlu0 %v2207, 48
      %v2342 = vpop.permute.xlu0 %2341
      %2343 = vrot.lane.b32.xlu0 %v2208, 48
      %v2344 = vpop.permute.xlu0 %2343
      %2345 = vrot.lane.b32.xlu0 %v2209, 48
      %v2346 = vpop.permute.xlu0 %2345
      %2347 = vrot.lane.b32.xlu0 %v2210, 48
      %v2348 = vpop.permute.xlu0 %2347
      %2349 = vrot.lane.b32.xlu0 %v2211, 48
      %v2350 = vpop.permute.xlu0 %2349
      %2351 = vrot.lane.b32.xlu0 %v2212, 48
      %v2352 = vpop.permute.xlu0 %2351
      %2353 = vrot.lane.b32.xlu0 %v2213, 48
      %v2354 = vpop.permute.xlu0 %2353
      %2355 = vrot.lane.b32.xlu0 %v2214, 48
      %v2356 = vpop.permute.xlu0 %2355
      %2357 = vrot.lane.b32.xlu0 %v2215, 48
      %v2358 = vpop.permute.xlu0 %2357
      %2359 = vrot.lane.b32.xlu0 %v2216, 48
      %v2360 = vpop.permute.xlu0 %2359
      %vm2409 = vcmask 523648
      %2410 = vst.msk [vmem:[#allocation3] sm:$0xff] %vm2409, %v2266
      %2411 = vst.msk [vmem:[#allocation3 + $0x10] sm:$0xff] %vm2409, %v2268
      %2412 = vst.msk [vmem:[#allocation3 + $0x20] sm:$0xff] %vm2409, %v2270
      %2413 = vst.msk [vmem:[#allocation3 + $0x30] sm:$0xff] %vm2409, %v2272
      %2414 = vst.msk [vmem:[#allocation3 + $0x40] sm:$0xff] %vm2409, %v2274
      %2415 = vst.msk [vmem:[#allocation3 + $0x50] sm:$0xff] %vm2409, %v2276
      %2416 = vst.msk [vmem:[#allocation3 + $0x60] sm:$0xff] %vm2409, %v2278
      %2417 = vst.msk [vmem:[#allocation3 + $0x70] sm:$0xff] %vm2409, %v2280
      %2418 = vst.msk [vmem:[#allocation3 + $0x80] sm:$0xff] %vm2409, %v2282
      %2419 = vst.msk [vmem:[#allocation3 + $0x90] sm:$0xff] %vm2409, %v2284
      %2420 = vst.msk [vmem:[#allocation3 + $0xa0] sm:$0xff] %vm2409, %v2286
      %2421 = vst.msk [vmem:[#allocation3 + $0xb0] sm:$0xff] %vm2409, %v2288
      %2422 = vst.msk [vmem:[#allocation3 + $0xc0] sm:$0xff] %vm2409, %v2290
      %2423 = vst.msk [vmem:[#allocation3 + $0xd0] sm:$0xff] %vm2409, %v2292
      %2424 = vst.msk [vmem:[#allocation3 + $0xe0] sm:$0xff] %vm2409, %v2294
      %2425 = vst.msk [vmem:[#allocation3 + $0xf0] sm:$0xff] %vm2409, %v2296
      %2426 = vst.msk [vmem:[#allocation3 + $0x100] sm:$0xff] %vm2409, %v2298
      %2427 = vst.msk [vmem:[#allocation3 + $0x110] sm:$0xff] %vm2409, %v2300
      %2428 = vst.msk [vmem:[#allocation3 + $0x120] sm:$0xff] %vm2409, %v2302
      %2429 = vst.msk [vmem:[#allocation3 + $0x130] sm:$0xff] %vm2409, %v2304
      %2430 = vst.msk [vmem:[#allocation3 + $0x140] sm:$0xff] %vm2409, %v2306
      %2431 = vst.msk [vmem:[#allocation3 + $0x150] sm:$0xff] %vm2409, %v2308
      %2432 = vst.msk [vmem:[#allocation3 + $0x160] sm:$0xff] %vm2409, %v2310
      %2433 = vst.msk [vmem:[#allocation3 + $0x170] sm:$0xff] %vm2409, %v2312
      %2434 = vst.msk [vmem:[#allocation3 + $0x180] sm:$0xff] %vm2409, %v2314
      %2435 = vst.msk [vmem:[#allocation3 + $0x190] sm:$0xff] %vm2409, %v2316
      %2436 = vst.msk [vmem:[#allocation3 + $0x1a0] sm:$0xff] %vm2409, %v2318
      %2437 = vst.msk [vmem:[#allocation3 + $0x1b0] sm:$0xff] %vm2409, %v2320
      %2438 = vst.msk [vmem:[#allocation3 + $0x1c0] sm:$0xff] %vm2409, %v2322
      %2439 = vst.msk [vmem:[#allocation3 + $0x1d0] sm:$0xff] %vm2409, %v2324
      %2440 = vst.msk [vmem:[#allocation3 + $0x1e0] sm:$0xff] %vm2409, %v2326
      %2441 = vst.msk [vmem:[#allocation3 + $0x1f0] sm:$0xff] %vm2409, %v2328
      %2442 = vst.msk [vmem:[#allocation3 + $0x200] sm:$0xff] %vm2409, %v2330
      %2443 = vst.msk [vmem:[#allocation3 + $0x210] sm:$0xff] %vm2409, %v2332
      %2444 = vst.msk [vmem:[#allocation3 + $0x220] sm:$0xff] %vm2409, %v2334
      %2445 = vst.msk [vmem:[#allocation3 + $0x230] sm:$0xff] %vm2409, %v2336
      %2446 = vst.msk [vmem:[#allocation3 + $0x240] sm:$0xff] %vm2409, %v2338
      %2447 = vst.msk [vmem:[#allocation3 + $0x250] sm:$0xff] %vm2409, %v2340
      %2448 = vst.msk [vmem:[#allocation3 + $0x260] sm:$0xff] %vm2409, %v2342
      %2449 = vst.msk [vmem:[#allocation3 + $0x270] sm:$0xff] %vm2409, %v2344
      %2450 = vst.msk [vmem:[#allocation3 + $0x280] sm:$0xff] %vm2409, %v2346
      %2451 = vst.msk [vmem:[#allocation3 + $0x290] sm:$0xff] %vm2409, %v2348
      %2452 = vst.msk [vmem:[#allocation3 + $0x2a0] sm:$0xff] %vm2409, %v2350
      %2453 = vst.msk [vmem:[#allocation3 + $0x2b0] sm:$0xff] %vm2409, %v2352
      %2454 = vst.msk [vmem:[#allocation3 + $0x2c0] sm:$0xff] %vm2409, %v2354
      %2455 = vst.msk [vmem:[#allocation3 + $0x2d0] sm:$0xff] %vm2409, %v2356
      %2456 = vst.msk [vmem:[#allocation3 + $0x2e0] sm:$0xff] %vm2409, %v2358
      %2457 = vst.msk [vmem:[#allocation3 + $0x2f0] sm:$0xff] %vm2409, %v2360
      %v2458 = vld [vmem:[#allocation2 + $0x19] sm:$0xff]
      %v2459 = vld [vmem:[#allocation2 + $0x21] sm:$0xff]
      %v2460 = vld [vmem:[#allocation2 + $0x29] sm:$0xff]
      %v2461 = vld [vmem:[#allocation2 + $0x31] sm:$0xff]
      %v2462 = vld [vmem:[#allocation2 + $0x39] sm:$0xff]
      %v2463 = vld [vmem:[#allocation2 + $0x41] sm:$0xff]
      %v2464 = vld [vmem:[#allocation2 + $0x49] sm:$0xff]
      %v2465 = vld [vmem:[#allocation2 + $0x51] sm:$0xff]
      %v2466 = vld [vmem:[#allocation2 + $0x59] sm:$0xff]
      %v2467 = vld [vmem:[#allocation2 + $0x61] sm:$0xff]
      %v2468 = vld [vmem:[#allocation2 + $0x69] sm:$0xff]
      %v2469 = vld [vmem:[#allocation2 + $0x71] sm:$0xff]
      %v2470 = vld [vmem:[#allocation2 + $0x79] sm:$0xff]
      %v2471 = vld [vmem:[#allocation2 + $0x81] sm:$0xff]
      %v2472 = vld [vmem:[#allocation2 + $0x89] sm:$0xff]
      %v2473 = vld [vmem:[#allocation2 + $0x91] sm:$0xff]
      %v2474 = vld [vmem:[#allocation2 + $0x99] sm:$0xff]
      %v2475 = vld [vmem:[#allocation2 + $0xa1] sm:$0xff]
      %v2476 = vld [vmem:[#allocation2 + $0xa9] sm:$0xff]
      %v2477 = vld [vmem:[#allocation2 + $0xb1] sm:$0xff]
      %v2478 = vld [vmem:[#allocation2 + $0xb9] sm:$0xff]
      %v2479 = vld [vmem:[#allocation2 + $0xc1] sm:$0xff]
      %v2480 = vld [vmem:[#allocation2 + $0xc9] sm:$0xff]
      %v2481 = vld [vmem:[#allocation2 + $0xd1] sm:$0xff]
      %v2482 = vld [vmem:[#allocation2 + $0xd9] sm:$0xff]
      %v2483 = vld [vmem:[#allocation2 + $0xe1] sm:$0xff]
      %v2484 = vld [vmem:[#allocation2 + $0xe9] sm:$0xff]
      %v2485 = vld [vmem:[#allocation2 + $0xf1] sm:$0xff]
      %v2486 = vld [vmem:[#allocation2 + $0xf9] sm:$0xff]
      %v2487 = vld [vmem:[#allocation2 + $0x101] sm:$0xff]
      %v2488 = vld [vmem:[#allocation2 + $0x109] sm:$0xff]
      %v2489 = vld [vmem:[#allocation2 + $0x111] sm:$0xff]
      %v2490 = vld [vmem:[#allocation2 + $0x119] sm:$0xff]
      %v2491 = vld [vmem:[#allocation2 + $0x121] sm:$0xff]
      %v2492 = vld [vmem:[#allocation2 + $0x129] sm:$0xff]
      %v2493 = vld [vmem:[#allocation2 + $0x131] sm:$0xff]
      %v2494 = vld [vmem:[#allocation2 + $0x139] sm:$0xff]
      %v2495 = vld [vmem:[#allocation2 + $0x141] sm:$0xff]
      %v2496 = vld [vmem:[#allocation2 + $0x149] sm:$0xff]
      %v2497 = vld [vmem:[#allocation2 + $0x151] sm:$0xff]
      %v2498 = vld [vmem:[#allocation2 + $0x159] sm:$0xff]
      %v2499 = vld [vmem:[#allocation2 + $0x161] sm:$0xff]
      %v2500 = vld [vmem:[#allocation2 + $0x169] sm:$0xff]
      %v2501 = vld [vmem:[#allocation2 + $0x171] sm:$0xff]
      %v2502 = vld [vmem:[#allocation2 + $0x179] sm:$0xff]
      %v2503 = vld [vmem:[#allocation2 + $0x181] sm:$0xff]
      %v2504 = vld [vmem:[#allocation2 + $0x189] sm:$0xff]
      %v2505 = vld [vmem:[#allocation2 + $0x191] sm:$0xff]
      %2554 = vrot.lane.b32.xlu0 %v2458, 64
      %v2555 = vpop.permute.xlu0 %2554
      %2556 = vrot.lane.b32.xlu0 %v2459, 64
      %v2557 = vpop.permute.xlu0 %2556
      %2558 = vrot.lane.b32.xlu0 %v2460, 64
      %v2559 = vpop.permute.xlu0 %2558
      %2560 = vrot.lane.b32.xlu0 %v2461, 64
      %v2561 = vpop.permute.xlu0 %2560
      %2562 = vrot.lane.b32.xlu0 %v2462, 64
      %v2563 = vpop.permute.xlu0 %2562
      %2564 = vrot.lane.b32.xlu0 %v2463, 64
      %v2565 = vpop.permute.xlu0 %2564
      %2566 = vrot.lane.b32.xlu0 %v2464, 64
      %v2567 = vpop.permute.xlu0 %2566
      %2568 = vrot.lane.b32.xlu0 %v2465, 64
      %v2569 = vpop.permute.xlu0 %2568
      %2570 = vrot.lane.b32.xlu0 %v2466, 64
      %v2571 = vpop.permute.xlu0 %2570
      %2572 = vrot.lane.b32.xlu0 %v2467, 64
      %v2573 = vpop.permute.xlu0 %2572
      %2574 = vrot.lane.b32.xlu0 %v2468, 64
      %v2575 = vpop.permute.xlu0 %2574
      %2576 = vrot.lane.b32.xlu0 %v2469, 64
      %v2577 = vpop.permute.xlu0 %2576
      %2578 = vrot.lane.b32.xlu0 %v2470, 64
      %v2579 = vpop.permute.xlu0 %2578
      %2580 = vrot.lane.b32.xlu0 %v2471, 64
      %v2581 = vpop.permute.xlu0 %2580
      %2582 = vrot.lane.b32.xlu0 %v2472, 64
      %v2583 = vpop.permute.xlu0 %2582
      %2584 = vrot.lane.b32.xlu0 %v2473, 64
      %v2585 = vpop.permute.xlu0 %2584
      %2586 = vrot.lane.b32.xlu0 %v2474, 64
      %v2587 = vpop.permute.xlu0 %2586
      %2588 = vrot.lane.b32.xlu0 %v2475, 64
      %v2589 = vpop.permute.xlu0 %2588
      %2590 = vrot.lane.b32.xlu0 %v2476, 64
      %v2591 = vpop.permute.xlu0 %2590
      %2592 = vrot.lane.b32.xlu0 %v2477, 64
      %v2593 = vpop.permute.xlu0 %2592
      %2594 = vrot.lane.b32.xlu0 %v2478, 64
      %v2595 = vpop.permute.xlu0 %2594
      %2596 = vrot.lane.b32.xlu0 %v2479, 64
      %v2597 = vpop.permute.xlu0 %2596
      %2598 = vrot.lane.b32.xlu0 %v2480, 64
      %v2599 = vpop.permute.xlu0 %2598
      %2600 = vrot.lane.b32.xlu0 %v2481, 64
      %v2601 = vpop.permute.xlu0 %2600
      %2602 = vrot.lane.b32.xlu0 %v2482, 64
      %v2603 = vpop.permute.xlu0 %2602
      %2604 = vrot.lane.b32.xlu0 %v2483, 64
      %v2605 = vpop.permute.xlu0 %2604
      %2606 = vrot.lane.b32.xlu0 %v2484, 64
      %v2607 = vpop.permute.xlu0 %2606
      %2608 = vrot.lane.b32.xlu0 %v2485, 64
      %v2609 = vpop.permute.xlu0 %2608
      %2610 = vrot.lane.b32.xlu0 %v2486, 64
      %v2611 = vpop.permute.xlu0 %2610
      %2612 = vrot.lane.b32.xlu0 %v2487, 64
      %v2613 = vpop.permute.xlu0 %2612
      %2614 = vrot.lane.b32.xlu0 %v2488, 64
      %v2615 = vpop.permute.xlu0 %2614
      %2616 = vrot.lane.b32.xlu0 %v2489, 64
      %v2617 = vpop.permute.xlu0 %2616
      %2618 = vrot.lane.b32.xlu0 %v2490, 64
      %v2619 = vpop.permute.xlu0 %2618
      %2620 = vrot.lane.b32.xlu0 %v2491, 64
      %v2621 = vpop.permute.xlu0 %2620
      %2622 = vrot.lane.b32.xlu0 %v2492, 64
      %v2623 = vpop.permute.xlu0 %2622
      %2624 = vrot.lane.b32.xlu0 %v2493, 64
      %v2625 = vpop.permute.xlu0 %2624
      %2626 = vrot.lane.b32.xlu0 %v2494, 64
      %v2627 = vpop.permute.xlu0 %2626
      %2628 = vrot.lane.b32.xlu0 %v2495, 64
      %v2629 = vpop.permute.xlu0 %2628
      %2630 = vrot.lane.b32.xlu0 %v2496, 64
      %v2631 = vpop.permute.xlu0 %2630
      %2632 = vrot.lane.b32.xlu0 %v2497, 64
      %v2633 = vpop.permute.xlu0 %2632
      %2634 = vrot.lane.b32.xlu0 %v2498, 64
      %v2635 = vpop.permute.xlu0 %2634
      %2636 = vrot.lane.b32.xlu0 %v2499, 64
      %v2637 = vpop.permute.xlu0 %2636
      %2638 = vrot.lane.b32.xlu0 %v2500, 64
      %v2639 = vpop.permute.xlu0 %2638
      %2640 = vrot.lane.b32.xlu0 %v2501, 64
      %v2641 = vpop.permute.xlu0 %2640
      %2642 = vrot.lane.b32.xlu0 %v2502, 64
      %v2643 = vpop.permute.xlu0 %2642
      %2644 = vrot.lane.b32.xlu0 %v2503, 64
      %v2645 = vpop.permute.xlu0 %2644
      %2646 = vrot.lane.b32.xlu0 %v2504, 64
      %v2647 = vpop.permute.xlu0 %2646
      %2648 = vrot.lane.b32.xlu0 %v2505, 64
      %v2649 = vpop.permute.xlu0 %2648
      %vm2698 = vcmask 654848
      %2699 = vst.msk [vmem:[#allocation3] sm:$0xff] %vm2698, %v2555
      %2700 = vst.msk [vmem:[#allocation3 + $0x10] sm:$0xff] %vm2698, %v2557
      %2701 = vst.msk [vmem:[#allocation3 + $0x20] sm:$0xff] %vm2698, %v2559
      %2702 = vst.msk [vmem:[#allocation3 + $0x30] sm:$0xff] %vm2698, %v2561
      %2703 = vst.msk [vmem:[#allocation3 + $0x40] sm:$0xff] %vm2698, %v2563
      %2704 = vst.msk [vmem:[#allocation3 + $0x50] sm:$0xff] %vm2698, %v2565
      %2705 = vst.msk [vmem:[#allocation3 + $0x60] sm:$0xff] %vm2698, %v2567
      %2706 = vst.msk [vmem:[#allocation3 + $0x70] sm:$0xff] %vm2698, %v2569
      %2707 = vst.msk [vmem:[#allocation3 + $0x80] sm:$0xff] %vm2698, %v2571
      %2708 = vst.msk [vmem:[#allocation3 + $0x90] sm:$0xff] %vm2698, %v2573
      %2709 = vst.msk [vmem:[#allocation3 + $0xa0] sm:$0xff] %vm2698, %v2575
      %2710 = vst.msk [vmem:[#allocation3 + $0xb0] sm:$0xff] %vm2698, %v2577
      %2711 = vst.msk [vmem:[#allocation3 + $0xc0] sm:$0xff] %vm2698, %v2579
      %2712 = vst.msk [vmem:[#allocation3 + $0xd0] sm:$0xff] %vm2698, %v2581
      %2713 = vst.msk [vmem:[#allocation3 + $0xe0] sm:$0xff] %vm2698, %v2583
      %2714 = vst.msk [vmem:[#allocation3 + $0xf0] sm:$0xff] %vm2698, %v2585
      %2715 = vst.msk [vmem:[#allocation3 + $0x100] sm:$0xff] %vm2698, %v2587
      %2716 = vst.msk [vmem:[#allocation3 + $0x110] sm:$0xff] %vm2698, %v2589
      %2717 = vst.msk [vmem:[#allocation3 + $0x120] sm:$0xff] %vm2698, %v2591
      %2718 = vst.msk [vmem:[#allocation3 + $0x130] sm:$0xff] %vm2698, %v2593
      %2719 = vst.msk [vmem:[#allocation3 + $0x140] sm:$0xff] %vm2698, %v2595
      %2720 = vst.msk [vmem:[#allocation3 + $0x150] sm:$0xff] %vm2698, %v2597
      %2721 = vst.msk [vmem:[#allocation3 + $0x160] sm:$0xff] %vm2698, %v2599
      %2722 = vst.msk [vmem:[#allocation3 + $0x170] sm:$0xff] %vm2698, %v2601
      %2723 = vst.msk [vmem:[#allocation3 + $0x180] sm:$0xff] %vm2698, %v2603
      %2724 = vst.msk [vmem:[#allocation3 + $0x190] sm:$0xff] %vm2698, %v2605
      %2725 = vst.msk [vmem:[#allocation3 + $0x1a0] sm:$0xff] %vm2698, %v2607
      %2726 = vst.msk [vmem:[#allocation3 + $0x1b0] sm:$0xff] %vm2698, %v2609
      %2727 = vst.msk [vmem:[#allocation3 + $0x1c0] sm:$0xff] %vm2698, %v2611
      %2728 = vst.msk [vmem:[#allocation3 + $0x1d0] sm:$0xff] %vm2698, %v2613
      %2729 = vst.msk [vmem:[#allocation3 + $0x1e0] sm:$0xff] %vm2698, %v2615
      %2730 = vst.msk [vmem:[#allocation3 + $0x1f0] sm:$0xff] %vm2698, %v2617
      %2731 = vst.msk [vmem:[#allocation3 + $0x200] sm:$0xff] %vm2698, %v2619
      %2732 = vst.msk [vmem:[#allocation3 + $0x210] sm:$0xff] %vm2698, %v2621
      %2733 = vst.msk [vmem:[#allocation3 + $0x220] sm:$0xff] %vm2698, %v2623
      %2734 = vst.msk [vmem:[#allocation3 + $0x230] sm:$0xff] %vm2698, %v2625
      %2735 = vst.msk [vmem:[#allocation3 + $0x240] sm:$0xff] %vm2698, %v2627
      %2736 = vst.msk [vmem:[#allocation3 + $0x250] sm:$0xff] %vm2698, %v2629
      %2737 = vst.msk [vmem:[#allocation3 + $0x260] sm:$0xff] %vm2698, %v2631
      %2738 = vst.msk [vmem:[#allocation3 + $0x270] sm:$0xff] %vm2698, %v2633
      %2739 = vst.msk [vmem:[#allocation3 + $0x280] sm:$0xff] %vm2698, %v2635
      %2740 = vst.msk [vmem:[#allocation3 + $0x290] sm:$0xff] %vm2698, %v2637
      %2741 = vst.msk [vmem:[#allocation3 + $0x2a0] sm:$0xff] %vm2698, %v2639
      %2742 = vst.msk [vmem:[#allocation3 + $0x2b0] sm:$0xff] %vm2698, %v2641
      %2743 = vst.msk [vmem:[#allocation3 + $0x2c0] sm:$0xff] %vm2698, %v2643
      %2744 = vst.msk [vmem:[#allocation3 + $0x2d0] sm:$0xff] %vm2698, %v2645
      %2745 = vst.msk [vmem:[#allocation3 + $0x2e0] sm:$0xff] %vm2698, %v2647
      %2746 = vst.msk [vmem:[#allocation3 + $0x2f0] sm:$0xff] %vm2698, %v2649
      %v2747 = vld [vmem:[#allocation2 + $0x1a] sm:$0xff]
      %v2748 = vld [vmem:[#allocation2 + $0x22] sm:$0xff]
      %v2749 = vld [vmem:[#allocation2 + $0x2a] sm:$0xff]
      %v2750 = vld [vmem:[#allocation2 + $0x32] sm:$0xff]
      %v2751 = vld [vmem:[#allocation2 + $0x3a] sm:$0xff]
      %v2752 = vld [vmem:[#allocation2 + $0x42] sm:$0xff]
      %v2753 = vld [vmem:[#allocation2 + $0x4a] sm:$0xff]
      %v2754 = vld [vmem:[#allocation2 + $0x52] sm:$0xff]
      %v2755 = vld [vmem:[#allocation2 + $0x5a] sm:$0xff]
      %v2756 = vld [vmem:[#allocation2 + $0x62] sm:$0xff]
      %v2757 = vld [vmem:[#allocation2 + $0x6a] sm:$0xff]
      %v2758 = vld [vmem:[#allocation2 + $0x72] sm:$0xff]
      %v2759 = vld [vmem:[#allocation2 + $0x7a] sm:$0xff]
      %v2760 = vld [vmem:[#allocation2 + $0x82] sm:$0xff]
      %v2761 = vld [vmem:[#allocation2 + $0x8a] sm:$0xff]
      %v2762 = vld [vmem:[#allocation2 + $0x92] sm:$0xff]
      %v2763 = vld [vmem:[#allocation2 + $0x9a] sm:$0xff]
      %v2764 = vld [vmem:[#allocation2 + $0xa2] sm:$0xff]
      %v2765 = vld [vmem:[#allocation2 + $0xaa] sm:$0xff]
      %v2766 = vld [vmem:[#allocation2 + $0xb2] sm:$0xff]
      %v2767 = vld [vmem:[#allocation2 + $0xba] sm:$0xff]
      %v2768 = vld [vmem:[#allocation2 + $0xc2] sm:$0xff]
      %v2769 = vld [vmem:[#allocation2 + $0xca] sm:$0xff]
      %v2770 = vld [vmem:[#allocation2 + $0xd2] sm:$0xff]
      %v2771 = vld [vmem:[#allocation2 + $0xda] sm:$0xff]
      %v2772 = vld [vmem:[#allocation2 + $0xe2] sm:$0xff]
      %v2773 = vld [vmem:[#allocation2 + $0xea] sm:$0xff]
      %v2774 = vld [vmem:[#allocation2 + $0xf2] sm:$0xff]
      %v2775 = vld [vmem:[#allocation2 + $0xfa] sm:$0xff]
      %v2776 = vld [vmem:[#allocation2 + $0x102] sm:$0xff]
      %v2777 = vld [vmem:[#allocation2 + $0x10a] sm:$0xff]
      %v2778 = vld [vmem:[#allocation2 + $0x112] sm:$0xff]
      %v2779 = vld [vmem:[#allocation2 + $0x11a] sm:$0xff]
      %v2780 = vld [vmem:[#allocation2 + $0x122] sm:$0xff]
      %v2781 = vld [vmem:[#allocation2 + $0x12a] sm:$0xff]
      %v2782 = vld [vmem:[#allocation2 + $0x132] sm:$0xff]
      %v2783 = vld [vmem:[#allocation2 + $0x13a] sm:$0xff]
      %v2784 = vld [vmem:[#allocation2 + $0x142] sm:$0xff]
      %v2785 = vld [vmem:[#allocation2 + $0x14a] sm:$0xff]
      %v2786 = vld [vmem:[#allocation2 + $0x152] sm:$0xff]
      %v2787 = vld [vmem:[#allocation2 + $0x15a] sm:$0xff]
      %v2788 = vld [vmem:[#allocation2 + $0x162] sm:$0xff]
      %v2789 = vld [vmem:[#allocation2 + $0x16a] sm:$0xff]
      %v2790 = vld [vmem:[#allocation2 + $0x172] sm:$0xff]
      %v2791 = vld [vmem:[#allocation2 + $0x17a] sm:$0xff]
      %v2792 = vld [vmem:[#allocation2 + $0x182] sm:$0xff]
      %v2793 = vld [vmem:[#allocation2 + $0x18a] sm:$0xff]
      %v2794 = vld [vmem:[#allocation2 + $0x192] sm:$0xff]
      %2843 = vrot.lane.b32.xlu0 %v2747, 80
      %v2844 = vpop.permute.xlu0 %2843
      %2845 = vrot.lane.b32.xlu0 %v2748, 80
      %v2846 = vpop.permute.xlu0 %2845
      %2847 = vrot.lane.b32.xlu0 %v2749, 80
      %v2848 = vpop.permute.xlu0 %2847
      %2849 = vrot.lane.b32.xlu0 %v2750, 80
      %v2850 = vpop.permute.xlu0 %2849
      %2851 = vrot.lane.b32.xlu0 %v2751, 80
      %v2852 = vpop.permute.xlu0 %2851
      %2853 = vrot.lane.b32.xlu0 %v2752, 80
      %v2854 = vpop.permute.xlu0 %2853
      %2855 = vrot.lane.b32.xlu0 %v2753, 80
      %v2856 = vpop.permute.xlu0 %2855
      %2857 = vrot.lane.b32.xlu0 %v2754, 80
      %v2858 = vpop.permute.xlu0 %2857
      %2859 = vrot.lane.b32.xlu0 %v2755, 80
      %v2860 = vpop.permute.xlu0 %2859
      %2861 = vrot.lane.b32.xlu0 %v2756, 80
      %v2862 = vpop.permute.xlu0 %2861
      %2863 = vrot.lane.b32.xlu0 %v2757, 80
      %v2864 = vpop.permute.xlu0 %2863
      %2865 = vrot.lane.b32.xlu0 %v2758, 80
      %v2866 = vpop.permute.xlu0 %2865
      %2867 = vrot.lane.b32.xlu0 %v2759, 80
      %v2868 = vpop.permute.xlu0 %2867
      %2869 = vrot.lane.b32.xlu0 %v2760, 80
      %v2870 = vpop.permute.xlu0 %2869
      %2871 = vrot.lane.b32.xlu0 %v2761, 80
      %v2872 = vpop.permute.xlu0 %2871
      %2873 = vrot.lane.b32.xlu0 %v2762, 80
      %v2874 = vpop.permute.xlu0 %2873
      %2875 = vrot.lane.b32.xlu0 %v2763, 80
      %v2876 = vpop.permute.xlu0 %2875
      %2877 = vrot.lane.b32.xlu0 %v2764, 80
      %v2878 = vpop.permute.xlu0 %2877
      %2879 = vrot.lane.b32.xlu0 %v2765, 80
      %v2880 = vpop.permute.xlu0 %2879
      %2881 = vrot.lane.b32.xlu0 %v2766, 80
      %v2882 = vpop.permute.xlu0 %2881
      %2883 = vrot.lane.b32.xlu0 %v2767, 80
      %v2884 = vpop.permute.xlu0 %2883
      %2885 = vrot.lane.b32.xlu0 %v2768, 80
      %v2886 = vpop.permute.xlu0 %2885
      %2887 = vrot.lane.b32.xlu0 %v2769, 80
      %v2888 = vpop.permute.xlu0 %2887
      %2889 = vrot.lane.b32.xlu0 %v2770, 80
      %v2890 = vpop.permute.xlu0 %2889
      %2891 = vrot.lane.b32.xlu0 %v2771, 80
      %v2892 = vpop.permute.xlu0 %2891
      %2893 = vrot.lane.b32.xlu0 %v2772, 80
      %v2894 = vpop.permute.xlu0 %2893
      %2895 = vrot.lane.b32.xlu0 %v2773, 80
      %v2896 = vpop.permute.xlu0 %2895
      %2897 = vrot.lane.b32.xlu0 %v2774, 80
      %v2898 = vpop.permute.xlu0 %2897
      %2899 = vrot.lane.b32.xlu0 %v2775, 80
      %v2900 = vpop.permute.xlu0 %2899
      %2901 = vrot.lane.b32.xlu0 %v2776, 80
      %v2902 = vpop.permute.xlu0 %2901
      %2903 = vrot.lane.b32.xlu0 %v2777, 80
      %v2904 = vpop.permute.xlu0 %2903
      %2905 = vrot.lane.b32.xlu0 %v2778, 80
      %v2906 = vpop.permute.xlu0 %2905
      %2907 = vrot.lane.b32.xlu0 %v2779, 80
      %v2908 = vpop.permute.xlu0 %2907
      %2909 = vrot.lane.b32.xlu0 %v2780, 80
      %v2910 = vpop.permute.xlu0 %2909
      %2911 = vrot.lane.b32.xlu0 %v2781, 80
      %v2912 = vpop.permute.xlu0 %2911
      %2913 = vrot.lane.b32.xlu0 %v2782, 80
      %v2914 = vpop.permute.xlu0 %2913
      %2915 = vrot.lane.b32.xlu0 %v2783, 80
      %v2916 = vpop.permute.xlu0 %2915
      %2917 = vrot.lane.b32.xlu0 %v2784, 80
      %v2918 = vpop.permute.xlu0 %2917
      %2919 = vrot.lane.b32.xlu0 %v2785, 80
      %v2920 = vpop.permute.xlu0 %2919
      %2921 = vrot.lane.b32.xlu0 %v2786, 80
      %v2922 = vpop.permute.xlu0 %2921
      %2923 = vrot.lane.b32.xlu0 %v2787, 80
      %v2924 = vpop.permute.xlu0 %2923
      %2925 = vrot.lane.b32.xlu0 %v2788, 80
      %v2926 = vpop.permute.xlu0 %2925
      %2927 = vrot.lane.b32.xlu0 %v2789, 80
      %v2928 = vpop.permute.xlu0 %2927
      %2929 = vrot.lane.b32.xlu0 %v2790, 80
      %v2930 = vpop.permute.xlu0 %2929
      %2931 = vrot.lane.b32.xlu0 %v2791, 80
      %v2932 = vpop.permute.xlu0 %2931
      %2933 = vrot.lane.b32.xlu0 %v2792, 80
      %v2934 = vpop.permute.xlu0 %2933
      %2935 = vrot.lane.b32.xlu0 %v2793, 80
      %v2936 = vpop.permute.xlu0 %2935
      %2937 = vrot.lane.b32.xlu0 %v2794, 80
      %v2938 = vpop.permute.xlu0 %2937
      %vm2987 = vcmask 786048
      %2988 = vst.msk [vmem:[#allocation3] sm:$0xff] %vm2987, %v2844
      %2989 = vst.msk [vmem:[#allocation3 + $0x10] sm:$0xff] %vm2987, %v2846
      %2990 = vst.msk [vmem:[#allocation3 + $0x20] sm:$0xff] %vm2987, %v2848
      %2991 = vst.msk [vmem:[#allocation3 + $0x30] sm:$0xff] %vm2987, %v2850
      %2992 = vst.msk [vmem:[#allocation3 + $0x40] sm:$0xff] %vm2987, %v2852
      %2993 = vst.msk [vmem:[#allocation3 + $0x50] sm:$0xff] %vm2987, %v2854
      %2994 = vst.msk [vmem:[#allocation3 + $0x60] sm:$0xff] %vm2987, %v2856
      %2995 = vst.msk [vmem:[#allocation3 + $0x70] sm:$0xff] %vm2987, %v2858
      %2996 = vst.msk [vmem:[#allocation3 + $0x80] sm:$0xff] %vm2987, %v2860
      %2997 = vst.msk [vmem:[#allocation3 + $0x90] sm:$0xff] %vm2987, %v2862
      %2998 = vst.msk [vmem:[#allocation3 + $0xa0] sm:$0xff] %vm2987, %v2864
      %2999 = vst.msk [vmem:[#allocation3 + $0xb0] sm:$0xff] %vm2987, %v2866
      %3000 = vst.msk [vmem:[#allocation3 + $0xc0] sm:$0xff] %vm2987, %v2868
      %3001 = vst.msk [vmem:[#allocation3 + $0xd0] sm:$0xff] %vm2987, %v2870
      %3002 = vst.msk [vmem:[#allocation3 + $0xe0] sm:$0xff] %vm2987, %v2872
      %3003 = vst.msk [vmem:[#allocation3 + $0xf0] sm:$0xff] %vm2987, %v2874
      %3004 = vst.msk [vmem:[#allocation3 + $0x100] sm:$0xff] %vm2987, %v2876
      %3005 = vst.msk [vmem:[#allocation3 + $0x110] sm:$0xff] %vm2987, %v2878
      %3006 = vst.msk [vmem:[#allocation3 + $0x120] sm:$0xff] %vm2987, %v2880
      %3007 = vst.msk [vmem:[#allocation3 + $0x130] sm:$0xff] %vm2987, %v2882
      %3008 = vst.msk [vmem:[#allocation3 + $0x140] sm:$0xff] %vm2987, %v2884
      %3009 = vst.msk [vmem:[#allocation3 + $0x150] sm:$0xff] %vm2987, %v2886
      %3010 = vst.msk [vmem:[#allocation3 + $0x160] sm:$0xff] %vm2987, %v2888
      %3011 = vst.msk [vmem:[#allocation3 + $0x170] sm:$0xff] %vm2987, %v2890
      %3012 = vst.msk [vmem:[#allocation3 + $0x180] sm:$0xff] %vm2987, %v2892
      %3013 = vst.msk [vmem:[#allocation3 + $0x190] sm:$0xff] %vm2987, %v2894
      %3014 = vst.msk [vmem:[#allocation3 + $0x1a0] sm:$0xff] %vm2987, %v2896
      %3015 = vst.msk [vmem:[#allocation3 + $0x1b0] sm:$0xff] %vm2987, %v2898
      %3016 = vst.msk [vmem:[#allocation3 + $0x1c0] sm:$0xff] %vm2987, %v2900
      %3017 = vst.msk [vmem:[#allocation3 + $0x1d0] sm:$0xff] %vm2987, %v2902
      %3018 = vst.msk [vmem:[#allocation3 + $0x1e0] sm:$0xff] %vm2987, %v2904
      %3019 = vst.msk [vmem:[#allocation3 + $0x1f0] sm:$0xff] %vm2987, %v2906
      %3020 = vst.msk [vmem:[#allocation3 + $0x200] sm:$0xff] %vm2987, %v2908
      %3021 = vst.msk [vmem:[#allocation3 + $0x210] sm:$0xff] %vm2987, %v2910
      %3022 = vst.msk [vmem:[#allocation3 + $0x220] sm:$0xff] %vm2987, %v2912
      %3023 = vst.msk [vmem:[#allocation3 + $0x230] sm:$0xff] %vm2987, %v2914
      %3024 = vst.msk [vmem:[#allocation3 + $0x240] sm:$0xff] %vm2987, %v2916
      %3025 = vst.msk [vmem:[#allocation3 + $0x250] sm:$0xff] %vm2987, %v2918
      %3026 = vst.msk [vmem:[#allocation3 + $0x260] sm:$0xff] %vm2987, %v2920
      %3027 = vst.msk [vmem:[#allocation3 + $0x270] sm:$0xff] %vm2987, %v2922
      %3028 = vst.msk [vmem:[#allocation3 + $0x280] sm:$0xff] %vm2987, %v2924
      %3029 = vst.msk [vmem:[#allocation3 + $0x290] sm:$0xff] %vm2987, %v2926
      %3030 = vst.msk [vmem:[#allocation3 + $0x2a0] sm:$0xff] %vm2987, %v2928
      %3031 = vst.msk [vmem:[#allocation3 + $0x2b0] sm:$0xff] %vm2987, %v2930
      %3032 = vst.msk [vmem:[#allocation3 + $0x2c0] sm:$0xff] %vm2987, %v2932
      %3033 = vst.msk [vmem:[#allocation3 + $0x2d0] sm:$0xff] %vm2987, %v2934
      %3034 = vst.msk [vmem:[#allocation3 + $0x2e0] sm:$0xff] %vm2987, %v2936
      %3035 = vst.msk [vmem:[#allocation3 + $0x2f0] sm:$0xff] %vm2987, %v2938
      %v3036 = vld [vmem:[#allocation2 + $0x30] sm:$0xff]
      %v3037 = vld [vmem:[#allocation2 + $0x38] sm:$0xff]
      %v3038 = vld [vmem:[#allocation2 + $0x40] sm:$0xff]
      %v3039 = vld [vmem:[#allocation2 + $0x48] sm:$0xff]
      %v3040 = vld [vmem:[#allocation2 + $0x50] sm:$0xff]
      %v3041 = vld [vmem:[#allocation2 + $0x58] sm:$0xff]
      %v3042 = vld [vmem:[#allocation2 + $0x60] sm:$0xff]
      %v3043 = vld [vmem:[#allocation2 + $0x68] sm:$0xff]
      %v3044 = vld [vmem:[#allocation2 + $0x70] sm:$0xff]
      %v3045 = vld [vmem:[#allocation2 + $0x78] sm:$0xff]
      %v3046 = vld [vmem:[#allocation2 + $0x80] sm:$0xff]
      %v3047 = vld [vmem:[#allocation2 + $0x88] sm:$0xff]
      %v3048 = vld [vmem:[#allocation2 + $0x90] sm:$0xff]
      %v3049 = vld [vmem:[#allocation2 + $0x98] sm:$0xff]
      %v3050 = vld [vmem:[#allocation2 + $0xa0] sm:$0xff]
      %v3051 = vld [vmem:[#allocation2 + $0xa8] sm:$0xff]
      %v3052 = vld [vmem:[#allocation2 + $0xb0] sm:$0xff]
      %v3053 = vld [vmem:[#allocation2 + $0xb8] sm:$0xff]
      %v3054 = vld [vmem:[#allocation2 + $0xc0] sm:$0xff]
      %v3055 = vld [vmem:[#allocation2 + $0xc8] sm:$0xff]
      %v3056 = vld [vmem:[#allocation2 + $0xd0] sm:$0xff]
      %v3057 = vld [vmem:[#allocation2 + $0xd8] sm:$0xff]
      %v3058 = vld [vmem:[#allocation2 + $0xe0] sm:$0xff]
      %v3059 = vld [vmem:[#allocation2 + $0xe8] sm:$0xff]
      %v3060 = vld [vmem:[#allocation2 + $0xf0] sm:$0xff]
      %v3061 = vld [vmem:[#allocation2 + $0xf8] sm:$0xff]
      %v3062 = vld [vmem:[#allocation2 + $0x100] sm:$0xff]
      %v3063 = vld [vmem:[#allocation2 + $0x108] sm:$0xff]
      %v3064 = vld [vmem:[#allocation2 + $0x110] sm:$0xff]
      %v3065 = vld [vmem:[#allocation2 + $0x118] sm:$0xff]
      %v3066 = vld [vmem:[#allocation2 + $0x120] sm:$0xff]
      %v3067 = vld [vmem:[#allocation2 + $0x128] sm:$0xff]
      %v3068 = vld [vmem:[#allocation2 + $0x130] sm:$0xff]
      %v3069 = vld [vmem:[#allocation2 + $0x138] sm:$0xff]
      %v3070 = vld [vmem:[#allocation2 + $0x140] sm:$0xff]
      %v3071 = vld [vmem:[#allocation2 + $0x148] sm:$0xff]
      %v3072 = vld [vmem:[#allocation2 + $0x150] sm:$0xff]
      %v3073 = vld [vmem:[#allocation2 + $0x158] sm:$0xff]
      %v3074 = vld [vmem:[#allocation2 + $0x160] sm:$0xff]
      %v3075 = vld [vmem:[#allocation2 + $0x168] sm:$0xff]
      %v3076 = vld [vmem:[#allocation2 + $0x170] sm:$0xff]
      %v3077 = vld [vmem:[#allocation2 + $0x178] sm:$0xff]
      %v3078 = vld [vmem:[#allocation2 + $0x180] sm:$0xff]
      %v3079 = vld [vmem:[#allocation2 + $0x188] sm:$0xff]
      %v3080 = vld [vmem:[#allocation2 + $0x190] sm:$0xff]
      %v3081 = vld [vmem:[#allocation2 + $0x198] sm:$0xff]
      %v3082 = vld [vmem:[#allocation2 + $0x1a0] sm:$0xff]
      %v3083 = vld [vmem:[#allocation2 + $0x1a8] sm:$0xff]
      %3132 = vrot.lane.b32.xlu0 %v3036, 96
      %v3133 = vpop.permute.xlu0 %3132
      %3134 = vrot.lane.b32.xlu0 %v3037, 96
      %v3135 = vpop.permute.xlu0 %3134
      %3136 = vrot.lane.b32.xlu0 %v3038, 96
      %v3137 = vpop.permute.xlu0 %3136
      %3138 = vrot.lane.b32.xlu0 %v3039, 96
      %v3139 = vpop.permute.xlu0 %3138
      %3140 = vrot.lane.b32.xlu0 %v3040, 96
      %v3141 = vpop.permute.xlu0 %3140
      %3142 = vrot.lane.b32.xlu0 %v3041, 96
      %v3143 = vpop.permute.xlu0 %3142
      %3144 = vrot.lane.b32.xlu0 %v3042, 96
      %v3145 = vpop.permute.xlu0 %3144
      %3146 = vrot.lane.b32.xlu0 %v3043, 96
      %v3147 = vpop.permute.xlu0 %3146
      %3148 = vrot.lane.b32.xlu0 %v3044, 96
      %v3149 = vpop.permute.xlu0 %3148
      %3150 = vrot.lane.b32.xlu0 %v3045, 96
      %v3151 = vpop.permute.xlu0 %3150
      %3152 = vrot.lane.b32.xlu0 %v3046, 96
      %v3153 = vpop.permute.xlu0 %3152
      %3154 = vrot.lane.b32.xlu0 %v3047, 96
      %v3155 = vpop.permute.xlu0 %3154
      %3156 = vrot.lane.b32.xlu0 %v3048, 96
      %v3157 = vpop.permute.xlu0 %3156
      %3158 = vrot.lane.b32.xlu0 %v3049, 96
      %v3159 = vpop.permute.xlu0 %3158
      %3160 = vrot.lane.b32.xlu0 %v3050, 96
      %v3161 = vpop.permute.xlu0 %3160
      %3162 = vrot.lane.b32.xlu0 %v3051, 96
      %v3163 = vpop.permute.xlu0 %3162
      %3164 = vrot.lane.b32.xlu0 %v3052, 96
      %v3165 = vpop.permute.xlu0 %3164
      %3166 = vrot.lane.b32.xlu0 %v3053, 96
      %v3167 = vpop.permute.xlu0 %3166
      %3168 = vrot.lane.b32.xlu0 %v3054, 96
      %v3169 = vpop.permute.xlu0 %3168
      %3170 = vrot.lane.b32.xlu0 %v3055, 96
      %v3171 = vpop.permute.xlu0 %3170
      %3172 = vrot.lane.b32.xlu0 %v3056, 96
      %v3173 = vpop.permute.xlu0 %3172
      %3174 = vrot.lane.b32.xlu0 %v3057, 96
      %v3175 = vpop.permute.xlu0 %3174
      %3176 = vrot.lane.b32.xlu0 %v3058, 96
      %v3177 = vpop.permute.xlu0 %3176
      %3178 = vrot.lane.b32.xlu0 %v3059, 96
      %v3179 = vpop.permute.xlu0 %3178
      %3180 = vrot.lane.b32.xlu0 %v3060, 96
      %v3181 = vpop.permute.xlu0 %3180
      %3182 = vrot.lane.b32.xlu0 %v3061, 96
      %v3183 = vpop.permute.xlu0 %3182
      %3184 = vrot.lane.b32.xlu0 %v3062, 96
      %v3185 = vpop.permute.xlu0 %3184
      %3186 = vrot.lane.b32.xlu0 %v3063, 96
      %v3187 = vpop.permute.xlu0 %3186
      %3188 = vrot.lane.b32.xlu0 %v3064, 96
      %v3189 = vpop.permute.xlu0 %3188
      %3190 = vrot.lane.b32.xlu0 %v3065, 96
      %v3191 = vpop.permute.xlu0 %3190
      %3192 = vrot.lane.b32.xlu0 %v3066, 96
      %v3193 = vpop.permute.xlu0 %3192
      %3194 = vrot.lane.b32.xlu0 %v3067, 96
      %v3195 = vpop.permute.xlu0 %3194
      %3196 = vrot.lane.b32.xlu0 %v3068, 96
      %v3197 = vpop.permute.xlu0 %3196
      %3198 = vrot.lane.b32.xlu0 %v3069, 96
      %v3199 = vpop.permute.xlu0 %3198
      %3200 = vrot.lane.b32.xlu0 %v3070, 96
      %v3201 = vpop.permute.xlu0 %3200
      %3202 = vrot.lane.b32.xlu0 %v3071, 96
      %v3203 = vpop.permute.xlu0 %3202
      %3204 = vrot.lane.b32.xlu0 %v3072, 96
      %v3205 = vpop.permute.xlu0 %3204
      %3206 = vrot.lane.b32.xlu0 %v3073, 96
      %v3207 = vpop.permute.xlu0 %3206
      %3208 = vrot.lane.b32.xlu0 %v3074, 96
      %v3209 = vpop.permute.xlu0 %3208
      %3210 = vrot.lane.b32.xlu0 %v3075, 96
      %v3211 = vpop.permute.xlu0 %3210
      %3212 = vrot.lane.b32.xlu0 %v3076, 96
      %v3213 = vpop.permute.xlu0 %3212
      %3214 = vrot.lane.b32.xlu0 %v3077, 96
      %v3215 = vpop.permute.xlu0 %3214
      %3216 = vrot.lane.b32.xlu0 %v3078, 96
      %v3217 = vpop.permute.xlu0 %3216
      %3218 = vrot.lane.b32.xlu0 %v3079, 96
      %v3219 = vpop.permute.xlu0 %3218
      %3220 = vrot.lane.b32.xlu0 %v3080, 96
      %v3221 = vpop.permute.xlu0 %3220
      %3222 = vrot.lane.b32.xlu0 %v3081, 96
      %v3223 = vpop.permute.xlu0 %3222
      %3224 = vrot.lane.b32.xlu0 %v3082, 96
      %v3225 = vpop.permute.xlu0 %3224
      %3226 = vrot.lane.b32.xlu0 %v3083, 96
      %v3227 = vpop.permute.xlu0 %3226
      %vm3276 = vcmask 917248
      %3277 = vst.msk [vmem:[#allocation3] sm:$0xff] %vm3276, %v3133
      %3278 = vst.msk [vmem:[#allocation3 + $0x10] sm:$0xff] %vm3276, %v3135
      %3279 = vst.msk [vmem:[#allocation3 + $0x20] sm:$0xff] %vm3276, %v3137
      %3280 = vst.msk [vmem:[#allocation3 + $0x30] sm:$0xff] %vm3276, %v3139
      %3281 = vst.msk [vmem:[#allocation3 + $0x40] sm:$0xff] %vm3276, %v3141
      %3282 = vst.msk [vmem:[#allocation3 + $0x50] sm:$0xff] %vm3276, %v3143
      %3283 = vst.msk [vmem:[#allocation3 + $0x60] sm:$0xff] %vm3276, %v3145
      %3284 = vst.msk [vmem:[#allocation3 + $0x70] sm:$0xff] %vm3276, %v3147
      %3285 = vst.msk [vmem:[#allocation3 + $0x80] sm:$0xff] %vm3276, %v3149
      %3286 = vst.msk [vmem:[#allocation3 + $0x90] sm:$0xff] %vm3276, %v3151
      %3287 = vst.msk [vmem:[#allocation3 + $0xa0] sm:$0xff] %vm3276, %v3153
      %3288 = vst.msk [vmem:[#allocation3 + $0xb0] sm:$0xff] %vm3276, %v3155
      %3289 = vst.msk [vmem:[#allocation3 + $0xc0] sm:$0xff] %vm3276, %v3157
      %3290 = vst.msk [vmem:[#allocation3 + $0xd0] sm:$0xff] %vm3276, %v3159
      %3291 = vst.msk [vmem:[#allocation3 + $0xe0] sm:$0xff] %vm3276, %v3161
      %3292 = vst.msk [vmem:[#allocation3 + $0xf0] sm:$0xff] %vm3276, %v3163
      %3293 = vst.msk [vmem:[#allocation3 + $0x100] sm:$0xff] %vm3276, %v3165
      %3294 = vst.msk [vmem:[#allocation3 + $0x110] sm:$0xff] %vm3276, %v3167
      %3295 = vst.msk [vmem:[#allocation3 + $0x120] sm:$0xff] %vm3276, %v3169
      %3296 = vst.msk [vmem:[#allocation3 + $0x130] sm:$0xff] %vm3276, %v3171
      %3297 = vst.msk [vmem:[#allocation3 + $0x140] sm:$0xff] %vm3276, %v3173
      %3298 = vst.msk [vmem:[#allocation3 + $0x150] sm:$0xff] %vm3276, %v3175
      %3299 = vst.msk [vmem:[#allocation3 + $0x160] sm:$0xff] %vm3276, %v3177
      %3300 = vst.msk [vmem:[#allocation3 + $0x170] sm:$0xff] %vm3276, %v3179
      %3301 = vst.msk [vmem:[#allocation3 + $0x180] sm:$0xff] %vm3276, %v3181
      %3302 = vst.msk [vmem:[#allocation3 + $0x190] sm:$0xff] %vm3276, %v3183
      %3303 = vst.msk [vmem:[#allocation3 + $0x1a0] sm:$0xff] %vm3276, %v3185
      %3304 = vst.msk [vmem:[#allocation3 + $0x1b0] sm:$0xff] %vm3276, %v3187
      %3305 = vst.msk [vmem:[#allocation3 + $0x1c0] sm:$0xff] %vm3276, %v3189
      %3306 = vst.msk [vmem:[#allocation3 + $0x1d0] sm:$0xff] %vm3276, %v3191
      %3307 = vst.msk [vmem:[#allocation3 + $0x1e0] sm:$0xff] %vm3276, %v3193
      %3308 = vst.msk [vmem:[#allocation3 + $0x1f0] sm:$0xff] %vm3276, %v3195
      %3309 = vst.msk [vmem:[#allocation3 + $0x200] sm:$0xff] %vm3276, %v3197
      %3310 = vst.msk [vmem:[#allocation3 + $0x210] sm:$0xff] %vm3276, %v3199
      %3311 = vst.msk [vmem:[#allocation3 + $0x220] sm:$0xff] %vm3276, %v3201
      %3312 = vst.msk [vmem:[#allocation3 + $0x230] sm:$0xff] %vm3276, %v3203
      %3313 = vst.msk [vmem:[#allocation3 + $0x240] sm:$0xff] %vm3276, %v3205
      %3314 = vst.msk [vmem:[#allocation3 + $0x250] sm:$0xff] %vm3276, %v3207
      %3315 = vst.msk [vmem:[#allocation3 + $0x260] sm:$0xff] %vm3276, %v3209
      %3316 = vst.msk [vmem:[#allocation3 + $0x270] sm:$0xff] %vm3276, %v3211
      %3317 = vst.msk [vmem:[#allocation3 + $0x280] sm:$0xff] %vm3276, %v3213
      %3318 = vst.msk [vmem:[#allocation3 + $0x290] sm:$0xff] %vm3276, %v3215
      %3319 = vst.msk [vmem:[#allocation3 + $0x2a0] sm:$0xff] %vm3276, %v3217
      %3320 = vst.msk [vmem:[#allocation3 + $0x2b0] sm:$0xff] %vm3276, %v3219
      %3321 = vst.msk [vmem:[#allocation3 + $0x2c0] sm:$0xff] %vm3276, %v3221
      %3322 = vst.msk [vmem:[#allocation3 + $0x2d0] sm:$0xff] %vm3276, %v3223
      %3323 = vst.msk [vmem:[#allocation3 + $0x2e0] sm:$0xff] %vm3276, %v3225
      %3324 = vst.msk [vmem:[#allocation3 + $0x2f0] sm:$0xff] %vm3276, %v3227
      %v3325 = vld [vmem:[#allocation2 + $0x31] sm:$0xff]
      %v3326 = vld [vmem:[#allocation2 + $0x39] sm:$0xff]
      %v3327 = vld [vmem:[#allocation2 + $0x41] sm:$0xff]
      %v3328 = vld [vmem:[#allocation2 + $0x49] sm:$0xff]
      %v3329 = vld [vmem:[#allocation2 + $0x51] sm:$0xff]
      %v3330 = vld [vmem:[#allocation2 + $0x59] sm:$0xff]
      %v3331 = vld [vmem:[#allocation2 + $0x61] sm:$0xff]
      %v3332 = vld [vmem:[#allocation2 + $0x69] sm:$0xff]
      %v3333 = vld [vmem:[#allocation2 + $0x71] sm:$0xff]
      %v3334 = vld [vmem:[#allocation2 + $0x79] sm:$0xff]
      %v3335 = vld [vmem:[#allocation2 + $0x81] sm:$0xff]
      %v3336 = vld [vmem:[#allocation2 + $0x89] sm:$0xff]
      %v3337 = vld [vmem:[#allocation2 + $0x91] sm:$0xff]
      %v3338 = vld [vmem:[#allocation2 + $0x99] sm:$0xff]
      %v3339 = vld [vmem:[#allocation2 + $0xa1] sm:$0xff]
      %v3340 = vld [vmem:[#allocation2 + $0xa9] sm:$0xff]
      %v3341 = vld [vmem:[#allocation2 + $0xb1] sm:$0xff]
      %v3342 = vld [vmem:[#allocation2 + $0xb9] sm:$0xff]
      %v3343 = vld [vmem:[#allocation2 + $0xc1] sm:$0xff]
      %v3344 = vld [vmem:[#allocation2 + $0xc9] sm:$0xff]
      %v3345 = vld [vmem:[#allocation2 + $0xd1] sm:$0xff]
      %v3346 = vld [vmem:[#allocation2 + $0xd9] sm:$0xff]
      %v3347 = vld [vmem:[#allocation2 + $0xe1] sm:$0xff]
      %v3348 = vld [vmem:[#allocation2 + $0xe9] sm:$0xff]
      %v3349 = vld [vmem:[#allocation2 + $0xf1] sm:$0xff]
      %v3350 = vld [vmem:[#allocation2 + $0xf9] sm:$0xff]
      %v3351 = vld [vmem:[#allocation2 + $0x101] sm:$0xff]
      %v3352 = vld [vmem:[#allocation2 + $0x109] sm:$0xff]
      %v3353 = vld [vmem:[#allocation2 + $0x111] sm:$0xff]
      %v3354 = vld [vmem:[#allocation2 + $0x119] sm:$0xff]
      %v3355 = vld [vmem:[#allocation2 + $0x121] sm:$0xff]
      %v3356 = vld [vmem:[#allocation2 + $0x129] sm:$0xff]
      %v3357 = vld [vmem:[#allocation2 + $0x131] sm:$0xff]
      %v3358 = vld [vmem:[#allocation2 + $0x139] sm:$0xff]
      %v3359 = vld [vmem:[#allocation2 + $0x141] sm:$0xff]
      %v3360 = vld [vmem:[#allocation2 + $0x149] sm:$0xff]
      %v3361 = vld [vmem:[#allocation2 + $0x151] sm:$0xff]
      %v3362 = vld [vmem:[#allocation2 + $0x159] sm:$0xff]
      %v3363 = vld [vmem:[#allocation2 + $0x161] sm:$0xff]
      %v3364 = vld [vmem:[#allocation2 + $0x169] sm:$0xff]
      %v3365 = vld [vmem:[#allocation2 + $0x171] sm:$0xff]
      %v3366 = vld [vmem:[#allocation2 + $0x179] sm:$0xff]
      %v3367 = vld [vmem:[#allocation2 + $0x181] sm:$0xff]
      %v3368 = vld [vmem:[#allocation2 + $0x189] sm:$0xff]
      %v3369 = vld [vmem:[#allocation2 + $0x191] sm:$0xff]
      %v3370 = vld [vmem:[#allocation2 + $0x199] sm:$0xff]
      %v3371 = vld [vmem:[#allocation2 + $0x1a1] sm:$0xff]
      %v3372 = vld [vmem:[#allocation2 + $0x1a9] sm:$0xff]
      %3421 = vrot.lane.b32.xlu0 %v3325, 112
      %v3422 = vpop.permute.xlu0 %3421
      %3423 = vrot.lane.b32.xlu0 %v3326, 112
      %v3424 = vpop.permute.xlu0 %3423
      %3425 = vrot.lane.b32.xlu0 %v3327, 112
      %v3426 = vpop.permute.xlu0 %3425
      %3427 = vrot.lane.b32.xlu0 %v3328, 112
      %v3428 = vpop.permute.xlu0 %3427
      %3429 = vrot.lane.b32.xlu0 %v3329, 112
      %v3430 = vpop.permute.xlu0 %3429
      %3431 = vrot.lane.b32.xlu0 %v3330, 112
      %v3432 = vpop.permute.xlu0 %3431
      %3433 = vrot.lane.b32.xlu0 %v3331, 112
      %v3434 = vpop.permute.xlu0 %3433
      %3435 = vrot.lane.b32.xlu0 %v3332, 112
      %v3436 = vpop.permute.xlu0 %3435
      %3437 = vrot.lane.b32.xlu0 %v3333, 112
      %v3438 = vpop.permute.xlu0 %3437
      %3439 = vrot.lane.b32.xlu0 %v3334, 112
      %v3440 = vpop.permute.xlu0 %3439
      %3441 = vrot.lane.b32.xlu0 %v3335, 112
      %v3442 = vpop.permute.xlu0 %3441
      %3443 = vrot.lane.b32.xlu0 %v3336, 112
      %v3444 = vpop.permute.xlu0 %3443
      %3445 = vrot.lane.b32.xlu0 %v3337, 112
      %v3446 = vpop.permute.xlu0 %3445
      %3447 = vrot.lane.b32.xlu0 %v3338, 112
      %v3448 = vpop.permute.xlu0 %3447
      %3449 = vrot.lane.b32.xlu0 %v3339, 112
      %v3450 = vpop.permute.xlu0 %3449
      %3451 = vrot.lane.b32.xlu0 %v3340, 112
      %v3452 = vpop.permute.xlu0 %3451
      %3453 = vrot.lane.b32.xlu0 %v3341, 112
      %v3454 = vpop.permute.xlu0 %3453
      %3455 = vrot.lane.b32.xlu0 %v3342, 112
      %v3456 = vpop.permute.xlu0 %3455
      %3457 = vrot.lane.b32.xlu0 %v3343, 112
      %v3458 = vpop.permute.xlu0 %3457
      %3459 = vrot.lane.b32.xlu0 %v3344, 112
      %v3460 = vpop.permute.xlu0 %3459
      %3461 = vrot.lane.b32.xlu0 %v3345, 112
      %v3462 = vpop.permute.xlu0 %3461
      %3463 = vrot.lane.b32.xlu0 %v3346, 112
      %v3464 = vpop.permute.xlu0 %3463
      %3465 = vrot.lane.b32.xlu0 %v3347, 112
      %v3466 = vpop.permute.xlu0 %3465
      %3467 = vrot.lane.b32.xlu0 %v3348, 112
      %v3468 = vpop.permute.xlu0 %3467
      %3469 = vrot.lane.b32.xlu0 %v3349, 112
      %v3470 = vpop.permute.xlu0 %3469
      %3471 = vrot.lane.b32.xlu0 %v3350, 112
      %v3472 = vpop.permute.xlu0 %3471
      %3473 = vrot.lane.b32.xlu0 %v3351, 112
      %v3474 = vpop.permute.xlu0 %3473
      %3475 = vrot.lane.b32.xlu0 %v3352, 112
      %v3476 = vpop.permute.xlu0 %3475
      %3477 = vrot.lane.b32.xlu0 %v3353, 112
      %v3478 = vpop.permute.xlu0 %3477
      %3479 = vrot.lane.b32.xlu0 %v3354, 112
      %v3480 = vpop.permute.xlu0 %3479
      %3481 = vrot.lane.b32.xlu0 %v3355, 112
      %v3482 = vpop.permute.xlu0 %3481
      %3483 = vrot.lane.b32.xlu0 %v3356, 112
      %v3484 = vpop.permute.xlu0 %3483
      %3485 = vrot.lane.b32.xlu0 %v3357, 112
      %v3486 = vpop.permute.xlu0 %3485
      %3487 = vrot.lane.b32.xlu0 %v3358, 112
      %v3488 = vpop.permute.xlu0 %3487
      %3489 = vrot.lane.b32.xlu0 %v3359, 112
      %v3490 = vpop.permute.xlu0 %3489
      %3491 = vrot.lane.b32.xlu0 %v3360, 112
      %v3492 = vpop.permute.xlu0 %3491
      %3493 = vrot.lane.b32.xlu0 %v3361, 112
      %v3494 = vpop.permute.xlu0 %3493
      %3495 = vrot.lane.b32.xlu0 %v3362, 112
      %v3496 = vpop.permute.xlu0 %3495
      %3497 = vrot.lane.b32.xlu0 %v3363, 112
      %v3498 = vpop.permute.xlu0 %3497
      %3499 = vrot.lane.b32.xlu0 %v3364, 112
      %v3500 = vpop.permute.xlu0 %3499
      %3501 = vrot.lane.b32.xlu0 %v3365, 112
      %v3502 = vpop.permute.xlu0 %3501
      %3503 = vrot.lane.b32.xlu0 %v3366, 112
      %v3504 = vpop.permute.xlu0 %3503
      %3505 = vrot.lane.b32.xlu0 %v3367, 112
      %v3506 = vpop.permute.xlu0 %3505
      %3507 = vrot.lane.b32.xlu0 %v3368, 112
      %v3508 = vpop.permute.xlu0 %3507
      %3509 = vrot.lane.b32.xlu0 %v3369, 112
      %v3510 = vpop.permute.xlu0 %3509
      %3511 = vrot.lane.b32.xlu0 %v3370, 112
      %v3512 = vpop.permute.xlu0 %3511
      %3513 = vrot.lane.b32.xlu0 %v3371, 112
      %v3514 = vpop.permute.xlu0 %3513
      %3515 = vrot.lane.b32.xlu0 %v3372, 112
      %v3516 = vpop.permute.xlu0 %3515
      %vm3565 = vcmask 1048448
      %3566 = vst.msk [vmem:[#allocation3] sm:$0xff] %vm3565, %v3422
      %3567 = vst.msk [vmem:[#allocation3 + $0x10] sm:$0xff] %vm3565, %v3424
      %3568 = vst.msk [vmem:[#allocation3 + $0x20] sm:$0xff] %vm3565, %v3426
      %3569 = vst.msk [vmem:[#allocation3 + $0x30] sm:$0xff] %vm3565, %v3428
      %3570 = vst.msk [vmem:[#allocation3 + $0x40] sm:$0xff] %vm3565, %v3430
      %3571 = vst.msk [vmem:[#allocation3 + $0x50] sm:$0xff] %vm3565, %v3432
      %3572 = vst.msk [vmem:[#allocation3 + $0x60] sm:$0xff] %vm3565, %v3434
      %3573 = vst.msk [vmem:[#allocation3 + $0x70] sm:$0xff] %vm3565, %v3436
      %3574 = vst.msk [vmem:[#allocation3 + $0x80] sm:$0xff] %vm3565, %v3438
      %3575 = vst.msk [vmem:[#allocation3 + $0x90] sm:$0xff] %vm3565, %v3440
      %3576 = vst.msk [vmem:[#allocation3 + $0xa0] sm:$0xff] %vm3565, %v3442
      %3577 = vst.msk [vmem:[#allocation3 + $0xb0] sm:$0xff] %vm3565, %v3444
      %3578 = vst.msk [vmem:[#allocation3 + $0xc0] sm:$0xff] %vm3565, %v3446
      %3579 = vst.msk [vmem:[#allocation3 + $0xd0] sm:$0xff] %vm3565, %v3448
      %3580 = vst.msk [vmem:[#allocation3 + $0xe0] sm:$0xff] %vm3565, %v3450
      %3581 = vst.msk [vmem:[#allocation3 + $0xf0] sm:$0xff] %vm3565, %v3452
      %3582 = vst.msk [vmem:[#allocation3 + $0x100] sm:$0xff] %vm3565, %v3454
      %3583 = vst.msk [vmem:[#allocation3 + $0x110] sm:$0xff] %vm3565, %v3456
      %3584 = vst.msk [vmem:[#allocation3 + $0x120] sm:$0xff] %vm3565, %v3458
      %3585 = vst.msk [vmem:[#allocation3 + $0x130] sm:$0xff] %vm3565, %v3460
      %3586 = vst.msk [vmem:[#allocation3 + $0x140] sm:$0xff] %vm3565, %v3462
      %3587 = vst.msk [vmem:[#allocation3 + $0x150] sm:$0xff] %vm3565, %v3464
      %3588 = vst.msk [vmem:[#allocation3 + $0x160] sm:$0xff] %vm3565, %v3466
      %3589 = vst.msk [vmem:[#allocation3 + $0x170] sm:$0xff] %vm3565, %v3468
      %3590 = vst.msk [vmem:[#allocation3 + $0x180] sm:$0xff] %vm3565, %v3470
      %3591 = vst.msk [vmem:[#allocation3 + $0x190] sm:$0xff] %vm3565, %v3472
      %3592 = vst.msk [vmem:[#allocation3 + $0x1a0] sm:$0xff] %vm3565, %v3474
      %3593 = vst.msk [vmem:[#allocation3 + $0x1b0] sm:$0xff] %vm3565, %v3476
      %3594 = vst.msk [vmem:[#allocation3 + $0x1c0] sm:$0xff] %vm3565, %v3478
      %3595 = vst.msk [vmem:[#allocation3 + $0x1d0] sm:$0xff] %vm3565, %v3480
      %3596 = vst.msk [vmem:[#allocation3 + $0x1e0] sm:$0xff] %vm3565, %v3482
      %3597 = vst.msk [vmem:[#allocation3 + $0x1f0] sm:$0xff] %vm3565, %v3484
      %3598 = vst.msk [vmem:[#allocation3 + $0x200] sm:$0xff] %vm3565, %v3486
      %3599 = vst.msk [vmem:[#allocation3 + $0x210] sm:$0xff] %vm3565, %v3488
      %3600 = vst.msk [vmem:[#allocation3 + $0x220] sm:$0xff] %vm3565, %v3490
      %3601 = vst.msk [vmem:[#allocation3 + $0x230] sm:$0xff] %vm3565, %v3492
      %3602 = vst.msk [vmem:[#allocation3 + $0x240] sm:$0xff] %vm3565, %v3494
      %3603 = vst.msk [vmem:[#allocation3 + $0x250] sm:$0xff] %vm3565, %v3496
      %3604 = vst.msk [vmem:[#allocation3 + $0x260] sm:$0xff] %vm3565, %v3498
      %3605 = vst.msk [vmem:[#allocation3 + $0x270] sm:$0xff] %vm3565, %v3500
      %3606 = vst.msk [vmem:[#allocation3 + $0x280] sm:$0xff] %vm3565, %v3502
      %3607 = vst.msk [vmem:[#allocation3 + $0x290] sm:$0xff] %vm3565, %v3504
      %3608 = vst.msk [vmem:[#allocation3 + $0x2a0] sm:$0xff] %vm3565, %v3506
      %3609 = vst.msk [vmem:[#allocation3 + $0x2b0] sm:$0xff] %vm3565, %v3508
      %3610 = vst.msk [vmem:[#allocation3 + $0x2c0] sm:$0xff] %vm3565, %v3510
      %3611 = vst.msk [vmem:[#allocation3 + $0x2d0] sm:$0xff] %vm3565, %v3512
      %3612 = vst.msk [vmem:[#allocation3 + $0x2e0] sm:$0xff] %vm3565, %v3514
      %3613 = vst.msk [vmem:[#allocation3 + $0x2f0] sm:$0xff] %vm3565, %v3516
      %v3614 = vld [vmem:[#allocation2 + $0x32] sm:$0xff]
      %v3615 = vld [vmem:[#allocation2 + $0x3a] sm:$0xff]
      %v3616 = vld [vmem:[#allocation2 + $0x42] sm:$0xff]
      %v3617 = vld [vmem:[#allocation2 + $0x4a] sm:$0xff]
      %v3618 = vld [vmem:[#allocation2 + $0x52] sm:$0xff]
      %v3619 = vld [vmem:[#allocation2 + $0x5a] sm:$0xff]
      %v3620 = vld [vmem:[#allocation2 + $0x62] sm:$0xff]
      %v3621 = vld [vmem:[#allocation2 + $0x6a] sm:$0xff]
      %v3622 = vld [vmem:[#allocation2 + $0x72] sm:$0xff]
      %v3623 = vld [vmem:[#allocation2 + $0x7a] sm:$0xff]
      %v3624 = vld [vmem:[#allocation2 + $0x82] sm:$0xff]
      %v3625 = vld [vmem:[#allocation2 + $0x8a] sm:$0xff]
      %v3626 = vld [vmem:[#allocation2 + $0x92] sm:$0xff]
      %v3627 = vld [vmem:[#allocation2 + $0x9a] sm:$0xff]
      %v3628 = vld [vmem:[#allocation2 + $0xa2] sm:$0xff]
      %v3629 = vld [vmem:[#allocation2 + $0xaa] sm:$0xff]
      %v3630 = vld [vmem:[#allocation2 + $0xb2] sm:$0xff]
      %v3631 = vld [vmem:[#allocation2 + $0xba] sm:$0xff]
      %v3632 = vld [vmem:[#allocation2 + $0xc2] sm:$0xff]
      %v3633 = vld [vmem:[#allocation2 + $0xca] sm:$0xff]
      %v3634 = vld [vmem:[#allocation2 + $0xd2] sm:$0xff]
      %v3635 = vld [vmem:[#allocation2 + $0xda] sm:$0xff]
      %v3636 = vld [vmem:[#allocation2 + $0xe2] sm:$0xff]
      %v3637 = vld [vmem:[#allocation2 + $0xea] sm:$0xff]
      %v3638 = vld [vmem:[#allocation2 + $0xf2] sm:$0xff]
      %v3639 = vld [vmem:[#allocation2 + $0xfa] sm:$0xff]
      %v3640 = vld [vmem:[#allocation2 + $0x102] sm:$0xff]
      %v3641 = vld [vmem:[#allocation2 + $0x10a] sm:$0xff]
      %v3642 = vld [vmem:[#allocation2 + $0x112] sm:$0xff]
      %v3643 = vld [vmem:[#allocation2 + $0x11a] sm:$0xff]
      %v3644 = vld [vmem:[#allocation2 + $0x122] sm:$0xff]
      %v3645 = vld [vmem:[#allocation2 + $0x12a] sm:$0xff]
      %v3646 = vld [vmem:[#allocation2 + $0x132] sm:$0xff]
      %v3647 = vld [vmem:[#allocation2 + $0x13a] sm:$0xff]
      %v3648 = vld [vmem:[#allocation2 + $0x142] sm:$0xff]
      %v3649 = vld [vmem:[#allocation2 + $0x14a] sm:$0xff]
      %v3650 = vld [vmem:[#allocation2 + $0x152] sm:$0xff]
      %v3651 = vld [vmem:[#allocation2 + $0x15a] sm:$0xff]
      %v3652 = vld [vmem:[#allocation2 + $0x162] sm:$0xff]
      %v3653 = vld [vmem:[#allocation2 + $0x16a] sm:$0xff]
      %v3654 = vld [vmem:[#allocation2 + $0x172] sm:$0xff]
      %v3655 = vld [vmem:[#allocation2 + $0x17a] sm:$0xff]
      %v3656 = vld [vmem:[#allocation2 + $0x182] sm:$0xff]
      %v3657 = vld [vmem:[#allocation2 + $0x18a] sm:$0xff]
      %v3658 = vld [vmem:[#allocation2 + $0x192] sm:$0xff]
      %v3659 = vld [vmem:[#allocation2 + $0x19a] sm:$0xff]
      %v3660 = vld [vmem:[#allocation2 + $0x1a2] sm:$0xff]
      %v3661 = vld [vmem:[#allocation2 + $0x1aa] sm:$0xff]
      %3662 = vst.msk [vmem:[#allocation3 + $0x8] sm:$0xff] %vm1437, %v3614
      %3663 = vst.msk [vmem:[#allocation3 + $0x18] sm:$0xff] %vm1437, %v3615
      %3664 = vst.msk [vmem:[#allocation3 + $0x28] sm:$0xff] %vm1437, %v3616
      %3665 = vst.msk [vmem:[#allocation3 + $0x38] sm:$0xff] %vm1437, %v3617
      %3666 = vst.msk [vmem:[#allocation3 + $0x48] sm:$0xff] %vm1437, %v3618
      %3667 = vst.msk [vmem:[#allocation3 + $0x58] sm:$0xff] %vm1437, %v3619
      %3668 = vst.msk [vmem:[#allocation3 + $0x68] sm:$0xff] %vm1437, %v3620
      %3669 = vst.msk [vmem:[#allocation3 + $0x78] sm:$0xff] %vm1437, %v3621
      %3670 = vst.msk [vmem:[#allocation3 + $0x88] sm:$0xff] %vm1437, %v3622
      %3671 = vst.msk [vmem:[#allocation3 + $0x98] sm:$0xff] %vm1437, %v3623
      %3672 = vst.msk [vmem:[#allocation3 + $0xa8] sm:$0xff] %vm1437, %v3624
      %3673 = vst.msk [vmem:[#allocation3 + $0xb8] sm:$0xff] %vm1437, %v3625
      %3674 = vst.msk [vmem:[#allocation3 + $0xc8] sm:$0xff] %vm1437, %v3626
      %3675 = vst.msk [vmem:[#allocation3 + $0xd8] sm:$0xff] %vm1437, %v3627
      %3676 = vst.msk [vmem:[#allocation3 + $0xe8] sm:$0xff] %vm1437, %v3628
      %3677 = vst.msk [vmem:[#allocation3 + $0xf8] sm:$0xff] %vm1437, %v3629
      %3678 = vst.msk [vmem:[#allocation3 + $0x108] sm:$0xff] %vm1437, %v3630
      %3679 = vst.msk [vmem:[#allocation3 + $0x118] sm:$0xff] %vm1437, %v3631
      %3680 = vst.msk [vmem:[#allocation3 + $0x128] sm:$0xff] %vm1437, %v3632
      %3681 = vst.msk [vmem:[#allocation3 + $0x138] sm:$0xff] %vm1437, %v3633
      %3682 = vst.msk [vmem:[#allocation3 + $0x148] sm:$0xff] %vm1437, %v3634
      %3683 = vst.msk [vmem:[#allocation3 + $0x158] sm:$0xff] %vm1437, %v3635
      %3684 = vst.msk [vmem:[#allocation3 + $0x168] sm:$0xff] %vm1437, %v3636
      %3685 = vst.msk [vmem:[#allocation3 + $0x178] sm:$0xff] %vm1437, %v3637
      %3686 = vst.msk [vmem:[#allocation3 + $0x188] sm:$0xff] %vm1437, %v3638
      %3687 = vst.msk [vmem:[#allocation3 + $0x198] sm:$0xff] %vm1437, %v3639
      %3688 = vst.msk [vmem:[#allocation3 + $0x1a8] sm:$0xff] %vm1437, %v3640
      %3689 = vst.msk [vmem:[#allocation3 + $0x1b8] sm:$0xff] %vm1437, %v3641
      %3690 = vst.msk [vmem:[#allocation3 + $0x1c8] sm:$0xff] %vm1437, %v3642
      %3691 = vst.msk [vmem:[#allocation3 + $0x1d8] sm:$0xff] %vm1437, %v3643
      %3692 = vst.msk [vmem:[#allocation3 + $0x1e8] sm:$0xff] %vm1437, %v3644
      %3693 = vst.msk [vmem:[#allocation3 + $0x1f8] sm:$0xff] %vm1437, %v3645
      %3694 = vst.msk [vmem:[#allocation3 + $0x208] sm:$0xff] %vm1437, %v3646
      %3695 = vst.msk [vmem:[#allocation3 + $0x218] sm:$0xff] %vm1437, %v3647
      %3696 = vst.msk [vmem:[#allocation3 + $0x228] sm:$0xff] %vm1437, %v3648
      %3697 = vst.msk [vmem:[#allocation3 + $0x238] sm:$0xff] %vm1437, %v3649
      %3698 = vst.msk [vmem:[#allocation3 + $0x248] sm:$0xff] %vm1437, %v3650
      %3699 = vst.msk [vmem:[#allocation3 + $0x258] sm:$0xff] %vm1437, %v3651
      %3700 = vst.msk [vmem:[#allocation3 + $0x268] sm:$0xff] %vm1437, %v3652
      %3701 = vst.msk [vmem:[#allocation3 + $0x278] sm:$0xff] %vm1437, %v3653
      %3702 = vst.msk [vmem:[#allocation3 + $0x288] sm:$0xff] %vm1437, %v3654
      %3703 = vst.msk [vmem:[#allocation3 + $0x298] sm:$0xff] %vm1437, %v3655
      %3704 = vst.msk [vmem:[#allocation3 + $0x2a8] sm:$0xff] %vm1437, %v3656
      %3705 = vst.msk [vmem:[#allocation3 + $0x2b8] sm:$0xff] %vm1437, %v3657
      %3706 = vst.msk [vmem:[#allocation3 + $0x2c8] sm:$0xff] %vm1437, %v3658
      %3707 = vst.msk [vmem:[#allocation3 + $0x2d8] sm:$0xff] %vm1437, %v3659
      %3708 = vst.msk [vmem:[#allocation3 + $0x2e8] sm:$0xff] %vm1437, %v3660
      %3709 = vst.msk [vmem:[#allocation3 + $0x2f8] sm:$0xff] %vm1437, %v3661
      %v3710 = vld [vmem:[#allocation3] sm:$0xff]
      %v3711 = vld [vmem:[#allocation3 + $0x8] sm:$0xff]
      %v3712 = vld [vmem:[#allocation3 + $0x10] sm:$0xff]
      %v3713 = vld [vmem:[#allocation3 + $0x18] sm:$0xff]
      %v3714 = vld [vmem:[#allocation3 + $0x20] sm:$0xff]
      %v3715 = vld [vmem:[#allocation3 + $0x28] sm:$0xff]
      %v3716 = vld [vmem:[#allocation3 + $0x30] sm:$0xff]
      %v3717 = vld [vmem:[#allocation3 + $0x38] sm:$0xff]
      %v3718 = vld [vmem:[#allocation3 + $0x40] sm:$0xff]
      %v3719 = vld [vmem:[#allocation3 + $0x48] sm:$0xff]
      %v3720 = vld [vmem:[#allocation3 + $0x50] sm:$0xff]
      %v3721 = vld [vmem:[#allocation3 + $0x58] sm:$0xff]
      %v3722 = vld [vmem:[#allocation3 + $0x60] sm:$0xff]
      %v3723 = vld [vmem:[#allocation3 + $0x68] sm:$0xff]
      %v3724 = vld [vmem:[#allocation3 + $0x70] sm:$0xff]
      %v3725 = vld [vmem:[#allocation3 + $0x78] sm:$0xff]
      %v3726 = vld [vmem:[#allocation3 + $0x80] sm:$0xff]
      %v3727 = vld [vmem:[#allocation3 + $0x88] sm:$0xff]
      %v3728 = vld [vmem:[#allocation3 + $0x90] sm:$0xff]
      %v3729 = vld [vmem:[#allocation3 + $0x98] sm:$0xff]
      %v3730 = vld [vmem:[#allocation3 + $0xa0] sm:$0xff]
      %v3731 = vld [vmem:[#allocation3 + $0xa8] sm:$0xff]
      %v3732 = vld [vmem:[#allocation3 + $0xb0] sm:$0xff]
      %v3733 = vld [vmem:[#allocation3 + $0xb8] sm:$0xff]
      %v3734 = vld [vmem:[#allocation3 + $0xc0] sm:$0xff]
      %v3735 = vld [vmem:[#allocation3 + $0xc8] sm:$0xff]
      %v3736 = vld [vmem:[#allocation3 + $0xd0] sm:$0xff]
      %v3737 = vld [vmem:[#allocation3 + $0xd8] sm:$0xff]
      %v3738 = vld [vmem:[#allocation3 + $0xe0] sm:$0xff]
      %v3739 = vld [vmem:[#allocation3 + $0xe8] sm:$0xff]
      %v3740 = vld [vmem:[#allocation3 + $0xf0] sm:$0xff]
      %v3741 = vld [vmem:[#allocation3 + $0xf8] sm:$0xff]
      %v3742 = vld [vmem:[#allocation3 + $0x100] sm:$0xff]
      %v3743 = vld [vmem:[#allocation3 + $0x108] sm:$0xff]
      %v3744 = vld [vmem:[#allocation3 + $0x110] sm:$0xff]
      %v3745 = vld [vmem:[#allocation3 + $0x118] sm:$0xff]
      %v3746 = vld [vmem:[#allocation3 + $0x120] sm:$0xff]
      %v3747 = vld [vmem:[#allocation3 + $0x128] sm:$0xff]
      %v3748 = vld [vmem:[#allocation3 + $0x130] sm:$0xff]
      %v3749 = vld [vmem:[#allocation3 + $0x138] sm:$0xff]
      %v3750 = vld [vmem:[#allocation3 + $0x140] sm:$0xff]
      %v3751 = vld [vmem:[#allocation3 + $0x148] sm:$0xff]
      %v3752 = vld [vmem:[#allocation3 + $0x150] sm:$0xff]
      %v3753 = vld [vmem:[#allocation3 + $0x158] sm:$0xff]
      %v3754 = vld [vmem:[#allocation3 + $0x160] sm:$0xff]
      %v3755 = vld [vmem:[#allocation3 + $0x168] sm:$0xff]
      %v3756 = vld [vmem:[#allocation3 + $0x170] sm:$0xff]
      %v3757 = vld [vmem:[#allocation3 + $0x178] sm:$0xff]
      %v3758 = vld [vmem:[#allocation3 + $0x180] sm:$0xff]
      %v3759 = vld [vmem:[#allocation3 + $0x188] sm:$0xff]
      %v3760 = vld [vmem:[#allocation3 + $0x190] sm:$0xff]
      %v3761 = vld [vmem:[#allocation3 + $0x198] sm:$0xff]
      %v3762 = vld [vmem:[#allocation3 + $0x1a0] sm:$0xff]
      %v3763 = vld [vmem:[#allocation3 + $0x1a8] sm:$0xff]
      %v3764 = vld [vmem:[#allocation3 + $0x1b0] sm:$0xff]
      %v3765 = vld [vmem:[#allocation3 + $0x1b8] sm:$0xff]
      %v3766 = vld [vmem:[#allocation3 + $0x1c0] sm:$0xff]
      %v3767 = vld [vmem:[#allocation3 + $0x1c8] sm:$0xff]
      %v3768 = vld [vmem:[#allocation3 + $0x1d0] sm:$0xff]
      %v3769 = vld [vmem:[#allocation3 + $0x1d8] sm:$0xff]
      %v3770 = vld [vmem:[#allocation3 + $0x1e0] sm:$0xff]
      %v3771 = vld [vmem:[#allocation3 + $0x1e8] sm:$0xff]
      %v3772 = vld [vmem:[#allocation3 + $0x1f0] sm:$0xff]
      %v3773 = vld [vmem:[#allocation3 + $0x1f8] sm:$0xff]
      %v3774 = vld [vmem:[#allocation3 + $0x200] sm:$0xff]
      %v3775 = vld [vmem:[#allocation3 + $0x208] sm:$0xff]
      %v3776 = vld [vmem:[#allocation3 + $0x210] sm:$0xff]
      %v3777 = vld [vmem:[#allocation3 + $0x218] sm:$0xff]
      %v3778 = vld [vmem:[#allocation3 + $0x220] sm:$0xff]
      %v3779 = vld [vmem:[#allocation3 + $0x228] sm:$0xff]
      %v3780 = vld [vmem:[#allocation3 + $0x230] sm:$0xff]
      %v3781 = vld [vmem:[#allocation3 + $0x238] sm:$0xff]
      %v3782 = vld [vmem:[#allocation3 + $0x240] sm:$0xff]
      %v3783 = vld [vmem:[#allocation3 + $0x248] sm:$0xff]
      %v3784 = vld [vmem:[#allocation3 + $0x250] sm:$0xff]
      %v3785 = vld [vmem:[#allocation3 + $0x258] sm:$0xff]
      %v3786 = vld [vmem:[#allocation3 + $0x260] sm:$0xff]
      %v3787 = vld [vmem:[#allocation3 + $0x268] sm:$0xff]
      %v3788 = vld [vmem:[#allocation3 + $0x270] sm:$0xff]
      %v3789 = vld [vmem:[#allocation3 + $0x278] sm:$0xff]
      %v3790 = vld [vmem:[#allocation3 + $0x280] sm:$0xff]
      %v3791 = vld [vmem:[#allocation3 + $0x288] sm:$0xff]
      %v3792 = vld [vmem:[#allocation3 + $0x290] sm:$0xff]
      %v3793 = vld [vmem:[#allocation3 + $0x298] sm:$0xff]
      %v3794 = vld [vmem:[#allocation3 + $0x2a0] sm:$0xff]
      %v3795 = vld [vmem:[#allocation3 + $0x2a8] sm:$0xff]
      %v3796 = vld [vmem:[#allocation3 + $0x2b0] sm:$0xff]
      %v3797 = vld [vmem:[#allocation3 + $0x2b8] sm:$0xff]
      %v3798 = vld [vmem:[#allocation3 + $0x2c0] sm:$0xff]
      %v3799 = vld [vmem:[#allocation3 + $0x2c8] sm:$0xff]
      %v3800 = vld [vmem:[#allocation3 + $0x2d0] sm:$0xff]
      %v3801 = vld [vmem:[#allocation3 + $0x2d8] sm:$0xff]
      %v3802 = vld [vmem:[#allocation3 + $0x2e0] sm:$0xff]
      %v3803 = vld [vmem:[#allocation3 + $0x2e8] sm:$0xff]
      %v3804 = vld [vmem:[#allocation3 + $0x2f0] sm:$0xff]
      %v3805 = vld [vmem:[#allocation3 + $0x2f8] sm:$0xff]
      %v3806 = vld [vmem:[%s5] sm:$0xff]
      %v3807 = vld [vmem:[%s5 + $0x8] sm:$0xff]
      %v3808 = vld [vmem:[%s5 + $0x10] sm:$0xff]
      %v3809 = vld [vmem:[%s5 + $0x18] sm:$0xff]
      %v3810 = vld [vmem:[%s5 + $0x20] sm:$0xff]
      %v3811 = vld [vmem:[%s5 + $0x28] sm:$0xff]
      %v3812 = vld [vmem:[%s5 + $0x30] sm:$0xff]
      %v3813 = vld [vmem:[%s5 + $0x38] sm:$0xff]
      %v3814 = vld [vmem:[%s5 + $0x40] sm:$0xff]
      %v3815 = vld [vmem:[%s5 + $0x48] sm:$0xff]
      %v3816 = vld [vmem:[%s5 + $0x50] sm:$0xff]
      %v3817 = vld [vmem:[%s5 + $0x58] sm:$0xff]
      %v3818 = vld [vmem:[%s5 + $0x60] sm:$0xff]
      %v3819 = vld [vmem:[%s5 + $0x68] sm:$0xff]
      %v3820 = vld [vmem:[%s5 + $0x70] sm:$0xff]
      %v3821 = vld [vmem:[%s5 + $0x78] sm:$0xff]
      %v3822 = vld [vmem:[%s5 + $0x80] sm:$0xff]
      %v3823 = vld [vmem:[%s5 + $0x88] sm:$0xff]
      %v3824 = vld [vmem:[%s6] sm:$0x1]
      %v3826 = vlaneseq
      %v3827 = vshrl.u32 %v3826, 7
      %v3828 = vsub.s32 0, %v3827
      %v3829 = vrot.slane %v3824, %v3828
      %v3832 = vsel %vm1437, %v3711, 0
      %v3835 = vsel %vm1437, %v3713, 0
      %v3838 = vsel %vm1437, %v3715, 0
      %v3841 = vsel %vm1437, %v3717, 0
      %v3844 = vsel %vm1437, %v3719, 0
      %v3847 = vsel %vm1437, %v3721, 0
      %v3850 = vsel %vm1437, %v3723, 0
      %v3853 = vsel %vm1437, %v3725, 0
      %v3856 = vsel %vm1437, %v3727, 0
      %v3859 = vsel %vm1437, %v3729, 0
      %v3862 = vsel %vm1437, %v3731, 0
      %v3865 = vsel %vm1437, %v3733, 0
      %v3868 = vsel %vm1437, %v3735, 0
      %v3871 = vsel %vm1437, %v3737, 0
      %v3874 = vsel %vm1437, %v3739, 0
      %v3877 = vsel %vm1437, %v3741, 0
      %v3880 = vsel %vm1437, %v3743, 0
      %v3883 = vsel %vm1437, %v3745, 0
      %v3886 = vsel %vm1437, %v3747, 0
      %v3889 = vsel %vm1437, %v3749, 0
      %v3892 = vsel %vm1437, %v3751, 0
      %v3895 = vsel %vm1437, %v3753, 0
      %v3898 = vsel %vm1437, %v3755, 0
      %v3901 = vsel %vm1437, %v3757, 0
      %v3904 = vsel %vm1437, %v3759, 0
      %v3907 = vsel %vm1437, %v3761, 0
      %v3910 = vsel %vm1437, %v3763, 0
      %v3913 = vsel %vm1437, %v3765, 0
      %v3916 = vsel %vm1437, %v3767, 0
      %v3919 = vsel %vm1437, %v3769, 0
      %v3922 = vsel %vm1437, %v3771, 0
      %v3925 = vsel %vm1437, %v3773, 0
      %v3928 = vsel %vm1437, %v3775, 0
      %v3931 = vsel %vm1437, %v3777, 0
      %v3934 = vsel %vm1437, %v3779, 0
      %v3937 = vsel %vm1437, %v3781, 0
      %v3940 = vsel %vm1437, %v3783, 0
      %v3943 = vsel %vm1437, %v3785, 0
      %v3946 = vsel %vm1437, %v3787, 0
      %v3949 = vsel %vm1437, %v3789, 0
      %v3952 = vsel %vm1437, %v3791, 0
      %v3955 = vsel %vm1437, %v3793, 0
      %v3958 = vsel %vm1437, %v3795, 0
      %v3961 = vsel %vm1437, %v3797, 0
      %v3964 = vsel %vm1437, %v3799, 0
      %v3967 = vsel %vm1437, %v3801, 0
      %v3970 = vsel %vm1437, %v3803, 0
      %v3973 = vsel %vm1437, %v3805, 0
      %3975 = vmatprep.subr.mxu0 0.0
      %3976 = vmatpush1.msra.mxu0 %v3806
      %3977 = vmatprep.subr.mxu0 0.0
      %3978 = vmatpush1.msra.mxu0 %v3807
      %3979 = vmatprep.subr.mxu0 0.0
      %3980 = vmatpush1.msra.mxu0 %v3808
      %3981 = vmatprep.subr.mxu0 0.0
      %3982 = vmatpush1.msra.mxu0 %v3809
      %3983 = vmatprep.subr.mxu0 0.0
      %3984 = vmatpush1.msra.mxu0 %v3810
      %3985 = vmatprep.subr.mxu0 0.0
      %3986 = vmatpush1.msra.mxu0 %v3811
      %3987 = vmatprep.subr.mxu0 0.0
      %3988 = vmatpush1.msra.mxu0 %v3812
      %3989 = vmatprep.subr.mxu0 0.0
      %3990 = vmatpush1.msra.mxu0 %v3813
      %3991 = vmatprep.subr.mxu0 0.0
      %3992 = vmatpush1.msra.mxu0 %v3814
      %3993 = vmatprep.subr.mxu0 0.0
      %3994 = vmatpush1.msra.mxu0 %v3815
      %3995 = vmatprep.subr.mxu0 0.0
      %3996 = vmatpush1.msra.mxu0 %v3816
      %3997 = vmatprep.subr.mxu0 0.0
      %3998 = vmatpush1.msra.mxu0 %v3817
      %3999 = vmatprep.subr.mxu0 0.0
      %4000 = vmatpush1.msra.mxu0 %v3818
      %4001 = vmatprep.subr.mxu0 0.0
      %4002 = vmatpush1.msra.mxu0 %v3819
      %4003 = vmatprep.subr.mxu0 0.0
      %4004 = vmatpush1.msra.mxu0 %v3820
      %4005 = vmatprep.subr.mxu0 0.0
      %4006 = vmatpush1.msra.mxu0 %v3821
      %4007 = vmatprep.subr.mxu0 0.0
      %4008 = vmatpush1.msra.mxu0 %v3822
      %4009 = vmatprep.subr.mxu0 0.0
      %4010 = vmatpush1.msra.mxu0 %v3823
      %4011 = vmatprep.subr.mxu0 0.0
      %4012 = vmatpush1.msra.mxu0 0.0
      %4013 = vmatprep.subr.mxu0 0.0
      %4014 = vmatpush1.msra.mxu0 0.0
      %4015 = vmatprep.subr.mxu0 0.0
      %4016 = vmatpush1.msra.mxu0 0.0
      %4017 = vmatprep.subr.mxu0 0.0
      %4018 = vmatpush1.msra.mxu0 0.0
      %4019 = vmatprep.subr.mxu0 0.0
      %4020 = vmatpush1.msra.mxu0 0.0
      %4021 = vmatprep.subr.mxu0 0.0
      %4022 = vmatpush1.msra.mxu0 0.0
      %4023 = vmatprep.subr.mxu0 0.0
      %4024 = vmatpush1.msra.mxu0 0.0
      %4025 = vmatprep.subr.mxu0 0.0
      %4026 = vmatpush1.msra.mxu0 0.0
      %4027 = vmatprep.subr.mxu0 0.0
      %4028 = vmatpush1.msra.mxu0 0.0
      %4029 = vmatprep.subr.mxu0 0.0
      %4030 = vmatpush1.msra.mxu0 0.0
      %4031 = vmatprep.subr.mxu0 0.0
      %4032 = vmatpush1.msra.mxu0 0.0
      %4033 = vmatprep.subr.mxu0 0.0
      %4034 = vmatpush1.msra.mxu0 0.0
      %4035 = vmatprep.subr.mxu0 0.0
      %4036 = vmatpush1.msra.mxu0 0.0
      %4037 = vmatprep.subr.mxu0 0.0
      %4038 = vmatpush1.msra.mxu0 0.0
      %4039 = vmatprep.mubr.f32.mxu0 %v3832
      %4040 = vmatmul.mubr.f32.gmra.mrb[0].mxu0 %v3710
      %v4041 = vpop.f32.mrb[0].mxu0
      %v4042 = vadd.f32 %v3829, %v4041
      %v4043 = vpop.f32.mrb[0].mxu0
      %4044 = vmatprep.mubr.f32.mxu0 %v3835
      %4045 = vmatmul.mubr.f32.gmra.mrb[0].mxu0 %v3712
      %v4046 = vpop.f32.mrb[0].mxu0
      %v4047 = vadd.f32 %v3829, %v4046
      %v4048 = vpop.f32.mrb[0].mxu0
      %4049 = vmatprep.mubr.f32.mxu0 %v3838
      %4050 = vmatmul.mubr.f32.gmra.mrb[0].mxu0 %v3714
      %v4051 = vpop.f32.mrb[0].mxu0
      %v4052 = vadd.f32 %v3829, %v4051
      %v4053 = vpop.f32.mrb[0].mxu0
      %4054 = vmatprep.mubr.f32.mxu0 %v3841
      %4055 = vmatmul.mubr.f32.gmra.mrb[0].mxu0 %v3716
      %v4056 = vpop.f32.mrb[0].mxu0
      %v4057 = vadd.f32 %v3829, %v4056
      %v4058 = vpop.f32.mrb[0].mxu0
      %4059 = vmatprep.mubr.f32.mxu0 %v3844
      %4060 = vmatmul.mubr.f32.gmra.mrb[0].mxu0 %v3718
      %v4061 = vpop.f32.mrb[0].mxu0
      %v4062 = vadd.f32 %v3829, %v4061
      %v4063 = vpop.f32.mrb[0].mxu0
      %4064 = vmatprep.mubr.f32.mxu0 %v3847
      %4065 = vmatmul.mubr.f32.gmra.mrb[0].mxu0 %v3720
      %v4066 = vpop.f32.mrb[0].mxu0
      %v4067 = vadd.f32 %v3829, %v4066
      %v4068 = vpop.f32.mrb[0].mxu0
      %4069 = vmatprep.mubr.f32.mxu0 %v3850
      %4070 = vmatmul.mubr.f32.gmra.mrb[0].mxu0 %v3722
      %v4071 = vpop.f32.mrb[0].mxu0
      %v4072 = vadd.f32 %v3829, %v4071
      %v4073 = vpop.f32.mrb[0].mxu0
      %4074 = vmatprep.mubr.f32.mxu0 %v3853
      %4075 = vmatmul.mubr.f32.gmra.mrb[0].mxu0 %v3724
      %v4076 = vpop.f32.mrb[0].mxu0
      %v4077 = vadd.f32 %v3829, %v4076
      %v4078 = vpop.f32.mrb[0].mxu0
      %4079 = vmatprep.mubr.f32.mxu0 %v3856
      %4080 = vmatmul.mubr.f32.gmra.mrb[0].mxu0 %v3726
      %v4081 = vpop.f32.mrb[0].mxu0
      %v4082 = vadd.f32 %v3829, %v4081
      %v4083 = vpop.f32.mrb[0].mxu0
      %4084 = vmatprep.mubr.f32.mxu0 %v3859
      %4085 = vmatmul.mubr.f32.gmra.mrb[0].mxu0 %v3728
      %v4086 = vpop.f32.mrb[0].mxu0
      %v4087 = vadd.f32 %v3829, %v4086
      %v4088 = vpop.f32.mrb[0].mxu0
      %4089 = vmatprep.mubr.f32.mxu0 %v3862
      %4090 = vmatmul.mubr.f32.gmra.mrb[0].mxu0 %v3730
      %v4091 = vpop.f32.mrb[0].mxu0
      %v4092 = vadd.f32 %v3829, %v4091
      %v4093 = vpop.f32.mrb[0].mxu0
      %4094 = vmatprep.mubr.f32.mxu0 %v3865
      %4095 = vmatmul.mubr.f32.gmra.mrb[0].mxu0 %v3732
      %v4096 = vpop.f32.mrb[0].mxu0
      %v4097 = vadd.f32 %v3829, %v4096
      %v4098 = vpop.f32.mrb[0].mxu0
      %4099 = vmatprep.mubr.f32.mxu0 %v3868
      %4100 = vmatmul.mubr.f32.gmra.mrb[0].mxu0 %v3734
      %v4101 = vpop.f32.mrb[0].mxu0
      %v4102 = vadd.f32 %v3829, %v4101
      %v4103 = vpop.f32.mrb[0].mxu0
      %4104 = vmatprep.mubr.f32.mxu0 %v3871
      %4105 = vmatmul.mubr.f32.gmra.mrb[0].mxu0 %v3736
      %v4106 = vpop.f32.mrb[0].mxu0
      %v4107 = vadd.f32 %v3829, %v4106
      %v4108 = vpop.f32.mrb[0].mxu0
      %4109 = vmatprep.mubr.f32.mxu0 %v3874
      %4110 = vmatmul.mubr.f32.gmra.mrb[0].mxu0 %v3738
      %v4111 = vpop.f32.mrb[0].mxu0
      %v4112 = vadd.f32 %v3829, %v4111
      %v4113 = vpop.f32.mrb[0].mxu0
      %4114 = vmatprep.mubr.f32.mxu0 %v3877
      %4115 = vmatmul.mubr.f32.gmra.mrb[0].mxu0 %v3740
      %v4116 = vpop.f32.mrb[0].mxu0
      %v4117 = vadd.f32 %v3829, %v4116
      %v4118 = vpop.f32.mrb[0].mxu0
      %4119 = vmatprep.mubr.f32.mxu0 %v3880
      %4120 = vmatmul.mubr.f32.gmra.mrb[0].mxu0 %v3742
      %v4121 = vpop.f32.mrb[0].mxu0
      %v4122 = vadd.f32 %v3829, %v4121
      %v4123 = vpop.f32.mrb[0].mxu0
      %4124 = vmatprep.mubr.f32.mxu0 %v3883
      %4125 = vmatmul.mubr.f32.gmra.mrb[0].mxu0 %v3744
      %v4126 = vpop.f32.mrb[0].mxu0
      %v4127 = vadd.f32 %v3829, %v4126
      %v4128 = vpop.f32.mrb[0].mxu0
      %4129 = vmatprep.mubr.f32.mxu0 %v3886
      %4130 = vmatmul.mubr.f32.gmra.mrb[0].mxu0 %v3746
      %v4131 = vpop.f32.mrb[0].mxu0
      %v4132 = vadd.f32 %v3829, %v4131
      %v4133 = vpop.f32.mrb[0].mxu0
      %4134 = vmatprep.mubr.f32.mxu0 %v3889
      %4135 = vmatmul.mubr.f32.gmra.mrb[0].mxu0 %v3748
      %v4136 = vpop.f32.mrb[0].mxu0
      %v4137 = vadd.f32 %v3829, %v4136
      %v4138 = vpop.f32.mrb[0].mxu0
      %4139 = vmatprep.mubr.f32.mxu0 %v3892
      %4140 = vmatmul.mubr.f32.gmra.mrb[0].mxu0 %v3750
      %v4141 = vpop.f32.mrb[0].mxu0
      %v4142 = vadd.f32 %v3829, %v4141
      %v4143 = vpop.f32.mrb[0].mxu0
      %4144 = vmatprep.mubr.f32.mxu0 %v3895
      %4145 = vmatmul.mubr.f32.gmra.mrb[0].mxu0 %v3752
      %v4146 = vpop.f32.mrb[0].mxu0
      %v4147 = vadd.f32 %v3829, %v4146
      %v4148 = vpop.f32.mrb[0].mxu0
      %4149 = vmatprep.mubr.f32.mxu0 %v3898
      %4150 = vmatmul.mubr.f32.gmra.mrb[0].mxu0 %v3754
      %v4151 = vpop.f32.mrb[0].mxu0
      %v4152 = vadd.f32 %v3829, %v4151
      %v4153 = vpop.f32.mrb[0].mxu0
      %4154 = vmatprep.mubr.f32.mxu0 %v3901
      %4155 = vmatmul.mubr.f32.gmra.mrb[0].mxu0 %v3756
      %v4156 = vpop.f32.mrb[0].mxu0
      %v4157 = vadd.f32 %v3829, %v4156
      %v4158 = vpop.f32.mrb[0].mxu0
      %4159 = vmatprep.mubr.f32.mxu0 %v3904
      %4160 = vmatmul.mubr.f32.gmra.mrb[0].mxu0 %v3758
      %v4161 = vpop.f32.mrb[0].mxu0
      %v4162 = vadd.f32 %v3829, %v4161
      %v4163 = vpop.f32.mrb[0].mxu0
      %4164 = vmatprep.mubr.f32.mxu0 %v3907
      %4165 = vmatmul.mubr.f32.gmra.mrb[0].mxu0 %v3760
      %v4166 = vpop.f32.mrb[0].mxu0
      %v4167 = vadd.f32 %v3829, %v4166
      %v4168 = vpop.f32.mrb[0].mxu0
      %4169 = vmatprep.mubr.f32.mxu0 %v3910
      %4170 = vmatmul.mubr.f32.gmra.mrb[0].mxu0 %v3762
      %v4171 = vpop.f32.mrb[0].mxu0
      %v4172 = vadd.f32 %v3829, %v4171
      %v4173 = vpop.f32.mrb[0].mxu0
      %4174 = vmatprep.mubr.f32.mxu0 %v3913
      %4175 = vmatmul.mubr.f32.gmra.mrb[0].mxu0 %v3764
      %v4176 = vpop.f32.mrb[0].mxu0
      %v4177 = vadd.f32 %v3829, %v4176
      %v4178 = vpop.f32.mrb[0].mxu0
      %4179 = vmatprep.mubr.f32.mxu0 %v3916
      %4180 = vmatmul.mubr.f32.gmra.mrb[0].mxu0 %v3766
      %v4181 = vpop.f32.mrb[0].mxu0
      %v4182 = vadd.f32 %v3829, %v4181
      %v4183 = vpop.f32.mrb[0].mxu0
      %4184 = vmatprep.mubr.f32.mxu0 %v3919
      %4185 = vmatmul.mubr.f32.gmra.mrb[0].mxu0 %v3768
      %v4186 = vpop.f32.mrb[0].mxu0
      %v4187 = vadd.f32 %v3829, %v4186
      %v4188 = vpop.f32.mrb[0].mxu0
      %4189 = vmatprep.mubr.f32.mxu0 %v3922
      %4190 = vmatmul.mubr.f32.gmra.mrb[0].mxu0 %v3770
      %v4191 = vpop.f32.mrb[0].mxu0
      %v4192 = vadd.f32 %v3829, %v4191
      %v4193 = vpop.f32.mrb[0].mxu0
      %4194 = vmatprep.mubr.f32.mxu0 %v3925
      %4195 = vmatmul.mubr.f32.gmra.mrb[0].mxu0 %v3772
      %v4196 = vpop.f32.mrb[0].mxu0
      %v4197 = vadd.f32 %v3829, %v4196
      %v4198 = vpop.f32.mrb[0].mxu0
      %4199 = vmatprep.mubr.f32.mxu0 %v3928
      %4200 = vmatmul.mubr.f32.gmra.mrb[0].mxu0 %v3774
      %v4201 = vpop.f32.mrb[0].mxu0
      %v4202 = vadd.f32 %v3829, %v4201
      %v4203 = vpop.f32.mrb[0].mxu0
      %4204 = vmatprep.mubr.f32.mxu0 %v3931
      %4205 = vmatmul.mubr.f32.gmra.mrb[0].mxu0 %v3776
      %v4206 = vpop.f32.mrb[0].mxu0
      %v4207 = vadd.f32 %v3829, %v4206
      %v4208 = vpop.f32.mrb[0].mxu0
      %4209 = vmatprep.mubr.f32.mxu0 %v3934
      %4210 = vmatmul.mubr.f32.gmra.mrb[0].mxu0 %v3778
      %v4211 = vpop.f32.mrb[0].mxu0
      %v4212 = vadd.f32 %v3829, %v4211
      %v4213 = vpop.f32.mrb[0].mxu0
      %4214 = vmatprep.mubr.f32.mxu0 %v3937
      %4215 = vmatmul.mubr.f32.gmra.mrb[0].mxu0 %v3780
      %v4216 = vpop.f32.mrb[0].mxu0
      %v4217 = vadd.f32 %v3829, %v4216
      %v4218 = vpop.f32.mrb[0].mxu0
      %4219 = vmatprep.mubr.f32.mxu0 %v3940
      %4220 = vmatmul.mubr.f32.gmra.mrb[0].mxu0 %v3782
      %v4221 = vpop.f32.mrb[0].mxu0
      %v4222 = vadd.f32 %v3829, %v4221
      %v4223 = vpop.f32.mrb[0].mxu0
      %4224 = vmatprep.mubr.f32.mxu0 %v3943
      %4225 = vmatmul.mubr.f32.gmra.mrb[0].mxu0 %v3784
      %v4226 = vpop.f32.mrb[0].mxu0
      %v4227 = vadd.f32 %v3829, %v4226
      %v4228 = vpop.f32.mrb[0].mxu0
      %4229 = vmatprep.mubr.f32.mxu0 %v3946
      %4230 = vmatmul.mubr.f32.gmra.mrb[0].mxu0 %v3786
      %v4231 = vpop.f32.mrb[0].mxu0
      %v4232 = vadd.f32 %v3829, %v4231
      %v4233 = vpop.f32.mrb[0].mxu0
      %4234 = vmatprep.mubr.f32.mxu0 %v3949
      %4235 = vmatmul.mubr.f32.gmra.mrb[0].mxu0 %v3788
      %v4236 = vpop.f32.mrb[0].mxu0
      %v4237 = vadd.f32 %v3829, %v4236
      %v4238 = vpop.f32.mrb[0].mxu0
      %4239 = vmatprep.mubr.f32.mxu0 %v3952
      %4240 = vmatmul.mubr.f32.gmra.mrb[0].mxu0 %v3790
      %v4241 = vpop.f32.mrb[0].mxu0
      %v4242 = vadd.f32 %v3829, %v4241
      %v4243 = vpop.f32.mrb[0].mxu0
      %4244 = vmatprep.mubr.f32.mxu0 %v3955
      %4245 = vmatmul.mubr.f32.gmra.mrb[0].mxu0 %v3792
      %v4246 = vpop.f32.mrb[0].mxu0
      %v4247 = vadd.f32 %v3829, %v4246
      %v4248 = vpop.f32.mrb[0].mxu0
      %4249 = vmatprep.mubr.f32.mxu0 %v3958
      %4250 = vmatmul.mubr.f32.gmra.mrb[0].mxu0 %v3794
      %v4251 = vpop.f32.mrb[0].mxu0
      %v4252 = vadd.f32 %v3829, %v4251
      %v4253 = vpop.f32.mrb[0].mxu0
      %4254 = vmatprep.mubr.f32.mxu0 %v3961
      %4255 = vmatmul.mubr.f32.gmra.mrb[0].mxu0 %v3796
      %v4256 = vpop.f32.mrb[0].mxu0
      %v4257 = vadd.f32 %v3829, %v4256
      %v4258 = vpop.f32.mrb[0].mxu0
      %4259 = vmatprep.mubr.f32.mxu0 %v3964
      %4260 = vmatmul.mubr.f32.gmra.mrb[0].mxu0 %v3798
      %v4261 = vpop.f32.mrb[0].mxu0
      %v4262 = vadd.f32 %v3829, %v4261
      %v4263 = vpop.f32.mrb[0].mxu0
      %4264 = vmatprep.mubr.f32.mxu0 %v3967
      %4265 = vmatmul.mubr.f32.gmra.mrb[0].mxu0 %v3800
      %v4266 = vpop.f32.mrb[0].mxu0
      %v4267 = vadd.f32 %v3829, %v4266
      %v4268 = vpop.f32.mrb[0].mxu0
      %4269 = vmatprep.mubr.f32.mxu0 %v3970
      %4270 = vmatmul.mubr.f32.gmra.mrb[0].mxu0 %v3802
      %v4271 = vpop.f32.mrb[0].mxu0
      %v4272 = vadd.f32 %v3829, %v4271
      %v4273 = vpop.f32.mrb[0].mxu0
      %4274 = vmatprep.mubr.f32.mxu0 %v3973
      %4275 = vmatmul.mubr.f32.gmra.mrb[0].mxu0 %v3804
      %v4276 = vpop.f32.mrb[0].mxu0
      %v4277 = vadd.f32 %v3829, %v4276
      %v4278 = vpop.f32.mrb[0].mxu0
      %4279 = vdwg.mxu0
      %v4280 = vmax.f32 %v4042, 0.0
      %v4281 = vmax.f32 %v4047, 0.0
      %v4282 = vmax.f32 %v4052, 0.0
      %v4283 = vmax.f32 %v4057, 0.0
      %v4284 = vmax.f32 %v4062, 0.0
      %v4285 = vmax.f32 %v4067, 0.0
      %v4286 = vmax.f32 %v4072, 0.0
      %v4287 = vmax.f32 %v4077, 0.0
      %v4288 = vmax.f32 %v4082, 0.0
      %v4289 = vmax.f32 %v4087, 0.0
      %v4290 = vmax.f32 %v4092, 0.0
      %v4291 = vmax.f32 %v4097, 0.0
      %v4292 = vmax.f32 %v4102, 0.0
      %v4293 = vmax.f32 %v4107, 0.0
      %v4294 = vmax.f32 %v4112, 0.0
      %v4295 = vmax.f32 %v4117, 0.0
      %v4296 = vmax.f32 %v4122, 0.0
      %v4297 = vmax.f32 %v4127, 0.0
      %v4298 = vmax.f32 %v4132, 0.0
      %v4299 = vmax.f32 %v4137, 0.0
      %v4300 = vmax.f32 %v4142, 0.0
      %v4301 = vmax.f32 %v4147, 0.0
      %v4302 = vmax.f32 %v4152, 0.0
      %v4303 = vmax.f32 %v4157, 0.0
      %v4304 = vmax.f32 %v4162, 0.0
      %v4305 = vmax.f32 %v4167, 0.0
      %v4306 = vmax.f32 %v4172, 0.0
      %v4307 = vmax.f32 %v4177, 0.0
      %v4308 = vmax.f32 %v4182, 0.0
      %v4309 = vmax.f32 %v4187, 0.0
      %v4310 = vmax.f32 %v4192, 0.0
      %v4311 = vmax.f32 %v4197, 0.0
      %v4312 = vmax.f32 %v4202, 0.0
      %v4313 = vmax.f32 %v4207, 0.0
      %v4314 = vmax.f32 %v4212, 0.0
      %v4315 = vmax.f32 %v4217, 0.0
      %v4316 = vmax.f32 %v4222, 0.0
      %v4317 = vmax.f32 %v4227, 0.0
      %v4318 = vmax.f32 %v4232, 0.0
      %v4319 = vmax.f32 %v4237, 0.0
      %v4320 = vmax.f32 %v4242, 0.0
      %v4321 = vmax.f32 %v4247, 0.0
      %v4322 = vmax.f32 %v4252, 0.0
      %v4323 = vmax.f32 %v4257, 0.0
      %v4324 = vmax.f32 %v4262, 0.0
      %v4325 = vmax.f32 %v4267, 0.0
      %v4326 = vmax.f32 %v4272, 0.0
      %v4327 = vmax.f32 %v4277, 0.0
      %v4328 = vld [vmem:[%s7] sm:$0xff]
      %v4329 = vld [vmem:[%s7 + $0x8] sm:$0xff]
      %v4330 = vld [vmem:[%s8] sm:$0x1]
      %v4332 = vlaneseq
      %v4333 = vshrl.u32 %v4332, 7
      %v4334 = vsub.s32 0, %v4333
      %v4335 = vrot.slane %v4330, %v4334
      %v4338 = vsel %vm1437, %v4280, 0
      %v4341 = vsel %vm1437, %v4281, 0
      %v4344 = vsel %vm1437, %v4282, 0
      %v4347 = vsel %vm1437, %v4283, 0
      %v4350 = vsel %vm1437, %v4284, 0
      %v4353 = vsel %vm1437, %v4285, 0
      %v4356 = vsel %vm1437, %v4286, 0
      %v4359 = vsel %vm1437, %v4287, 0
      %v4362 = vsel %vm1437, %v4288, 0
      %v4365 = vsel %vm1437, %v4289, 0
      %v4368 = vsel %vm1437, %v4290, 0
      %v4371 = vsel %vm1437, %v4291, 0
      %v4374 = vsel %vm1437, %v4292, 0
      %v4377 = vsel %vm1437, %v4293, 0
      %v4380 = vsel %vm1437, %v4294, 0
      %v4383 = vsel %vm1437, %v4295, 0
      %v4386 = vsel %vm1437, %v4296, 0
      %v4389 = vsel %vm1437, %v4297, 0
      %v4392 = vsel %vm1437, %v4298, 0
      %v4395 = vsel %vm1437, %v4299, 0
      %v4398 = vsel %vm1437, %v4300, 0
      %v4401 = vsel %vm1437, %v4301, 0
      %v4404 = vsel %vm1437, %v4302, 0
      %v4407 = vsel %vm1437, %v4303, 0
      %v4410 = vsel %vm1437, %v4304, 0
      %v4413 = vsel %vm1437, %v4305, 0
      %v4416 = vsel %vm1437, %v4306, 0
      %v4419 = vsel %vm1437, %v4307, 0
      %v4422 = vsel %vm1437, %v4308, 0
      %v4425 = vsel %vm1437, %v4309, 0
      %v4428 = vsel %vm1437, %v4310, 0
      %v4431 = vsel %vm1437, %v4311, 0
      %v4434 = vsel %vm1437, %v4312, 0
      %v4437 = vsel %vm1437, %v4313, 0
      %v4440 = vsel %vm1437, %v4314, 0
      %v4443 = vsel %vm1437, %v4315, 0
      %v4446 = vsel %vm1437, %v4316, 0
      %v4449 = vsel %vm1437, %v4317, 0
      %v4452 = vsel %vm1437, %v4318, 0
      %v4455 = vsel %vm1437, %v4319, 0
      %v4458 = vsel %vm1437, %v4320, 0
      %v4461 = vsel %vm1437, %v4321, 0
      %v4464 = vsel %vm1437, %v4322, 0
      %v4467 = vsel %vm1437, %v4323, 0
      %v4470 = vsel %vm1437, %v4324, 0
      %v4473 = vsel %vm1437, %v4325, 0
      %v4476 = vsel %vm1437, %v4326, 0
      %v4479 = vsel %vm1437, %v4327, 0
      %4481 = vmatprep.subr.mxu0 0.0
      %4482 = vmatpush1.msra.mxu0 %v4328
      %4483 = vmatprep.subr.mxu0 0.0
      %4484 = vmatpush1.msra.mxu0 %v4329
      %4485 = vmatprep.subr.mxu0 0.0
      %4486 = vmatpush1.msra.mxu0 0.0
      %4487 = vmatprep.subr.mxu0 0.0
      %4488 = vmatpush1.msra.mxu0 0.0
      %4489 = vmatprep.subr.mxu0 0.0
      %4490 = vmatpush1.msra.mxu0 0.0
      %4491 = vmatprep.subr.mxu0 0.0
      %4492 = vmatpush1.msra.mxu0 0.0
      %4493 = vmatprep.subr.mxu0 0.0
      %4494 = vmatpush1.msra.mxu0 0.0
      %4495 = vmatprep.subr.mxu0 0.0
      %4496 = vmatpush1.msra.mxu0 0.0
      %4497 = vmatprep.subr.mxu0 0.0
      %4498 = vmatpush1.msra.mxu0 0.0
      %4499 = vmatprep.subr.mxu0 0.0
      %4500 = vmatpush1.msra.mxu0 0.0
      %4501 = vmatprep.subr.mxu0 0.0
      %4502 = vmatpush1.msra.mxu0 0.0
      %4503 = vmatprep.subr.mxu0 0.0
      %4504 = vmatpush1.msra.mxu0 0.0
      %4505 = vmatprep.subr.mxu0 0.0
      %4506 = vmatpush1.msra.mxu0 0.0
      %4507 = vmatprep.subr.mxu0 0.0
      %4508 = vmatpush1.msra.mxu0 0.0
      %4509 = vmatprep.subr.mxu0 0.0
      %4510 = vmatpush1.msra.mxu0 0.0
      %4511 = vmatprep.subr.mxu0 0.0
      %4512 = vmatpush1.msra.mxu0 0.0
      %4513 = vmatprep.subr.mxu0 0.0
      %4514 = vmatpush1.msra.mxu0 0.0
      %4515 = vmatprep.subr.mxu0 0.0
      %4516 = vmatpush1.msra.mxu0 0.0
      %4517 = vmatprep.subr.mxu0 0.0
      %4518 = vmatpush1.msra.mxu0 0.0
      %4519 = vmatprep.subr.mxu0 0.0
      %4520 = vmatpush1.msra.mxu0 0.0
      %4521 = vmatprep.subr.mxu0 0.0
      %4522 = vmatpush1.msra.mxu0 0.0
      %4523 = vmatprep.subr.mxu0 0.0
      %4524 = vmatpush1.msra.mxu0 0.0
      %4525 = vmatprep.subr.mxu0 0.0
      %4526 = vmatpush1.msra.mxu0 0.0
      %4527 = vmatprep.subr.mxu0 0.0
      %4528 = vmatpush1.msra.mxu0 0.0
      %4529 = vmatprep.subr.mxu0 0.0
      %4530 = vmatpush1.msra.mxu0 0.0
      %4531 = vmatprep.subr.mxu0 0.0
      %4532 = vmatpush1.msra.mxu0 0.0
      %4533 = vmatprep.subr.mxu0 0.0
      %4534 = vmatpush1.msra.mxu0 0.0
      %4535 = vmatprep.subr.mxu0 0.0
      %4536 = vmatpush1.msra.mxu0 0.0
      %4537 = vmatprep.subr.mxu0 0.0
      %4538 = vmatpush1.msra.mxu0 0.0
      %4539 = vmatprep.subr.mxu0 0.0
      %4540 = vmatpush1.msra.mxu0 0.0
      %4541 = vmatprep.subr.mxu0 0.0
      %4542 = vmatpush1.msra.mxu0 0.0
      %4543 = vmatprep.subr.mxu0 0.0
      %4544 = vmatpush1.msra.mxu0 0.0
      %4545 = vmatprep.mubr.f32.mxu0 0.0
      %4546 = vmatmul.mubr.f32.gmra.mrb[0].mxu0 %v4338
      %v4547 = vpop.f32.mrb[0].mxu0
      %v4548 = vadd.f32 %v4335, %v4547
      %v4549 = vpop.f32.mrb[0].mxu0
      %4550 = vmatprep.mubr.f32.mxu0 0.0
      %4551 = vmatmul.mubr.f32.gmra.mrb[0].mxu0 %v4341
      %v4552 = vpop.f32.mrb[0].mxu0
      %v4553 = vadd.f32 %v4335, %v4552
      %v4554 = vpop.f32.mrb[0].mxu0
      %4555 = vmatprep.mubr.f32.mxu0 0.0
      %4556 = vmatmul.mubr.f32.gmra.mrb[0].mxu0 %v4344
      %v4557 = vpop.f32.mrb[0].mxu0
      %v4558 = vadd.f32 %v4335, %v4557
      %v4559 = vpop.f32.mrb[0].mxu0
      %4560 = vmatprep.mubr.f32.mxu0 0.0
      %4561 = vmatmul.mubr.f32.gmra.mrb[0].mxu0 %v4347
      %v4562 = vpop.f32.mrb[0].mxu0
      %v4563 = vadd.f32 %v4335, %v4562
      %v4564 = vpop.f32.mrb[0].mxu0
      %4565 = vmatprep.mubr.f32.mxu0 0.0
      %4566 = vmatmul.mubr.f32.gmra.mrb[0].mxu0 %v4350
      %v4567 = vpop.f32.mrb[0].mxu0
      %v4568 = vadd.f32 %v4335, %v4567
      %v4569 = vpop.f32.mrb[0].mxu0
      %4570 = vmatprep.mubr.f32.mxu0 0.0
      %4571 = vmatmul.mubr.f32.gmra.mrb[0].mxu0 %v4353
      %v4572 = vpop.f32.mrb[0].mxu0
      %v4573 = vadd.f32 %v4335, %v4572
      %v4574 = vpop.f32.mrb[0].mxu0
      %4575 = vmatprep.mubr.f32.mxu0 0.0
      %4576 = vmatmul.mubr.f32.gmra.mrb[0].mxu0 %v4356
      %v4577 = vpop.f32.mrb[0].mxu0
      %v4578 = vadd.f32 %v4335, %v4577
      %v4579 = vpop.f32.mrb[0].mxu0
      %4580 = vmatprep.mubr.f32.mxu0 0.0
      %4581 = vmatmul.mubr.f32.gmra.mrb[0].mxu0 %v4359
      %v4582 = vpop.f32.mrb[0].mxu0
      %v4583 = vadd.f32 %v4335, %v4582
      %v4584 = vpop.f32.mrb[0].mxu0
      %4585 = vmatprep.mubr.f32.mxu0 0.0
      %4586 = vmatmul.mubr.f32.gmra.mrb[0].mxu0 %v4362
      %v4587 = vpop.f32.mrb[0].mxu0
      %v4588 = vadd.f32 %v4335, %v4587
      %v4589 = vpop.f32.mrb[0].mxu0
      %4590 = vmatprep.mubr.f32.mxu0 0.0
      %4591 = vmatmul.mubr.f32.gmra.mrb[0].mxu0 %v4365
      %v4592 = vpop.f32.mrb[0].mxu0
      %v4593 = vadd.f32 %v4335, %v4592
      %v4594 = vpop.f32.mrb[0].mxu0
      %4595 = vmatprep.mubr.f32.mxu0 0.0
      %4596 = vmatmul.mubr.f32.gmra.mrb[0].mxu0 %v4368
      %v4597 = vpop.f32.mrb[0].mxu0
      %v4598 = vadd.f32 %v4335, %v4597
      %v4599 = vpop.f32.mrb[0].mxu0
      %4600 = vmatprep.mubr.f32.mxu0 0.0
      %4601 = vmatmul.mubr.f32.gmra.mrb[0].mxu0 %v4371
      %v4602 = vpop.f32.mrb[0].mxu0
      %v4603 = vadd.f32 %v4335, %v4602
      %v4604 = vpop.f32.mrb[0].mxu0
      %4605 = vmatprep.mubr.f32.mxu0 0.0
      %4606 = vmatmul.mubr.f32.gmra.mrb[0].mxu0 %v4374
      %v4607 = vpop.f32.mrb[0].mxu0
      %v4608 = vadd.f32 %v4335, %v4607
      %v4609 = vpop.f32.mrb[0].mxu0
      %4610 = vmatprep.mubr.f32.mxu0 0.0
      %4611 = vmatmul.mubr.f32.gmra.mrb[0].mxu0 %v4377
      %v4612 = vpop.f32.mrb[0].mxu0
      %v4613 = vadd.f32 %v4335, %v4612
      %v4614 = vpop.f32.mrb[0].mxu0
      %4615 = vmatprep.mubr.f32.mxu0 0.0
      %4616 = vmatmul.mubr.f32.gmra.mrb[0].mxu0 %v4380
      %v4617 = vpop.f32.mrb[0].mxu0
      %v4618 = vadd.f32 %v4335, %v4617
      %v4619 = vpop.f32.mrb[0].mxu0
      %4620 = vmatprep.mubr.f32.mxu0 0.0
      %4621 = vmatmul.mubr.f32.gmra.mrb[0].mxu0 %v4383
      %v4622 = vpop.f32.mrb[0].mxu0
      %v4623 = vadd.f32 %v4335, %v4622
      %v4624 = vpop.f32.mrb[0].mxu0
      %4625 = vmatprep.mubr.f32.mxu0 0.0
      %4626 = vmatmul.mubr.f32.gmra.mrb[0].mxu0 %v4386
      %v4627 = vpop.f32.mrb[0].mxu0
      %v4628 = vadd.f32 %v4335, %v4627
      %v4629 = vpop.f32.mrb[0].mxu0
      %4630 = vmatprep.mubr.f32.mxu0 0.0
      %4631 = vmatmul.mubr.f32.gmra.mrb[0].mxu0 %v4389
      %v4632 = vpop.f32.mrb[0].mxu0
      %v4633 = vadd.f32 %v4335, %v4632
      %v4634 = vpop.f32.mrb[0].mxu0
      %4635 = vmatprep.mubr.f32.mxu0 0.0
      %4636 = vmatmul.mubr.f32.gmra.mrb[0].mxu0 %v4392
      %v4637 = vpop.f32.mrb[0].mxu0
      %v4638 = vadd.f32 %v4335, %v4637
      %v4639 = vpop.f32.mrb[0].mxu0
      %4640 = vmatprep.mubr.f32.mxu0 0.0
      %4641 = vmatmul.mubr.f32.gmra.mrb[0].mxu0 %v4395
      %v4642 = vpop.f32.mrb[0].mxu0
      %v4643 = vadd.f32 %v4335, %v4642
      %v4644 = vpop.f32.mrb[0].mxu0
      %4645 = vmatprep.mubr.f32.mxu0 0.0
      %4646 = vmatmul.mubr.f32.gmra.mrb[0].mxu0 %v4398
      %v4647 = vpop.f32.mrb[0].mxu0
      %v4648 = vadd.f32 %v4335, %v4647
      %v4649 = vpop.f32.mrb[0].mxu0
      %4650 = vmatprep.mubr.f32.mxu0 0.0
      %4651 = vmatmul.mubr.f32.gmra.mrb[0].mxu0 %v4401
      %v4652 = vpop.f32.mrb[0].mxu0
      %v4653 = vadd.f32 %v4335, %v4652
      %v4654 = vpop.f32.mrb[0].mxu0
      %4655 = vmatprep.mubr.f32.mxu0 0.0
      %4656 = vmatmul.mubr.f32.gmra.mrb[0].mxu0 %v4404
      %v4657 = vpop.f32.mrb[0].mxu0
      %v4658 = vadd.f32 %v4335, %v4657
      %v4659 = vpop.f32.mrb[0].mxu0
      %4660 = vmatprep.mubr.f32.mxu0 0.0
      %4661 = vmatmul.mubr.f32.gmra.mrb[0].mxu0 %v4407
      %v4662 = vpop.f32.mrb[0].mxu0
      %v4663 = vadd.f32 %v4335, %v4662
      %v4664 = vpop.f32.mrb[0].mxu0
      %4665 = vmatprep.mubr.f32.mxu0 0.0
      %4666 = vmatmul.mubr.f32.gmra.mrb[0].mxu0 %v4410
      %v4667 = vpop.f32.mrb[0].mxu0
      %v4668 = vadd.f32 %v4335, %v4667
      %v4669 = vpop.f32.mrb[0].mxu0
      %4670 = vmatprep.mubr.f32.mxu0 0.0
      %4671 = vmatmul.mubr.f32.gmra.mrb[0].mxu0 %v4413
      %v4672 = vpop.f32.mrb[0].mxu0
      %v4673 = vadd.f32 %v4335, %v4672
      %v4674 = vpop.f32.mrb[0].mxu0
      %4675 = vmatprep.mubr.f32.mxu0 0.0
      %4676 = vmatmul.mubr.f32.gmra.mrb[0].mxu0 %v4416
      %v4677 = vpop.f32.mrb[0].mxu0
      %v4678 = vadd.f32 %v4335, %v4677
      %v4679 = vpop.f32.mrb[0].mxu0
      %4680 = vmatprep.mubr.f32.mxu0 0.0
      %4681 = vmatmul.mubr.f32.gmra.mrb[0].mxu0 %v4419
      %v4682 = vpop.f32.mrb[0].mxu0
      %v4683 = vadd.f32 %v4335, %v4682
      %v4684 = vpop.f32.mrb[0].mxu0
      %4685 = vmatprep.mubr.f32.mxu0 0.0
      %4686 = vmatmul.mubr.f32.gmra.mrb[0].mxu0 %v4422
      %v4687 = vpop.f32.mrb[0].mxu0
      %v4688 = vadd.f32 %v4335, %v4687
      %v4689 = vpop.f32.mrb[0].mxu0
      %4690 = vmatprep.mubr.f32.mxu0 0.0
      %4691 = vmatmul.mubr.f32.gmra.mrb[0].mxu0 %v4425
      %v4692 = vpop.f32.mrb[0].mxu0
      %v4693 = vadd.f32 %v4335, %v4692
      %v4694 = vpop.f32.mrb[0].mxu0
      %4695 = vmatprep.mubr.f32.mxu0 0.0
      %4696 = vmatmul.mubr.f32.gmra.mrb[0].mxu0 %v4428
      %v4697 = vpop.f32.mrb[0].mxu0
      %v4698 = vadd.f32 %v4335, %v4697
      %v4699 = vpop.f32.mrb[0].mxu0
      %4700 = vmatprep.mubr.f32.mxu0 0.0
      %4701 = vmatmul.mubr.f32.gmra.mrb[0].mxu0 %v4431
      %v4702 = vpop.f32.mrb[0].mxu0
      %v4703 = vadd.f32 %v4335, %v4702
      %v4704 = vpop.f32.mrb[0].mxu0
      %4705 = vmatprep.mubr.f32.mxu0 0.0
      %4706 = vmatmul.mubr.f32.gmra.mrb[0].mxu0 %v4434
      %v4707 = vpop.f32.mrb[0].mxu0
      %v4708 = vadd.f32 %v4335, %v4707
      %v4709 = vpop.f32.mrb[0].mxu0
      %4710 = vmatprep.mubr.f32.mxu0 0.0
      %4711 = vmatmul.mubr.f32.gmra.mrb[0].mxu0 %v4437
      %v4712 = vpop.f32.mrb[0].mxu0
      %v4713 = vadd.f32 %v4335, %v4712
      %v4714 = vpop.f32.mrb[0].mxu0
      %4715 = vmatprep.mubr.f32.mxu0 0.0
      %4716 = vmatmul.mubr.f32.gmra.mrb[0].mxu0 %v4440
      %v4717 = vpop.f32.mrb[0].mxu0
      %v4718 = vadd.f32 %v4335, %v4717
      %v4719 = vpop.f32.mrb[0].mxu0
      %4720 = vmatprep.mubr.f32.mxu0 0.0
      %4721 = vmatmul.mubr.f32.gmra.mrb[0].mxu0 %v4443
      %v4722 = vpop.f32.mrb[0].mxu0
      %v4723 = vadd.f32 %v4335, %v4722
      %v4724 = vpop.f32.mrb[0].mxu0
      %4725 = vmatprep.mubr.f32.mxu0 0.0
      %4726 = vmatmul.mubr.f32.gmra.mrb[0].mxu0 %v4446
      %v4727 = vpop.f32.mrb[0].mxu0
      %v4728 = vadd.f32 %v4335, %v4727
      %v4729 = vpop.f32.mrb[0].mxu0
      %4730 = vmatprep.mubr.f32.mxu0 0.0
      %4731 = vmatmul.mubr.f32.gmra.mrb[0].mxu0 %v4449
      %v4732 = vpop.f32.mrb[0].mxu0
      %v4733 = vadd.f32 %v4335, %v4732
      %v4734 = vpop.f32.mrb[0].mxu0
      %4735 = vmatprep.mubr.f32.mxu0 0.0
      %4736 = vmatmul.mubr.f32.gmra.mrb[0].mxu0 %v4452
      %v4737 = vpop.f32.mrb[0].mxu0
      %v4738 = vadd.f32 %v4335, %v4737
      %v4739 = vpop.f32.mrb[0].mxu0
      %4740 = vmatprep.mubr.f32.mxu0 0.0
      %4741 = vmatmul.mubr.f32.gmra.mrb[0].mxu0 %v4455
      %v4742 = vpop.f32.mrb[0].mxu0
      %v4743 = vadd.f32 %v4335, %v4742
      %v4744 = vpop.f32.mrb[0].mxu0
      %4745 = vmatprep.mubr.f32.mxu0 0.0
      %4746 = vmatmul.mubr.f32.gmra.mrb[0].mxu0 %v4458
      %v4747 = vpop.f32.mrb[0].mxu0
      %v4748 = vadd.f32 %v4335, %v4747
      %v4749 = vpop.f32.mrb[0].mxu0
      %4750 = vmatprep.mubr.f32.mxu0 0.0
      %4751 = vmatmul.mubr.f32.gmra.mrb[0].mxu0 %v4461
      %v4752 = vpop.f32.mrb[0].mxu0
      %v4753 = vadd.f32 %v4335, %v4752
      %v4754 = vpop.f32.mrb[0].mxu0
      %4755 = vmatprep.mubr.f32.mxu0 0.0
      %4756 = vmatmul.mubr.f32.gmra.mrb[0].mxu0 %v4464
      %v4757 = vpop.f32.mrb[0].mxu0
      %v4758 = vadd.f32 %v4335, %v4757
      %v4759 = vpop.f32.mrb[0].mxu0
      %4760 = vmatprep.mubr.f32.mxu0 0.0
      %4761 = vmatmul.mubr.f32.gmra.mrb[0].mxu0 %v4467
      %v4762 = vpop.f32.mrb[0].mxu0
      %v4763 = vadd.f32 %v4335, %v4762
      %v4764 = vpop.f32.mrb[0].mxu0
      %4765 = vmatprep.mubr.f32.mxu0 0.0
      %4766 = vmatmul.mubr.f32.gmra.mrb[0].mxu0 %v4470
      %v4767 = vpop.f32.mrb[0].mxu0
      %v4768 = vadd.f32 %v4335, %v4767
      %v4769 = vpop.f32.mrb[0].mxu0
      %4770 = vmatprep.mubr.f32.mxu0 0.0
      %4771 = vmatmul.mubr.f32.gmra.mrb[0].mxu0 %v4473
      %v4772 = vpop.f32.mrb[0].mxu0
      %v4773 = vadd.f32 %v4335, %v4772
      %v4774 = vpop.f32.mrb[0].mxu0
      %4775 = vmatprep.mubr.f32.mxu0 0.0
      %4776 = vmatmul.mubr.f32.gmra.mrb[0].mxu0 %v4476
      %v4777 = vpop.f32.mrb[0].mxu0
      %v4778 = vadd.f32 %v4335, %v4777
      %v4779 = vpop.f32.mrb[0].mxu0
      %4780 = vmatprep.mubr.f32.mxu0 0.0
      %4781 = vmatmul.mubr.f32.gmra.mrb[0].mxu0 %v4479
      %v4782 = vpop.f32.mrb[0].mxu0
      %v4783 = vadd.f32 %v4335, %v4782
      %v4784 = vpop.f32.mrb[0].mxu0
      %4785 = vdwg.mxu0
      %v4786 = vld [vmem:[%s2] sm:$0xff]
      %v4787 = vld [vmem:[%s2 + $0x8] sm:$0xff]
      %v4788 = vld [vmem:[%s2 + $0x10] sm:$0xff]
      %v4789 = vld [vmem:[%s2 + $0x18] sm:$0xff]
      %v4790 = vld [vmem:[%s2 + $0x20] sm:$0xff]
      %v4791 = vld [vmem:[%s2 + $0x28] sm:$0xff]
      %v4792 = vld [vmem:[%s2 + $0x30] sm:$0xff]
      %v4793 = vld [vmem:[%s2 + $0x38] sm:$0xff]
      %v4794 = vld [vmem:[%s2 + $0x40] sm:$0xff]
      %v4795 = vld [vmem:[%s2 + $0x48] sm:$0xff]
      %v4796 = vld [vmem:[%s2 + $0x50] sm:$0xff]
      %v4797 = vld [vmem:[%s2 + $0x58] sm:$0xff]
      %v4798 = vld [vmem:[%s2 + $0x60] sm:$0xff]
      %v4799 = vld [vmem:[%s2 + $0x68] sm:$0xff]
      %v4800 = vld [vmem:[%s2 + $0x70] sm:$0xff]
      %v4801 = vld [vmem:[%s2 + $0x78] sm:$0xff]
      %v4802 = vld [vmem:[%s2 + $0x80] sm:$0xff]
      %v4803 = vld [vmem:[%s2 + $0x88] sm:$0xff]
      %v4804 = vld [vmem:[%s2 + $0x90] sm:$0xff]
      %v4805 = vld [vmem:[%s2 + $0x98] sm:$0xff]
      %v4806 = vld [vmem:[%s2 + $0xa0] sm:$0xff]
      %v4807 = vld [vmem:[%s2 + $0xa8] sm:$0xff]
      %v4808 = vld [vmem:[%s2 + $0xb0] sm:$0xff]
      %v4809 = vld [vmem:[%s2 + $0xb8] sm:$0xff]
      %v4810 = vld [vmem:[%s2 + $0xc0] sm:$0xff]
      %v4811 = vld [vmem:[%s2 + $0xc8] sm:$0xff]
      %v4812 = vld [vmem:[%s2 + $0xd0] sm:$0xff]
      %v4813 = vld [vmem:[%s2 + $0xd8] sm:$0xff]
      %v4814 = vld [vmem:[%s2 + $0xe0] sm:$0xff]
      %v4815 = vld [vmem:[%s2 + $0xe8] sm:$0xff]
      %v4816 = vld [vmem:[%s2 + $0xf0] sm:$0xff]
      %v4817 = vld [vmem:[%s2 + $0xf8] sm:$0xff]
      %v4818 = vld [vmem:[%s2 + $0x100] sm:$0xff]
      %v4819 = vld [vmem:[%s2 + $0x108] sm:$0xff]
      %v4820 = vld [vmem:[%s2 + $0x110] sm:$0xff]
      %v4821 = vld [vmem:[%s2 + $0x118] sm:$0xff]
      %v4822 = vld [vmem:[%s2 + $0x120] sm:$0xff]
      %v4823 = vld [vmem:[%s2 + $0x128] sm:$0xff]
      %v4824 = vld [vmem:[%s2 + $0x130] sm:$0xff]
      %v4825 = vld [vmem:[%s2 + $0x138] sm:$0xff]
      %v4826 = vld [vmem:[%s2 + $0x140] sm:$0xff]
      %v4827 = vld [vmem:[%s2 + $0x148] sm:$0xff]
      %v4828 = vld [vmem:[%s2 + $0x150] sm:$0xff]
      %v4829 = vld [vmem:[%s2 + $0x158] sm:$0xff]
      %v4830 = vld [vmem:[%s2 + $0x160] sm:$0xff]
      %v4831 = vld [vmem:[%s2 + $0x168] sm:$0xff]
      %v4832 = vld [vmem:[%s2 + $0x170] sm:$0xff]
      %v4833 = vld [vmem:[%s2 + $0x178] sm:$0xff]
      %4835 = vset.pattern.permute.xlu0 0
      %4836 = vperm.xlu0 %4835, %v4786
      %v4837 = vpop.permute.xlu0 %4836
      %4840 = vset.pattern.permute.xlu0 0
      %4841 = vperm.xlu0 %4840, %v4787
      %v4842 = vpop.permute.xlu0 %4841
      %4845 = vset.pattern.permute.xlu0 0
      %4846 = vperm.xlu0 %4845, %v4788
      %v4847 = vpop.permute.xlu0 %4846
      %4850 = vset.pattern.permute.xlu0 0
      %4851 = vperm.xlu0 %4850, %v4789
      %v4852 = vpop.permute.xlu0 %4851
      %4855 = vset.pattern.permute.xlu0 0
      %4856 = vperm.xlu0 %4855, %v4790
      %v4857 = vpop.permute.xlu0 %4856
      %4860 = vset.pattern.permute.xlu0 0
      %4861 = vperm.xlu0 %4860, %v4791
      %v4862 = vpop.permute.xlu0 %4861
      %4865 = vset.pattern.permute.xlu0 0
      %4866 = vperm.xlu0 %4865, %v4792
      %v4867 = vpop.permute.xlu0 %4866
      %4870 = vset.pattern.permute.xlu0 0
      %4871 = vperm.xlu0 %4870, %v4793
      %v4872 = vpop.permute.xlu0 %4871
      %4875 = vset.pattern.permute.xlu0 0
      %4876 = vperm.xlu0 %4875, %v4794
      %v4877 = vpop.permute.xlu0 %4876
      %4880 = vset.pattern.permute.xlu0 0
      %4881 = vperm.xlu0 %4880, %v4795
      %v4882 = vpop.permute.xlu0 %4881
      %4885 = vset.pattern.permute.xlu0 0
      %4886 = vperm.xlu0 %4885, %v4796
      %v4887 = vpop.permute.xlu0 %4886
      %4890 = vset.pattern.permute.xlu0 0
      %4891 = vperm.xlu0 %4890, %v4797
      %v4892 = vpop.permute.xlu0 %4891
      %4895 = vset.pattern.permute.xlu0 0
      %4896 = vperm.xlu0 %4895, %v4798
      %v4897 = vpop.permute.xlu0 %4896
      %4900 = vset.pattern.permute.xlu0 0
      %4901 = vperm.xlu0 %4900, %v4799
      %v4902 = vpop.permute.xlu0 %4901
      %4905 = vset.pattern.permute.xlu0 0
      %4906 = vperm.xlu0 %4905, %v4800
      %v4907 = vpop.permute.xlu0 %4906
      %4910 = vset.pattern.permute.xlu0 0
      %4911 = vperm.xlu0 %4910, %v4801
      %v4912 = vpop.permute.xlu0 %4911
      %4915 = vset.pattern.permute.xlu0 0
      %4916 = vperm.xlu0 %4915, %v4802
      %v4917 = vpop.permute.xlu0 %4916
      %4920 = vset.pattern.permute.xlu0 0
      %4921 = vperm.xlu0 %4920, %v4803
      %v4922 = vpop.permute.xlu0 %4921
      %4925 = vset.pattern.permute.xlu0 0
      %4926 = vperm.xlu0 %4925, %v4804
      %v4927 = vpop.permute.xlu0 %4926
      %4930 = vset.pattern.permute.xlu0 0
      %4931 = vperm.xlu0 %4930, %v4805
      %v4932 = vpop.permute.xlu0 %4931
      %4935 = vset.pattern.permute.xlu0 0
      %4936 = vperm.xlu0 %4935, %v4806
      %v4937 = vpop.permute.xlu0 %4936
      %4940 = vset.pattern.permute.xlu0 0
      %4941 = vperm.xlu0 %4940, %v4807
      %v4942 = vpop.permute.xlu0 %4941
      %4945 = vset.pattern.permute.xlu0 0
      %4946 = vperm.xlu0 %4945, %v4808
      %v4947 = vpop.permute.xlu0 %4946
      %4950 = vset.pattern.permute.xlu0 0
      %4951 = vperm.xlu0 %4950, %v4809
      %v4952 = vpop.permute.xlu0 %4951
      %4955 = vset.pattern.permute.xlu0 0
      %4956 = vperm.xlu0 %4955, %v4810
      %v4957 = vpop.permute.xlu0 %4956
      %4960 = vset.pattern.permute.xlu0 0
      %4961 = vperm.xlu0 %4960, %v4811
      %v4962 = vpop.permute.xlu0 %4961
      %4965 = vset.pattern.permute.xlu0 0
      %4966 = vperm.xlu0 %4965, %v4812
      %v4967 = vpop.permute.xlu0 %4966
      %4970 = vset.pattern.permute.xlu0 0
      %4971 = vperm.xlu0 %4970, %v4813
      %v4972 = vpop.permute.xlu0 %4971
      %4975 = vset.pattern.permute.xlu0 0
      %4976 = vperm.xlu0 %4975, %v4814
      %v4977 = vpop.permute.xlu0 %4976
      %4980 = vset.pattern.permute.xlu0 0
      %4981 = vperm.xlu0 %4980, %v4815
      %v4982 = vpop.permute.xlu0 %4981
      %4985 = vset.pattern.permute.xlu0 0
      %4986 = vperm.xlu0 %4985, %v4816
      %v4987 = vpop.permute.xlu0 %4986
      %4990 = vset.pattern.permute.xlu0 0
      %4991 = vperm.xlu0 %4990, %v4817
      %v4992 = vpop.permute.xlu0 %4991
      %4995 = vset.pattern.permute.xlu0 0
      %4996 = vperm.xlu0 %4995, %v4818
      %v4997 = vpop.permute.xlu0 %4996
      %5000 = vset.pattern.permute.xlu0 0
      %5001 = vperm.xlu0 %5000, %v4819
      %v5002 = vpop.permute.xlu0 %5001
      %5005 = vset.pattern.permute.xlu0 0
      %5006 = vperm.xlu0 %5005, %v4820
      %v5007 = vpop.permute.xlu0 %5006
      %5010 = vset.pattern.permute.xlu0 0
      %5011 = vperm.xlu0 %5010, %v4821
      %v5012 = vpop.permute.xlu0 %5011
      %5015 = vset.pattern.permute.xlu0 0
      %5016 = vperm.xlu0 %5015, %v4822
      %v5017 = vpop.permute.xlu0 %5016
      %5020 = vset.pattern.permute.xlu0 0
      %5021 = vperm.xlu0 %5020, %v4823
      %v5022 = vpop.permute.xlu0 %5021
      %5025 = vset.pattern.permute.xlu0 0
      %5026 = vperm.xlu0 %5025, %v4824
      %v5027 = vpop.permute.xlu0 %5026
      %5030 = vset.pattern.permute.xlu0 0
      %5031 = vperm.xlu0 %5030, %v4825
      %v5032 = vpop.permute.xlu0 %5031
      %5035 = vset.pattern.permute.xlu0 0
      %5036 = vperm.xlu0 %5035, %v4826
      %v5037 = vpop.permute.xlu0 %5036
      %5040 = vset.pattern.permute.xlu0 0
      %5041 = vperm.xlu0 %5040, %v4827
      %v5042 = vpop.permute.xlu0 %5041
      %5045 = vset.pattern.permute.xlu0 0
      %5046 = vperm.xlu0 %5045, %v4828
      %v5047 = vpop.permute.xlu0 %5046
      %5050 = vset.pattern.permute.xlu0 0
      %5051 = vperm.xlu0 %5050, %v4829
      %v5052 = vpop.permute.xlu0 %5051
      %5055 = vset.pattern.permute.xlu0 0
      %5056 = vperm.xlu0 %5055, %v4830
      %v5057 = vpop.permute.xlu0 %5056
      %5060 = vset.pattern.permute.xlu0 0
      %5061 = vperm.xlu0 %5060, %v4831
      %v5062 = vpop.permute.xlu0 %5061
      %5065 = vset.pattern.permute.xlu0 0
      %5066 = vperm.xlu0 %5065, %v4832
      %v5067 = vpop.permute.xlu0 %5066
      %5070 = vset.pattern.permute.xlu0 0
      %5071 = vperm.xlu0 %5070, %v4833
      %v5072 = vpop.permute.xlu0 %5071
      %v5074 = vmul.f32 %v4280, %v4837
      %v5075 = vmul.f32 %v4281, %v4842
      %v5076 = vmul.f32 %v4282, %v4847
      %v5077 = vmul.f32 %v4283, %v4852
      %v5078 = vmul.f32 %v4284, %v4857
      %v5079 = vmul.f32 %v4285, %v4862
      %v5080 = vmul.f32 %v4286, %v4867
      %v5081 = vmul.f32 %v4287, %v4872
      %v5082 = vmul.f32 %v4288, %v4877
      %v5083 = vmul.f32 %v4289, %v4882
      %v5084 = vmul.f32 %v4290, %v4887
      %v5085 = vmul.f32 %v4291, %v4892
      %v5086 = vmul.f32 %v4292, %v4897
      %v5087 = vmul.f32 %v4293, %v4902
      %v5088 = vmul.f32 %v4294, %v4907
      %v5089 = vmul.f32 %v4295, %v4912
      %v5090 = vmul.f32 %v4296, %v4917
      %v5091 = vmul.f32 %v4297, %v4922
      %v5092 = vmul.f32 %v4298, %v4927
      %v5093 = vmul.f32 %v4299, %v4932
      %v5094 = vmul.f32 %v4300, %v4937
      %v5095 = vmul.f32 %v4301, %v4942
      %v5096 = vmul.f32 %v4302, %v4947
      %v5097 = vmul.f32 %v4303, %v4952
      %v5098 = vmul.f32 %v4304, %v4957
      %v5099 = vmul.f32 %v4305, %v4962
      %v5100 = vmul.f32 %v4306, %v4967
      %v5101 = vmul.f32 %v4307, %v4972
      %v5102 = vmul.f32 %v4308, %v4977
      %v5103 = vmul.f32 %v4309, %v4982
      %v5104 = vmul.f32 %v4310, %v4987
      %v5105 = vmul.f32 %v4311, %v4992
      %v5106 = vmul.f32 %v4312, %v4997
      %v5107 = vmul.f32 %v4313, %v5002
      %v5108 = vmul.f32 %v4314, %v5007
      %v5109 = vmul.f32 %v4315, %v5012
      %v5110 = vmul.f32 %v4316, %v5017
      %v5111 = vmul.f32 %v4317, %v5022
      %v5112 = vmul.f32 %v4318, %v5027
      %v5113 = vmul.f32 %v4319, %v5032
      %v5114 = vmul.f32 %v4320, %v5037
      %v5115 = vmul.f32 %v4321, %v5042
      %v5116 = vmul.f32 %v4322, %v5047
      %v5117 = vmul.f32 %v4323, %v5052
      %v5118 = vmul.f32 %v4324, %v5057
      %v5119 = vmul.f32 %v4325, %v5062
      %v5120 = vmul.f32 %v4326, %v5067
      %v5121 = vmul.f32 %v4327, %v5072
      %v5122 = vsel %vm1437, %v5074, 0.0
      %v5123 = vsel %vm1437, %v5075, 0.0
      %v5124 = vadd.f32 %v5122, %v5123
      %v5125 = vsel %vm1437, %v5076, 0.0
      %v5126 = vadd.f32 %v5124, %v5125
      %v5127 = vsel %vm1437, %v5077, 0.0
      %v5128 = vadd.f32 %v5126, %v5127
      %v5129 = vsel %vm1437, %v5078, 0.0
      %v5130 = vadd.f32 %v5128, %v5129
      %v5131 = vsel %vm1437, %v5079, 0.0
      %v5132 = vadd.f32 %v5130, %v5131
      %v5133 = vsel %vm1437, %v5080, 0.0
      %v5134 = vadd.f32 %v5132, %v5133
      %v5135 = vsel %vm1437, %v5081, 0.0
      %v5136 = vadd.f32 %v5134, %v5135
      %v5137 = vsel %vm1437, %v5082, 0.0
      %v5138 = vadd.f32 %v5136, %v5137
      %v5139 = vsel %vm1437, %v5083, 0.0
      %v5140 = vadd.f32 %v5138, %v5139
      %v5141 = vsel %vm1437, %v5084, 0.0
      %v5142 = vadd.f32 %v5140, %v5141
      %v5143 = vsel %vm1437, %v5085, 0.0
      %v5144 = vadd.f32 %v5142, %v5143
      %v5145 = vsel %vm1437, %v5086, 0.0
      %v5146 = vadd.f32 %v5144, %v5145
      %v5147 = vsel %vm1437, %v5087, 0.0
      %v5148 = vadd.f32 %v5146, %v5147
      %v5149 = vsel %vm1437, %v5088, 0.0
      %v5150 = vadd.f32 %v5148, %v5149
      %v5151 = vsel %vm1437, %v5089, 0.0
      %v5152 = vadd.f32 %v5150, %v5151
      %v5153 = vsel %vm1437, %v5090, 0.0
      %v5154 = vadd.f32 %v5152, %v5153
      %v5155 = vsel %vm1437, %v5091, 0.0
      %v5156 = vadd.f32 %v5154, %v5155
      %v5157 = vsel %vm1437, %v5092, 0.0
      %v5158 = vadd.f32 %v5156, %v5157
      %v5159 = vsel %vm1437, %v5093, 0.0
      %v5160 = vadd.f32 %v5158, %v5159
      %v5161 = vsel %vm1437, %v5094, 0.0
      %v5162 = vadd.f32 %v5160, %v5161
      %v5163 = vsel %vm1437, %v5095, 0.0
      %v5164 = vadd.f32 %v5162, %v5163
      %v5165 = vsel %vm1437, %v5096, 0.0
      %v5166 = vadd.f32 %v5164, %v5165
      %v5167 = vsel %vm1437, %v5097, 0.0
      %v5168 = vadd.f32 %v5166, %v5167
      %v5169 = vsel %vm1437, %v5098, 0.0
      %v5170 = vadd.f32 %v5168, %v5169
      %v5171 = vsel %vm1437, %v5099, 0.0
      %v5172 = vadd.f32 %v5170, %v5171
      %v5173 = vsel %vm1437, %v5100, 0.0
      %v5174 = vadd.f32 %v5172, %v5173
      %v5175 = vsel %vm1437, %v5101, 0.0
      %v5176 = vadd.f32 %v5174, %v5175
      %v5177 = vsel %vm1437, %v5102, 0.0
      %v5178 = vadd.f32 %v5176, %v5177
      %v5179 = vsel %vm1437, %v5103, 0.0
      %v5180 = vadd.f32 %v5178, %v5179
      %v5181 = vsel %vm1437, %v5104, 0.0
      %v5182 = vadd.f32 %v5180, %v5181
      %v5183 = vsel %vm1437, %v5105, 0.0
      %v5184 = vadd.f32 %v5182, %v5183
      %v5185 = vsel %vm1437, %v5106, 0.0
      %v5186 = vadd.f32 %v5184, %v5185
      %v5187 = vsel %vm1437, %v5107, 0.0
      %v5188 = vadd.f32 %v5186, %v5187
      %v5189 = vsel %vm1437, %v5108, 0.0
      %v5190 = vadd.f32 %v5188, %v5189
      %v5191 = vsel %vm1437, %v5109, 0.0
      %v5192 = vadd.f32 %v5190, %v5191
      %v5193 = vsel %vm1437, %v5110, 0.0
      %v5194 = vadd.f32 %v5192, %v5193
      %v5195 = vsel %vm1437, %v5111, 0.0
      %v5196 = vadd.f32 %v5194, %v5195
      %v5197 = vsel %vm1437, %v5112, 0.0
      %v5198 = vadd.f32 %v5196, %v5197
      %v5199 = vsel %vm1437, %v5113, 0.0
      %v5200 = vadd.f32 %v5198, %v5199
      %v5201 = vsel %vm1437, %v5114, 0.0
      %v5202 = vadd.f32 %v5200, %v5201
      %v5203 = vsel %vm1437, %v5115, 0.0
      %v5204 = vadd.f32 %v5202, %v5203
      %v5205 = vsel %vm1437, %v5116, 0.0
      %v5206 = vadd.f32 %v5204, %v5205
      %v5207 = vsel %vm1437, %v5117, 0.0
      %v5208 = vadd.f32 %v5206, %v5207
      %v5209 = vsel %vm1437, %v5118, 0.0
      %v5210 = vadd.f32 %v5208, %v5209
      %v5211 = vsel %vm1437, %v5119, 0.0
      %v5212 = vadd.f32 %v5210, %v5211
      %v5213 = vsel %vm1437, %v5120, 0.0
      %v5214 = vadd.f32 %v5212, %v5213
      %v5215 = vsel %vm1437, %v5121, 0.0
      %v5216 = vadd.f32 %v5214, %v5215
      %v5217 = vrot.slane %v5216, 4
      %v5218 = vadd.f32 %v5216, %v5217
      %v5219 = vrot.slane %v5218, 2
      %v5220 = vadd.f32 %v5218, %v5219
      %v5221 = vrot.slane %v5220, 1
      %v5222 = vadd.f32 %v5220, %v5221
      %v5223 = vmul.f32 %v5222, 0.00390625
      %v5225 = vsel %vm1437, %v5223, 0
      %5227 = vmatprep.subr.mxu0 0.0
      %5228 = vmatpush1.msra.mxu0 %v4328
      %5229 = vmatprep.subr.mxu0 0.0
      %5230 = vmatpush1.msra.mxu0 %v4329
      %5231 = vmatprep.subr.mxu0 0.0
      %5232 = vmatpush1.msra.mxu0 0.0
      %5233 = vmatprep.subr.mxu0 0.0
      %5234 = vmatpush1.msra.mxu0 0.0
      %5235 = vmatprep.subr.mxu0 0.0
      %5236 = vmatpush1.msra.mxu0 0.0
      %5237 = vmatprep.subr.mxu0 0.0
      %5238 = vmatpush1.msra.mxu0 0.0
      %5239 = vmatprep.subr.mxu0 0.0
      %5240 = vmatpush1.msra.mxu0 0.0
      %5241 = vmatprep.subr.mxu0 0.0
      %5242 = vmatpush1.msra.mxu0 0.0
      %5243 = vmatprep.subr.mxu0 0.0
      %5244 = vmatpush1.msra.mxu0 0.0
      %5245 = vmatprep.subr.mxu0 0.0
      %5246 = vmatpush1.msra.mxu0 0.0
      %5247 = vmatprep.subr.mxu0 0.0
      %5248 = vmatpush1.msra.mxu0 0.0
      %5249 = vmatprep.subr.mxu0 0.0
      %5250 = vmatpush1.msra.mxu0 0.0
      %5251 = vmatprep.subr.mxu0 0.0
      %5252 = vmatpush1.msra.mxu0 0.0
      %5253 = vmatprep.subr.mxu0 0.0
      %5254 = vmatpush1.msra.mxu0 0.0
      %5255 = vmatprep.subr.mxu0 0.0
      %5256 = vmatpush1.msra.mxu0 0.0
      %5257 = vmatprep.subr.mxu0 0.0
      %5258 = vmatpush1.msra.mxu0 0.0
      %5259 = vmatprep.subr.mxu0 0.0
      %5260 = vmatpush1.msra.mxu0 0.0
      %5261 = vmatprep.subr.mxu0 0.0
      %5262 = vmatpush1.msra.mxu0 0.0
      %5263 = vmatprep.subr.mxu0 0.0
      %5264 = vmatpush1.msra.mxu0 0.0
      %5265 = vmatprep.subr.mxu0 0.0
      %5266 = vmatpush1.msra.mxu0 0.0
      %5267 = vmatprep.subr.mxu0 0.0
      %5268 = vmatpush1.msra.mxu0 0.0
      %5269 = vmatprep.subr.mxu0 0.0
      %5270 = vmatpush1.msra.mxu0 0.0
      %5271 = vmatprep.subr.mxu0 0.0
      %5272 = vmatpush1.msra.mxu0 0.0
      %5273 = vmatprep.subr.mxu0 0.0
      %5274 = vmatpush1.msra.mxu0 0.0
      %5275 = vmatprep.subr.mxu0 0.0
      %5276 = vmatpush1.msra.mxu0 0.0
      %5277 = vmatprep.subr.mxu0 0.0
      %5278 = vmatpush1.msra.mxu0 0.0
      %5279 = vmatprep.subr.mxu0 0.0
      %5280 = vmatpush1.msra.mxu0 0.0
      %5281 = vmatprep.subr.mxu0 0.0
      %5282 = vmatpush1.msra.mxu0 0.0
      %5283 = vmatprep.subr.mxu0 0.0
      %5284 = vmatpush1.msra.mxu0 0.0
      %5285 = vmatprep.subr.mxu0 0.0
      %5286 = vmatpush1.msra.mxu0 0.0
      %5287 = vmatprep.subr.mxu0 0.0
      %5288 = vmatpush1.msra.mxu0 0.0
      %5289 = vmatprep.subr.mxu0 0.0
      %5290 = vmatpush1.msra.mxu0 0.0
      %5291 = vmatprep.mubr.f32.mxu0 0.0
      %5292 = vmatmul.mubr.f32.gmra.mrb[0].mxu0 %v5225
      %v5293 = vpop.f32.mrb[0].mxu0
      %v5294 = vadd.f32 %v4330, %v5293
      %v5295 = vpop.f32.mrb[0].mxu0
      %5296 = vdwg.mxu0
      %v5297 = vld [vmem:[%s9] sm:$0xff]
      %v5298 = vld [vmem:[%s9 + $0x8] sm:$0xff]
      %v5299 = vld [vmem:[%s9 + $0x10] sm:$0xff]
      %v5300 = vld [vmem:[%s9 + $0x18] sm:$0xff]
      %v5301 = vld [vmem:[%s9 + $0x20] sm:$0xff]
      %v5302 = vld [vmem:[%s9 + $0x28] sm:$0xff]
      %v5303 = vld [vmem:[%s9 + $0x30] sm:$0xff]
      %v5304 = vld [vmem:[%s9 + $0x38] sm:$0xff]
      %v5306 = vsel %vm459, %v5294, 0
      %5308 = vmatprep.subr.mxu0 0.0
      %5309 = vmatpush1.msra.mxu0 %v5297
      %5310 = vmatprep.subr.mxu0 0.0
      %5311 = vmatpush1.msra.mxu0 %v5298
      %5312 = vmatprep.subr.mxu0 0.0
      %5313 = vmatpush1.msra.mxu0 %v5299
      %5314 = vmatprep.subr.mxu0 0.0
      %5315 = vmatpush1.msra.mxu0 %v5300
      %5316 = vmatprep.subr.mxu0 0.0
      %5317 = vmatpush1.msra.mxu0 %v5301
      %5318 = vmatprep.subr.mxu0 0.0
      %5319 = vmatpush1.msra.mxu0 %v5302
      %5320 = vmatprep.subr.mxu0 0.0
      %5321 = vmatpush1.msra.mxu0 %v5303
      %5322 = vmatprep.subr.mxu0 0.0
      %5323 = vmatpush1.msra.mxu0 %v5304
      %5324 = vmatprep.subr.mxu0 0.0
      %5325 = vmatpush1.msra.mxu0 0.0
      %5326 = vmatprep.subr.mxu0 0.0
      %5327 = vmatpush1.msra.mxu0 0.0
      %5328 = vmatprep.subr.mxu0 0.0
      %5329 = vmatpush1.msra.mxu0 0.0
      %5330 = vmatprep.subr.mxu0 0.0
      %5331 = vmatpush1.msra.mxu0 0.0
      %5332 = vmatprep.subr.mxu0 0.0
      %5333 = vmatpush1.msra.mxu0 0.0
      %5334 = vmatprep.subr.mxu0 0.0
      %5335 = vmatpush1.msra.mxu0 0.0
      %5336 = vmatprep.subr.mxu0 0.0
      %5337 = vmatpush1.msra.mxu0 0.0
      %5338 = vmatprep.subr.mxu0 0.0
      %5339 = vmatpush1.msra.mxu0 0.0
      %5340 = vmatprep.subr.mxu0 0.0
      %5341 = vmatpush1.msra.mxu0 0.0
      %5342 = vmatprep.subr.mxu0 0.0
      %5343 = vmatpush1.msra.mxu0 0.0
      %5344 = vmatprep.subr.mxu0 0.0
      %5345 = vmatpush1.msra.mxu0 0.0
      %5346 = vmatprep.subr.mxu0 0.0
      %5347 = vmatpush1.msra.mxu0 0.0
      %5348 = vmatprep.subr.mxu0 0.0
      %5349 = vmatpush1.msra.mxu0 0.0
      %5350 = vmatprep.subr.mxu0 0.0
      %5351 = vmatpush1.msra.mxu0 0.0
      %5352 = vmatprep.subr.mxu0 0.0
      %5353 = vmatpush1.msra.mxu0 0.0
      %5354 = vmatprep.subr.mxu0 0.0
      %5355 = vmatpush1.msra.mxu0 0.0
      %5356 = vmatprep.subr.mxu0 0.0
      %5357 = vmatpush1.msra.mxu0 0.0
      %5358 = vmatprep.subr.mxu0 0.0
      %5359 = vmatpush1.msra.mxu0 0.0
      %5360 = vmatprep.subr.mxu0 0.0
      %5361 = vmatpush1.msra.mxu0 0.0
      %5362 = vmatprep.subr.mxu0 0.0
      %5363 = vmatpush1.msra.mxu0 0.0
      %5364 = vmatprep.subr.mxu0 0.0
      %5365 = vmatpush1.msra.mxu0 0.0
      %5366 = vmatprep.subr.mxu0 0.0
      %5367 = vmatpush1.msra.mxu0 0.0
      %5368 = vmatprep.subr.mxu0 0.0
      %5369 = vmatpush1.msra.mxu0 0.0
      %5370 = vmatprep.subr.mxu0 0.0
      %5371 = vmatpush1.msra.mxu0 0.0
      %5372 = vmatprep.mubr.f32.mxu0 0.0
      %5373 = vmatmul.mubr.f32.gmra.mrb[0].mxu0 %v5306
      %v5374 = vpop.f32.mrb[0].mxu0
      %v5375 = vadd.f32 0.0, %v5374
      %v5376 = vpop.f32.mrb[0].mxu0
      %5377 = vdwg.mxu0
      %v5378 = vmax.f32 %v5375, 0.0
      %v5379 = vld [vmem:[%s10] sm:$0xf]
      %vm5380 = vcmask 31744
      %v5382 = vsel %vm5380, %v5378, 0
      %vm5384 = vcmask 1043456
      %v5386 = vsel %vm5384, %v5379, 0
      %5388 = vmatprep.subr.mxu0 0.0
      %5389 = vmatpush1.msra.mxu0 %v5386
      %5390 = vmatprep.subr.mxu0 0.0
      %5391 = vmatpush1.msra.mxu0 0.0
      %5392 = vmatprep.subr.mxu0 0.0
      %5393 = vmatpush1.msra.mxu0 0.0
      %5394 = vmatprep.subr.mxu0 0.0
      %5395 = vmatpush1.msra.mxu0 0.0
      %5396 = vmatprep.subr.mxu0 0.0
      %5397 = vmatpush1.msra.mxu0 0.0
      %5398 = vmatprep.subr.mxu0 0.0
      %5399 = vmatpush1.msra.mxu0 0.0
      %5400 = vmatprep.subr.mxu0 0.0
      %5401 = vmatpush1.msra.mxu0 0.0
      %5402 = vmatprep.subr.mxu0 0.0
      %5403 = vmatpush1.msra.mxu0 0.0
      %5404 = vmatprep.subr.mxu0 0.0
      %5405 = vmatpush1.msra.mxu0 0.0
      %5406 = vmatprep.subr.mxu0 0.0
      %5407 = vmatpush1.msra.mxu0 0.0
      %5408 = vmatprep.subr.mxu0 0.0
      %5409 = vmatpush1.msra.mxu0 0.0
      %5410 = vmatprep.subr.mxu0 0.0
      %5411 = vmatpush1.msra.mxu0 0.0
      %5412 = vmatprep.subr.mxu0 0.0
      %5413 = vmatpush1.msra.mxu0 0.0
      %5414 = vmatprep.subr.mxu0 0.0
      %5415 = vmatpush1.msra.mxu0 0.0
      %5416 = vmatprep.subr.mxu0 0.0
      %5417 = vmatpush1.msra.mxu0 0.0
      %5418 = vmatprep.subr.mxu0 0.0
      %5419 = vmatpush1.msra.mxu0 0.0
      %5420 = vmatprep.subr.mxu0 0.0
      %5421 = vmatpush1.msra.mxu0 0.0
      %5422 = vmatprep.subr.mxu0 0.0
      %5423 = vmatpush1.msra.mxu0 0.0
      %5424 = vmatprep.subr.mxu0 0.0
      %5425 = vmatpush1.msra.mxu0 0.0
      %5426 = vmatprep.subr.mxu0 0.0
      %5427 = vmatpush1.msra.mxu0 0.0
      %5428 = vmatprep.subr.mxu0 0.0
      %5429 = vmatpush1.msra.mxu0 0.0
      %5430 = vmatprep.subr.mxu0 0.0
      %5431 = vmatpush1.msra.mxu0 0.0
      %5432 = vmatprep.subr.mxu0 0.0
      %5433 = vmatpush1.msra.mxu0 0.0
      %5434 = vmatprep.subr.mxu0 0.0
      %5435 = vmatpush1.msra.mxu0 0.0
      %5436 = vmatprep.subr.mxu0 0.0
      %5437 = vmatpush1.msra.mxu0 0.0
      %5438 = vmatprep.subr.mxu0 0.0
      %5439 = vmatpush1.msra.mxu0 0.0
      %5440 = vmatprep.subr.mxu0 0.0
      %5441 = vmatpush1.msra.mxu0 0.0
      %5442 = vmatprep.subr.mxu0 0.0
      %5443 = vmatpush1.msra.mxu0 0.0
      %5444 = vmatprep.subr.mxu0 0.0
      %5445 = vmatpush1.msra.mxu0 0.0
      %5446 = vmatprep.subr.mxu0 0.0
      %5447 = vmatpush1.msra.mxu0 0.0
      %5448 = vmatprep.subr.mxu0 0.0
      %5449 = vmatpush1.msra.mxu0 0.0
      %5450 = vmatprep.subr.mxu0 0.0
      %5451 = vmatpush1.msra.mxu0 0.0
      %5452 = vmatprep.mubr.f32.mxu0 0.0
      %5453 = vmatmul.mubr.f32.gmra.mrb[0].mxu0 %v5382
      %v5454 = vpop.f32.mrb[0].mxu0
      %v5455 = vadd.f32 0.0, %v5454
      %v5456 = vpop.f32.mrb[0].mxu0
      %5457 = vdwg.mxu0
      %v5458 = vsub.f32 0.0, %v5455
      %v5459 = vmul.f32 %v5458, 1.442695
      %v5460 = vpow.pop %v5459
      %v5461 = vadd.f32 %v5460, 1.0
      %v5462 = vrcp.pop %v5461
      %v5463 = vmul.f32 1.0, %v5462
      %v5464 = vld [vmem:[%s381 + $0x19] sm:$0xff]
      %v5465 = vld [vmem:[%s381 + $0x21] sm:$0xff]
      %v5466 = vld [vmem:[%s381 + $0x29] sm:$0xff]
      %v5467 = vld [vmem:[%s381 + $0x31] sm:$0xff]
      %v5468 = vld [vmem:[%s381 + $0x39] sm:$0xff]
      %v5469 = vld [vmem:[%s381 + $0x41] sm:$0xff]
      %v5470 = vld [vmem:[%s381 + $0x49] sm:$0xff]
      %v5471 = vld [vmem:[%s381 + $0x51] sm:$0xff]
      %v5472 = vld [vmem:[%s381 + $0x59] sm:$0xff]
      %v5473 = vld [vmem:[%s381 + $0x61] sm:$0xff]
      %v5474 = vld [vmem:[%s381 + $0x69] sm:$0xff]
      %v5475 = vld [vmem:[%s381 + $0x71] sm:$0xff]
      %v5476 = vld [vmem:[%s381 + $0x79] sm:$0xff]
      %v5477 = vld [vmem:[%s381 + $0x81] sm:$0xff]
      %v5478 = vld [vmem:[%s381 + $0x89] sm:$0xff]
      %v5479 = vld [vmem:[%s381 + $0x91] sm:$0xff]
      %v5480 = vld [vmem:[%s381 + $0x99] sm:$0xff]
      %v5481 = vld [vmem:[%s381 + $0xa1] sm:$0xff]
      %v5482 = vld [vmem:[%s381 + $0xa9] sm:$0xff]
      %v5483 = vld [vmem:[%s381 + $0xb1] sm:$0xff]
      %v5484 = vld [vmem:[%s381 + $0xb9] sm:$0xff]
      %v5485 = vld [vmem:[%s381 + $0xc1] sm:$0xff]
      %v5486 = vld [vmem:[%s381 + $0xc9] sm:$0xff]
      %v5487 = vld [vmem:[%s381 + $0xd1] sm:$0xff]
      %v5488 = vld [vmem:[%s381 + $0xd9] sm:$0xff]
      %v5489 = vld [vmem:[%s381 + $0xe1] sm:$0xff]
      %v5490 = vld [vmem:[%s381 + $0xe9] sm:$0xff]
      %v5491 = vld [vmem:[%s381 + $0xf1] sm:$0xff]
      %v5492 = vld [vmem:[%s381 + $0xf9] sm:$0xff]
      %v5493 = vld [vmem:[%s381 + $0x101] sm:$0xff]
      %v5494 = vld [vmem:[%s381 + $0x109] sm:$0xff]
      %v5495 = vld [vmem:[%s381 + $0x111] sm:$0xff]
      %v5496 = vld [vmem:[%s381 + $0x119] sm:$0xff]
      %v5497 = vld [vmem:[%s381 + $0x121] sm:$0xff]
      %v5498 = vld [vmem:[%s381 + $0x129] sm:$0xff]
      %v5499 = vld [vmem:[%s381 + $0x131] sm:$0xff]
      %v5500 = vld [vmem:[%s381 + $0x139] sm:$0xff]
      %v5501 = vld [vmem:[%s381 + $0x141] sm:$0xff]
      %v5502 = vld [vmem:[%s381 + $0x149] sm:$0xff]
      %v5503 = vld [vmem:[%s381 + $0x151] sm:$0xff]
      %v5504 = vld [vmem:[%s381 + $0x159] sm:$0xff]
      %v5505 = vld [vmem:[%s381 + $0x161] sm:$0xff]
      %v5506 = vld [vmem:[%s381 + $0x169] sm:$0xff]
      %v5507 = vld [vmem:[%s381 + $0x171] sm:$0xff]
      %v5508 = vld [vmem:[%s381 + $0x179] sm:$0xff]
      %v5509 = vld [vmem:[%s381 + $0x181] sm:$0xff]
      %v5510 = vld [vmem:[%s381 + $0x189] sm:$0xff]
      %v5511 = vld [vmem:[%s381 + $0x191] sm:$0xff]
      %v5512 = vlaneseq
      %v5513 = vshrl.u32 %v5512, 7
      %v5514 = vsub.s32 0, %v5513
      %v5515 = vrot.slane %v5463, %v5514
      %v5516 = vmul.f32 %v4548, %v5515
      %v5517 = vmul.f32 %v4553, %v5515
      %v5518 = vmul.f32 %v4558, %v5515
      %v5519 = vmul.f32 %v4563, %v5515
      %v5520 = vmul.f32 %v4568, %v5515
      %v5521 = vmul.f32 %v4573, %v5515
      %v5522 = vmul.f32 %v4578, %v5515
      %v5523 = vmul.f32 %v4583, %v5515
      %v5524 = vmul.f32 %v4588, %v5515
      %v5525 = vmul.f32 %v4593, %v5515
      %v5526 = vmul.f32 %v4598, %v5515
      %v5527 = vmul.f32 %v4603, %v5515
      %v5528 = vmul.f32 %v4608, %v5515
      %v5529 = vmul.f32 %v4613, %v5515
      %v5530 = vmul.f32 %v4618, %v5515
      %v5531 = vmul.f32 %v4623, %v5515
      %v5532 = vmul.f32 %v4628, %v5515
      %v5533 = vmul.f32 %v4633, %v5515
      %v5534 = vmul.f32 %v4638, %v5515
      %v5535 = vmul.f32 %v4643, %v5515
      %v5536 = vmul.f32 %v4648, %v5515
      %v5537 = vmul.f32 %v4653, %v5515
      %v5538 = vmul.f32 %v4658, %v5515
      %v5539 = vmul.f32 %v4663, %v5515
      %v5540 = vmul.f32 %v4668, %v5515
      %v5541 = vmul.f32 %v4673, %v5515
      %v5542 = vmul.f32 %v4678, %v5515
      %v5543 = vmul.f32 %v4683, %v5515
      %v5544 = vmul.f32 %v4688, %v5515
      %v5545 = vmul.f32 %v4693, %v5515
      %v5546 = vmul.f32 %v4698, %v5515
      %v5547 = vmul.f32 %v4703, %v5515
      %v5548 = vmul.f32 %v4708, %v5515
      %v5549 = vmul.f32 %v4713, %v5515
      %v5550 = vmul.f32 %v4718, %v5515
      %v5551 = vmul.f32 %v4723, %v5515
      %v5552 = vmul.f32 %v4728, %v5515
      %v5553 = vmul.f32 %v4733, %v5515
      %v5554 = vmul.f32 %v4738, %v5515
      %v5555 = vmul.f32 %v4743, %v5515
      %v5556 = vmul.f32 %v4748, %v5515
      %v5557 = vmul.f32 %v4753, %v5515
      %v5558 = vmul.f32 %v4758, %v5515
      %v5559 = vmul.f32 %v4763, %v5515
      %v5560 = vmul.f32 %v4768, %v5515
      %v5561 = vmul.f32 %v4773, %v5515
      %v5562 = vmul.f32 %v4778, %v5515
      %v5563 = vmul.f32 %v4783, %v5515
      %v5564 = vadd.f32 %v5516, %v5464
      %v5565 = vadd.f32 %v5517, %v5465
      %v5566 = vadd.f32 %v5518, %v5466
      %v5567 = vadd.f32 %v5519, %v5467
      %v5568 = vadd.f32 %v5520, %v5468
      %v5569 = vadd.f32 %v5521, %v5469
      %v5570 = vadd.f32 %v5522, %v5470
      %v5571 = vadd.f32 %v5523, %v5471
      %v5572 = vadd.f32 %v5524, %v5472
      %v5573 = vadd.f32 %v5525, %v5473
      %v5574 = vadd.f32 %v5526, %v5474
      %v5575 = vadd.f32 %v5527, %v5475
      %v5576 = vadd.f32 %v5528, %v5476
      %v5577 = vadd.f32 %v5529, %v5477
      %v5578 = vadd.f32 %v5530, %v5478
      %v5579 = vadd.f32 %v5531, %v5479
      %v5580 = vadd.f32 %v5532, %v5480
      %v5581 = vadd.f32 %v5533, %v5481
      %v5582 = vadd.f32 %v5534, %v5482
      %v5583 = vadd.f32 %v5535, %v5483
      %v5584 = vadd.f32 %v5536, %v5484
      %v5585 = vadd.f32 %v5537, %v5485
      %v5586 = vadd.f32 %v5538, %v5486
      %v5587 = vadd.f32 %v5539, %v5487
      %v5588 = vadd.f32 %v5540, %v5488
      %v5589 = vadd.f32 %v5541, %v5489
      %v5590 = vadd.f32 %v5542, %v5490
      %v5591 = vadd.f32 %v5543, %v5491
      %v5592 = vadd.f32 %v5544, %v5492
      %v5593 = vadd.f32 %v5545, %v5493
      %v5594 = vadd.f32 %v5546, %v5494
      %v5595 = vadd.f32 %v5547, %v5495
      %v5596 = vadd.f32 %v5548, %v5496
      %v5597 = vadd.f32 %v5549, %v5497
      %v5598 = vadd.f32 %v5550, %v5498
      %v5599 = vadd.f32 %v5551, %v5499
      %v5600 = vadd.f32 %v5552, %v5500
      %v5601 = vadd.f32 %v5553, %v5501
      %v5602 = vadd.f32 %v5554, %v5502
      %v5603 = vadd.f32 %v5555, %v5503
      %v5604 = vadd.f32 %v5556, %v5504
      %v5605 = vadd.f32 %v5557, %v5505
      %v5606 = vadd.f32 %v5558, %v5506
      %v5607 = vadd.f32 %v5559, %v5507
      %v5608 = vadd.f32 %v5560, %v5508
      %v5609 = vadd.f32 %v5561, %v5509
      %v5610 = vadd.f32 %v5562, %v5510
      %v5611 = vadd.f32 %v5563, %v5511
      %v5612 = vmax.f32 %v5564, 0.0
      %v5613 = vmax.f32 %v5565, 0.0
      %v5614 = vmax.f32 %v5566, 0.0
      %v5615 = vmax.f32 %v5567, 0.0
      %v5616 = vmax.f32 %v5568, 0.0
      %v5617 = vmax.f32 %v5569, 0.0
      %v5618 = vmax.f32 %v5570, 0.0
      %v5619 = vmax.f32 %v5571, 0.0
      %v5620 = vmax.f32 %v5572, 0.0
      %v5621 = vmax.f32 %v5573, 0.0
      %v5622 = vmax.f32 %v5574, 0.0
      %v5623 = vmax.f32 %v5575, 0.0
      %v5624 = vmax.f32 %v5576, 0.0
      %v5625 = vmax.f32 %v5577, 0.0
      %v5626 = vmax.f32 %v5578, 0.0
      %v5627 = vmax.f32 %v5579, 0.0
      %v5628 = vmax.f32 %v5580, 0.0
      %v5629 = vmax.f32 %v5581, 0.0
      %v5630 = vmax.f32 %v5582, 0.0
      %v5631 = vmax.f32 %v5583, 0.0
      %v5632 = vmax.f32 %v5584, 0.0
      %v5633 = vmax.f32 %v5585, 0.0
      %v5634 = vmax.f32 %v5586, 0.0
      %v5635 = vmax.f32 %v5587, 0.0
      %v5636 = vmax.f32 %v5588, 0.0
      %v5637 = vmax.f32 %v5589, 0.0
      %v5638 = vmax.f32 %v5590, 0.0
      %v5639 = vmax.f32 %v5591, 0.0
      %v5640 = vmax.f32 %v5592, 0.0
      %v5641 = vmax.f32 %v5593, 0.0
      %v5642 = vmax.f32 %v5594, 0.0
      %v5643 = vmax.f32 %v5595, 0.0
      %v5644 = vmax.f32 %v5596, 0.0
      %v5645 = vmax.f32 %v5597, 0.0
      %v5646 = vmax.f32 %v5598, 0.0
      %v5647 = vmax.f32 %v5599, 0.0
      %v5648 = vmax.f32 %v5600, 0.0
      %v5649 = vmax.f32 %v5601, 0.0
      %v5650 = vmax.f32 %v5602, 0.0
      %v5651 = vmax.f32 %v5603, 0.0
      %v5652 = vmax.f32 %v5604, 0.0
      %v5653 = vmax.f32 %v5605, 0.0
      %v5654 = vmax.f32 %v5606, 0.0
      %v5655 = vmax.f32 %v5607, 0.0
      %v5656 = vmax.f32 %v5608, 0.0
      %v5657 = vmax.f32 %v5609, 0.0
      %v5658 = vmax.f32 %v5610, 0.0
      %v5659 = vmax.f32 %v5611, 0.0
      %5660 = vst.msk [vmem:[%s386] sm:$0xff] %vm459, %v5612
      %5661 = vst.msk [vmem:[%s386 + $0x8] sm:$0xff] %vm459, %v5613
      %5662 = vst.msk [vmem:[%s386 + $0x10] sm:$0xff] %vm459, %v5614
      %5663 = vst.msk [vmem:[%s386 + $0x18] sm:$0xff] %vm459, %v5615
      %5664 = vst.msk [vmem:[%s386 + $0x20] sm:$0xff] %vm459, %v5616
      %5665 = vst.msk [vmem:[%s386 + $0x28] sm:$0xff] %vm459, %v5617
      %5666 = vst.msk [vmem:[%s386 + $0x30] sm:$0xff] %vm459, %v5618
      %5667 = vst.msk [vmem:[%s386 + $0x38] sm:$0xff] %vm459, %v5619
      %5668 = vst.msk [vmem:[%s386 + $0x40] sm:$0xff] %vm459, %v5620
      %5669 = vst.msk [vmem:[%s386 + $0x48] sm:$0xff] %vm459, %v5621
      %5670 = vst.msk [vmem:[%s386 + $0x50] sm:$0xff] %vm459, %v5622
      %5671 = vst.msk [vmem:[%s386 + $0x58] sm:$0xff] %vm459, %v5623
      %5672 = vst.msk [vmem:[%s386 + $0x60] sm:$0xff] %vm459, %v5624
      %5673 = vst.msk [vmem:[%s386 + $0x68] sm:$0xff] %vm459, %v5625
      %5674 = vst.msk [vmem:[%s386 + $0x70] sm:$0xff] %vm459, %v5626
      %5675 = vst.msk [vmem:[%s386 + $0x78] sm:$0xff] %vm459, %v5627
      %5676 = vst.msk [vmem:[%s386 + $0x80] sm:$0xff] %vm459, %v5628
      %5677 = vst.msk [vmem:[%s386 + $0x88] sm:$0xff] %vm459, %v5629
      %5678 = vst.msk [vmem:[%s386 + $0x90] sm:$0xff] %vm459, %v5630
      %5679 = vst.msk [vmem:[%s386 + $0x98] sm:$0xff] %vm459, %v5631
      %5680 = vst.msk [vmem:[%s386 + $0xa0] sm:$0xff] %vm459, %v5632
      %5681 = vst.msk [vmem:[%s386 + $0xa8] sm:$0xff] %vm459, %v5633
      %5682 = vst.msk [vmem:[%s386 + $0xb0] sm:$0xff] %vm459, %v5634
      %5683 = vst.msk [vmem:[%s386 + $0xb8] sm:$0xff] %vm459, %v5635
      %5684 = vst.msk [vmem:[%s386 + $0xc0] sm:$0xff] %vm459, %v5636
      %5685 = vst.msk [vmem:[%s386 + $0xc8] sm:$0xff] %vm459, %v5637
      %5686 = vst.msk [vmem:[%s386 + $0xd0] sm:$0xff] %vm459, %v5638
      %5687 = vst.msk [vmem:[%s386 + $0xd8] sm:$0xff] %vm459, %v5639
      %5688 = vst.msk [vmem:[%s386 + $0xe0] sm:$0xff] %vm459, %v5640
      %5689 = vst.msk [vmem:[%s386 + $0xe8] sm:$0xff] %vm459, %v5641
      %5690 = vst.msk [vmem:[%s386 + $0xf0] sm:$0xff] %vm459, %v5642
      %5691 = vst.msk [vmem:[%s386 + $0xf8] sm:$0xff] %vm459, %v5643
      %5692 = vst.msk [vmem:[%s386 + $0x100] sm:$0xff] %vm459, %v5644
      %5693 = vst.msk [vmem:[%s386 + $0x108] sm:$0xff] %vm459, %v5645
      %5694 = vst.msk [vmem:[%s386 + $0x110] sm:$0xff] %vm459, %v5646
      %5695 = vst.msk [vmem:[%s386 + $0x118] sm:$0xff] %vm459, %v5647
      %5696 = vst.msk [vmem:[%s386 + $0x120] sm:$0xff] %vm459, %v5648
      %5697 = vst.msk [vmem:[%s386 + $0x128] sm:$0xff] %vm459, %v5649
      %5698 = vst.msk [vmem:[%s386 + $0x130] sm:$0xff] %vm459, %v5650
      %5699 = vst.msk [vmem:[%s386 + $0x138] sm:$0xff] %vm459, %v5651
      %5700 = vst.msk [vmem:[%s386 + $0x140] sm:$0xff] %vm459, %v5652
      %5701 = vst.msk [vmem:[%s386 + $0x148] sm:$0xff] %vm459, %v5653
      %5702 = vst.msk [vmem:[%s386 + $0x150] sm:$0xff] %vm459, %v5654
      %5703 = vst.msk [vmem:[%s386 + $0x158] sm:$0xff] %vm459, %v5655
      %5704 = vst.msk [vmem:[%s386 + $0x160] sm:$0xff] %vm459, %v5656
      %5705 = vst.msk [vmem:[%s386 + $0x168] sm:$0xff] %vm459, %v5657
      %5706 = vst.msk [vmem:[%s386 + $0x170] sm:$0xff] %vm459, %v5658
      %5707 = vst.msk [vmem:[%s386 + $0x178] sm:$0xff] %vm459, %v5659
      %p5708 = scmp.lt.s32.totalorder %s22, 1
      %s5709 = scalar_select %p5708, %s22, 1
      %s5710 = smul.addr %s5709, 48
      %s5711 = smul.addr %s5710, 8
      %s5712 = scalar_lea.vmem %s11, %s5711
      // Predicated region
      $region65: #{se_bottleneck.1} parent=63 // pred_check
        %p5713 = pneg %p276
      $region66: #{se_bottleneck.1} parent=63 // pred_check_branch
        %5715 = sbr.rel (%p5713) target = $region68
      $region67: #{se_bottleneck.1} parent=63 // pred_region
        _
      $region68: #{se_bottleneck.1} parent=63 // pred_fallthru
        _
    $region64: #{se_bottleneck.1} parent=5 // pred_fallthru
      _
    %p5716 = scmp.le.s32.totalorder 2, %s17
    // Predicated region
    $region69: #{se_bottleneck.1} parent=5 // pred_check
      %p5717 = pneg %p5716
    $region70: #{se_bottleneck.1} parent=5 // pred_check_branch
      %5719 = sbr.rel (%p5717) target = $region72
    $region71: #{se_bottleneck.1} parent=5 // pred_region
      %s5720 = ssub.s32 %s17, 2
      // Predicated region
      $region73: #{se_bottleneck.1} parent=71 // pred_check
        %p5721 = pneg %p282
      $region74: #{se_bottleneck.1} parent=71 // pred_check_branch
        %5723 = sbr.rel (%p5721) target = $region76
      $region75: #{se_bottleneck.1} parent=71 // pred_region
        %p5724 = scmp.lt.s32.totalorder %s23, 1
        %s5725 = scalar_select %p5724, %s23, 1
        %s5726 = smul.addr %s5725, 48
        %s5727 = smul.addr %s5726, 8
        %s5728 = scalar_lea.vmem %s11, %s5727
      $region76: #{se_bottleneck.1} parent=71 // pred_fallthru
        _
    $region72: #{se_bottleneck.1} parent=5 // pred_fallthru
      _
  $region6: #{se_bottleneck.1} parent=0 // loop_footer
    %s21 = sadd.s32 1, %s17
  $region7: #{se_bottleneck.1} parent=0 // loop_footer_branch
    %16 = sbr.rel target = $region3
  $region8: #{se_bottleneck.1} parent=0 // loop_exit
    _

</llo_original>
